<compile_context>
chip_gen: v6e
topology: v6e:2x2x1
jax: 0.10.0
libtpu: 0.0.40
codegen_flags: <defaults>
</compile_context>

<pallas_src>
import functools

import jax
import jax.numpy as jnp
from jax.experimental import pallas as pl
from jax.experimental.pallas import tpu as pltpu

EPS = 1e-5                       # torch nn.LayerNorm default
NEG_BIAS = -1e9                  # stands in for masked_fill(-inf)
VMEM_LIMIT = 48 * 1024 * 1024    # fits v7x 64 MiB physical with headroom

_CPARAMS = pltpu.CompilerParams(dimension_semantics=("parallel",),
                                vmem_limit_bytes=VMEM_LIMIT)


def _pick_row_tile(n):
    """Row tile for the (B*L)-streamed linears (keeps 85%+ of HBM roofline)."""
    for t in (512, 256, 128):
        if n % t == 0:
            return t
    if n <= 512:        # small problem: single block
        return n
    return 256          # ragged last block is masked by Pallas


# ---------------------------------------------------------------------------
# Kernel bodies
# ---------------------------------------------------------------------------
def _layernorm_f32(x, g, b):
    mean = jnp.mean(x, axis=-1, keepdims=True)
    var = jnp.mean(jnp.square(x - mean), axis=-1, keepdims=True)
    return (x - mean) * jax.lax.rsqrt(var + EPS) * g + b


def _softmax_rows(s):
    """Row softmax in f32; approx reciprocal keeps the divide off the VALU."""
    m = jnp.max(s, axis=-1, keepdims=True)
    e = jnp.exp(s - m)
    return e * pl.reciprocal(jnp.sum(e, axis=-1, keepdims=True), approx=True)


def _ln_linear_kernel(x_ref, g_ref, b_ref, w_ref, wb_ref, o_ref):
    """o = LN(x) @ W + b  (LN stats in f32, MXU operands in bf16)."""
    y = _layernorm_f32(x_ref[...].astype(jnp.float32), g_ref[...], b_ref[...])
    o = jnp.dot(y.astype(jnp.bfloat16), w_ref[...],
                preferred_element_type=jnp.float32) + wb_ref[...]
    o_ref[...] = o.astype(o_ref.dtype)


def _linear_kernel(x_ref, w_ref, wb_ref, o_ref):
    """Plain projection (fused K|V projection of the encoder context)."""
    o = jnp.dot(x_ref[...].astype(jnp.bfloat16), w_ref[...],
                preferred_element_type=jnp.float32) + wb_ref[...]
    o_ref[...] = o.astype(o_ref.dtype)


def _ln_ffn_residual_kernel(x_ref, g_ref, b_ref, w1_ref, b1_ref, w2_ref, b2_ref,
                            res_ref, o_ref, *, clamp_value):
    """LayerNorm -> W1 -> ReLU -> W2 -> +residual -> clamp, all in one kernel."""
    y = _layernorm_f32(x_ref[...].astype(jnp.float32), g_ref[...], b_ref[...])
    h = jnp.dot(y.astype(jnp.bfloat16), w1_ref[...],
                preferred_element_type=jnp.float32) + b1_ref[...]
    h = jnp.maximum(h, 0.0)
    o = jnp.dot(h.astype(jnp.bfloat16), w2_ref[...],
                preferred_element_type=jnp.float32) + b2_ref[...]
    o = o + res_ref[...].astype(jnp.float32)
    # TODO(synk): torch clamps only when isinf/isnan is detected (data-dependent
    # global branch); unconditional clamp is identical for finite activations.
    o = jnp.clip(o, -clamp_value, clamp_value)
    o_ref[...] = o.astype(o_ref.dtype)
    # TODO(synk): for very large Dff on v7x (64 MiB VMEM) add a Dff grid axis
    # with an f32 accumulator and/or single-buffer the constant-index weights.


def _attend_head(q, k, v, bias, scale):
    """q,k,v bf16 (L, dh); scores + softmax in f32; returns (ctx f32, probs f32)."""
    s = jax.lax.dot_general(q, k, (((1,), (1,)), ((), ())),
                            preferred_element_type=jnp.float32)
    p = _softmax_rows(s * scale + bias)
    ctx = jnp.dot(p.astype(jnp.bfloat16), v, preferred_element_type=jnp.float32)
    return ctx, p


def _self_attn_kernel(qkv_ref, wo_ref, bo_ref, res_ref, o_ref, ctx_ref,
                      *, n_heads, dh, scale):
    """Self-attention + output projection + residual, one batch per grid step.

    The causal additive bias is generated in-kernel (zero HBM traffic); per-head
    contexts are packed into a lane-dense bf16 VMEM scratch so the sub-layer
    ends with ONE full-width matmul and ONE full-width store."""
    D = n_heads * dh
    Lq = qkv_ref.shape[1]
    # TODO(synk): an arbitrary (non-causal) mask_tgt would have to be streamed
    # in as a compact boolean tensor instead of the iota-generated causal mask.
    rows = jax.lax.broadcasted_iota(jnp.int32, (Lq, Lq), 0)
    cols = jax.lax.broadcasted_iota(jnp.int32, (Lq, Lq), 1)
    bias = jnp.where(cols > rows, jnp.float32(NEG_BIAS), jnp.float32(0.0))

    for h in range(n_heads):
        sl = slice(h * dh, (h + 1) * dh)
        q = qkv_ref[0, :, h * dh:(h + 1) * dh].astype(jnp.bfloat16)
        k = qkv_ref[0, :, D + h * dh:D + (h + 1) * dh].astype(jnp.bfloat16)
        v = qkv_ref[0, :, 2 * D + h * dh:2 * D + (h + 1) * dh].astype(jnp.bfloat16)
        ctx, _ = _attend_head(q, k, v, bias, scale)
        ctx_ref[:, sl] = ctx.astype(ctx_ref.dtype)        # VMEM scratch only

    o = jnp.dot(ctx_ref[...], wo_ref[...], preferred_element_type=jnp.float32)
    o = o + bo_ref[...] + res_ref[0].astype(jnp.float32)
    o_ref[0] = o.astype(o_ref.dtype)


def _cross_attn_kernel(q_ref, kv_ref, bias_ref, wo_ref, bo_ref, res_ref,
                       o_ref, cov_ref, ctx_ref, *, n_heads, dh, scale):
    """Cross-attention + output projection + residual with in-kernel head-mean
    coverage (the (B, H, Lq, Lk) probability tensor never reaches HBM)."""
    D = n_heads * dh
    bias = bias_ref[0]                    # (1, Lsrc) additive padding bias, f32
    cov = None
    for h in range(n_heads):
        sl = slice(h * dh, (h + 1) * dh)
        q = q_ref[0, :, sl].astype(jnp.bfloat16)
        k = kv_ref[0, :, h * dh:(h + 1) * dh].astype(jnp.bfloat16)
        v = kv_ref[0, :, D + h * dh:D + (h + 1) * dh].astype(jnp.bfloat16)
        ctx, p = _attend_head(q, k, v, bias, scale)
        ctx_ref[:, sl] = ctx.astype(ctx_ref.dtype)
        cov = p if cov is None else cov + p

    o = jnp.dot(ctx_ref[...], wo_ref[...], preferred_element_type=jnp.float32)
    o = o + bo_ref[...] + res_ref[0].astype(jnp.float32)
    o_ref[0] = o.astype(o_ref.dtype)
    cov_ref[0] = (cov * (1.0 / n_heads)).astype(cov_ref.dtype)


# ---------------------------------------------------------------------------
# Pallas wrappers (row-tiled linears, per-batch fused attention)
# ---------------------------------------------------------------------------
def _row_tiled_call(kernel, x2d, extra_ins, extra_specs, dout, out_dtype):
    N, D = x2d.shape
    tm = _pick_row_tile(N)
    return pl.pallas_call(
        kernel,
        grid=(pl.cdiv(N, tm),),
        out_shape=jax.ShapeDtypeStruct((N, dout), out_dtype),
        in_specs=[pl.BlockSpec((tm, D), lambda i: (i, 0))] + extra_specs,
        out_specs=pl.BlockSpec((tm, dout), lambda i: (i, 0)),
        compiler_params=_CPARAMS,
    )(x2d, *extra_ins)


def ln_linear(x2d, gamma, beta, w, b, out_dtype=jnp.bfloat16):
    N, D = x2d.shape
    Dout = w.shape[1]
    specs = [pl.BlockSpec((1, D), lambda i: (0, 0)),
             pl.BlockSpec((1, D), lambda i: (0, 0)),
             pl.BlockSpec((D, Dout), lambda i: (0, 0)),    # bf16, constant index
             pl.BlockSpec((1, Dout), lambda i: (0, 0))]
    return _row_tiled_call(_ln_linear_kernel, x2d,
                           [gamma.reshape(1, D), beta.reshape(1, D),
                            w, b.reshape(1, Dout)],
                           specs, Dout, out_dtype)


def linear(x2d, w, b, out_dtype=jnp.bfloat16):
    N, D = x2d.shape
    Dout = w.shape[1]
    specs = [pl.BlockSpec((D, Dout), lambda i: (0, 0)),
             pl.BlockSpec((1, Dout), lambda i: (0, 0))]
    return _row_tiled_call(_linear_kernel, x2d, [w, b.reshape(1, Dout)],
                           specs, Dout, out_dtype)


def ln_ffn_residual(x2d, gamma, beta, w1, b1, w2, b2, res2d, clamp_value):
    N, D = x2d.shape
    Dff = w1.shape[1]
    tm = _pick_row_tile(N)
    kern = functools.partial(_ln_ffn_residual_kernel, clamp_value=clamp_value)
    specs = [pl.BlockSpec((1, D), lambda i: (0, 0)),
             pl.BlockSpec((1, D), lambda i: (0, 0)),
             pl.BlockSpec((D, Dff), lambda i: (0, 0)),     # bf16 weights
             pl.BlockSpec((1, Dff), lambda i: (0, 0)),
             pl.BlockSpec((Dff, D), lambda i: (0, 0)),
             pl.BlockSpec((1, D), lambda i: (0, 0)),
             pl.BlockSpec((tm, D), lambda i: (i, 0))]
    return _row_tiled_call(kern, x2d,
                           [gamma.reshape(1, D), beta.reshape(1, D),
                            w1, b1.reshape(1, Dff), w2, b2.reshape(1, D), res2d],
                           specs, D, res2d.dtype)


def self_attention_outproj(qkv, wo, bo, residual, n_heads):
    """qkv: (B, Lq, 3D) bf16 packed [q|k|v]; residual: (B, Lq, D)."""
    B, Lq, threeD = qkv.shape
    D = threeD // 3
    dh = D // n_heads
    kern = functools.partial(_self_attn_kernel, n_heads=n_heads, dh=dh,
                             scale=float(dh) ** -0.5)
    return pl.pallas_call(
        kern,
        grid=(B,),
        out_shape=jax.ShapeDtypeStruct((B, Lq, D), residual.dtype),
        in_specs=[pl.BlockSpec((1, Lq, threeD), lambda b: (b, 0, 0)),
                  pl.BlockSpec((D, D), lambda b: (0, 0)),
                  pl.BlockSpec((1, D), lambda b: (0, 0)),
                  pl.BlockSpec((1, Lq, D), lambda b: (b, 0, 0))],
        out_specs=pl.BlockSpec((1, Lq, D), lambda b: (b, 0, 0)),
        scratch_shapes=[pltpu.VMEM((Lq, D), jnp.bfloat16)],
        compiler_params=_CPARAMS,
    )(qkv, wo, bo.reshape(1, D), residual)


def cross_attention_outproj(q, kv, bias_src, wo, bo, residual, n_heads):
    """q: (B, Lq, D) bf16; kv: (B, Lsrc, 2D) bf16; bias_src: (B, 1, Lsrc) f32."""
    B, Lq, D = q.shape
    Lk = kv.shape[1]
    dh = D // n_heads
    # TODO(synk): for long sequences switch to an online-softmax (flash) variant
    # with a KV-tile grid axis so per-step VMEM is O(Lq_tile * Lk_tile).
    kern = functools.partial(_cross_attn_kernel, n_heads=n_heads, dh=dh,
                             scale=float(dh) ** -0.5)
    return pl.pallas_call(
        kern,
        grid=(B,),
        out_shape=(jax.ShapeDtypeStruct((B, Lq, D), residual.dtype),
                   jax.ShapeDtypeStruct((B, Lq, Lk), jnp.float32)),
        in_specs=[pl.BlockSpec((1, Lq, D), lambda b: (b, 0, 0)),
                  pl.BlockSpec((1, Lk, 2 * D), lambda b: (b, 0, 0)),
                  pl.BlockSpec((1, 1, Lk), lambda b: (b, 0, 0)),
                  pl.BlockSpec((D, D), lambda b: (0, 0)),
                  pl.BlockSpec((1, D), lambda b: (0, 0)),
                  pl.BlockSpec((1, Lq, D), lambda b: (b, 0, 0))],
        out_specs=(pl.BlockSpec((1, Lq, D), lambda b: (b, 0, 0)),
                   pl.BlockSpec((1, Lq, Lk), lambda b: (b, 0, 0))),
        scratch_shapes=[pltpu.VMEM((Lq, D), jnp.bfloat16)],
        compiler_params=_CPARAMS,
    )(q, kv, bias_src, wo, bo.reshape(1, D), residual)


# ---------------------------------------------------------------------------
# DecoderLayer forward (eval mode: dropout / layer-death are identity)
# ---------------------------------------------------------------------------
def decoder_layer_forward(params, x, context, mask_tgt, mask_src, *, n_heads):
    B, Lq, D = x.shape
    Lsrc = context.shape[1]
    del mask_tgt  # standard causal self-attn mask regenerated in-kernel (iota)

    # compact additive source-padding bias (B, 1, Lsrc): no Lq broadcast in HBM
    # (onmt key-padding masks are query-independent).
    mask_src_b = jnp.asarray(mask_src, jnp.bool_)
    if mask_src_b.ndim == 2:
        mask_src_b = mask_src_b[:, None, :]
    bias_src = jnp.where(mask_src_b[:, :1, :], NEG_BIAS, 0.0).astype(jnp.float32)

    x2d = x.reshape(B * Lq, D)

    # 1) self-attention: {LN + fused QKV proj} -> {attn + out-proj + residual}
    qkv = ln_linear(x2d, params['ln_attn_g'], params['ln_attn_b'],
                    params['tgt_w_qkv'], params['tgt_b_qkv']).reshape(B, Lq, 3 * D)
    x = self_attention_outproj(qkv, params['tgt_wo'], params['tgt_bo'], x, n_heads)
    x2d = x.reshape(B * Lq, D)

    # 2) cross-attention: {LN + Q proj}, {fused KV proj} -> {attn + out-proj + res}
    q = ln_linear(x2d, params['ln_src_g'], params['ln_src_b'],
                  params['src_wq'], params['src_bq']).reshape(B, Lq, D)
    kv = linear(context.reshape(B * Lsrc, D), params['src_w_kv'],
                params['src_b_kv']).reshape(B, Lsrc, 2 * D)
    x, coverage = cross_attention_outproj(q, kv, bias_src, params['src_wo'],
                                          params['src_bo'], x, n_heads)
    x2d = x.reshape(B * Lq, D)

    # 3) feed-forward: {LN + FFN + residual + clamp} in one kernel
    clamp_value = float(jnp.finfo(x.dtype).max) - 1000.0
    x2d = ln_ffn_residual(x2d, params['ln_ffn_g'], params['ln_ffn_b'],
                          params['ffn_w1'], params['ffn_b1'],
                          params['ffn_w2'], params['ffn_b2'], x2d, clamp_value)

    incremental_cache = None  # TODO(synk): incremental decoding cache not modeled
    return x2d.reshape(B, Lq, D), coverage, incremental_cache


# ---------------------------------------------------------------------------
# Deterministic parameter construction (weights stored bf16, fused QKV / KV)
# ---------------------------------------------------------------------------
def make_params(key, d_model, d_ff, n_heads):
    del n_heads  # layout-independent
    ks = jax.random.split(key, 8)
    s = 0.02

    def w(k, shape):   # bf16 weights: MXU-native, half the DMA + VMEM
        return (jax.random.normal(k, shape, jnp.float32) * s).astype(jnp.bfloat16)

    p = {}
    for name in ('ln_attn', 'ln_src', 'ln_ffn'):
        p[name + '_g'] = jnp.ones((d_model,), jnp.float32)
        p[name + '_b'] = jnp.zeros((d_model,), jnp.float32)
    # self-attention: fused [wq | wk | wv] -> (D, 3D)
    p['tgt_w_qkv'] = w(ks[0], (d_model, 3 * d_model))
    p['tgt_b_qkv'] = jnp.zeros((3 * d_model,), jnp.float32)
    p['tgt_wo'] = w(ks[1], (d_model, d_model))
    p['tgt_bo'] = jnp.zeros((d_model,), jnp.float32)
    # cross-attention: q separate, fused [wk | wv] -> (D, 2D)
    p['src_wq'] = w(ks[2], (d_model, d_model))
    p['src_bq'] = jnp.zeros((d_model,), jnp.float32)
    p['src_w_kv'] = w(ks[3], (d_model, 2 * d_model))
    p['src_b_kv'] = jnp.zeros((2 * d_model,), jnp.float32)
    p['src_wo'] = w(ks[4], (d_model, d_model))
    p['src_bo'] = jnp.zeros((d_model,), jnp.float32)
    # feed forward
    p['ffn_w1'] = w(ks[5], (d_model, d_ff))
    p['ffn_b1'] = jnp.zeros((d_ff,), jnp.float32)
    p['ffn_w2'] = w(ks[6], (d_ff, d_model))
    p['ffn_b2'] = jnp.zeros((d_model,), jnp.float32)
    return p


if __name__ == "__main__":
    B, Lq, Lsrc = 2, 8, 16
    d_model, d_ff, n_heads = 32, 64, 4

    key = jax.random.PRNGKey(0)
    k_in, k_ctx, k_par = jax.random.split(key, 3)

    x = jax.random.normal(k_in, (B, Lq, d_model), jnp.float32)
    context = jax.random.normal(k_ctx, (B, Lsrc, d_model), jnp.float32)

    # causal target mask (True == masked / future position)
    mask_tgt = jnp.triu(jnp.ones((Lq, Lq), jnp.bool_), k=1)[None, :, :]
    mask_tgt = jnp.broadcast_to(mask_tgt, (B, Lq, Lq))
    # source padding mask: batch 1 has its last 4 source positions padded
    src_pad = jnp.zeros((B, 1, Lsrc), jnp.bool_)
    src_pad = src_pad.at[1, 0, -4:].set(True)

    params = make_params(k_par, d_model, d_ff, n_heads)

    # n_heads must be a static Python int (it shapes the kernels), so bind it
    # outside of jit instead of passing it through the params pytree.
    fwd = jax.jit(functools.partial(decoder_layer_forward, n_heads=n_heads))
    out, coverage, cache = fwd(params, x, context, mask_tgt, src_pad)
    jax.block_until_ready((out, coverage))

    assert out.shape == (B, Lq, d_model)
    assert coverage.shape == (B, Lq, Lsrc)
    assert bool(jnp.all(jnp.isfinite(out)))
    assert bool(jnp.all(jnp.isfinite(coverage)))
    print("KERNEL_OK")
</pallas_src>

<mosaic_0001>
module attributes {stable_mosaic.version = 11 : i64} {
  func.func @_ln_linear_kernel(%arg0: i32, %arg1: memref<16x32xf32, #tpu.memory_space<vmem>>, %arg2: memref<1x32xf32, #tpu.memory_space<vmem>>, %arg3: memref<1x32xf32, #tpu.memory_space<vmem>>, %arg4: memref<32x96xbf16, #tpu.memory_space<vmem>>, %arg5: memref<1x96xf32, #tpu.memory_space<vmem>>, %arg6: memref<16x96xbf16, #tpu.memory_space<vmem>>) attributes {dimension_semantics = [#tpu.dimension_semantics<parallel>], iteration_bounds = array<i64: 1>, scalar_prefetch = 0 : i64, scratch_operands = 0 : i64, tpu.core_type = #tpu.core_type<tc>, window_params = [{transform_indices = @transform_0, window_bounds = array<i64: 16, 32>}, {pipeline_mode = #tpu.pipeline_mode<synchronous>, transform_indices = @transform_1, window_bounds = array<i64: 1, 32>}, {pipeline_mode = #tpu.pipeline_mode<synchronous>, transform_indices = @transform_2, window_bounds = array<i64: 1, 32>}, {pipeline_mode = #tpu.pipeline_mode<synchronous>, transform_indices = @transform_3, window_bounds = array<i64: 32, 96>}, {pipeline_mode = #tpu.pipeline_mode<synchronous>, transform_indices = @transform_4, window_bounds = array<i64: 1, 96>}, {transform_indices = @transform_5, window_bounds = array<i64: 16, 96>}]} {
    %c0 = arith.constant 0 : index
    %c0_0 = arith.constant 0 : index
    %0 = vector.load %arg1[%c0, %c0_0] : memref<16x32xf32, #tpu.memory_space<vmem>>, vector<16x32xf32>
    %c0_1 = arith.constant 0 : index
    %c0_2 = arith.constant 0 : index
    %1 = vector.load %arg2[%c0_1, %c0_2] : memref<1x32xf32, #tpu.memory_space<vmem>>, vector<1x32xf32>
    %c0_3 = arith.constant 0 : index
    %c0_4 = arith.constant 0 : index
    %2 = vector.load %arg3[%c0_3, %c0_4] : memref<1x32xf32, #tpu.memory_space<vmem>>, vector<1x32xf32>
    %cst = arith.constant dense<0.000000e+00> : vector<16xf32>
    %3 = vector.multi_reduction <add>, %0, %cst [1] : vector<16x32xf32> to vector<16xf32>
    %4 = vector.shape_cast %3 : vector<16xf32> to vector<16x1xf32>
    %cst_5 = arith.constant 3.200000e+01 : f32
    %5 = vector.broadcast %cst_5 : f32 to vector<16x1xf32>
    %6 = arith.divf %4, %5 : vector<16x1xf32>
    %7 = vector.broadcast %6 : vector<16x1xf32> to vector<16x32xf32>
    %8 = arith.subf %0, %7 : vector<16x32xf32>
    %9 = arith.mulf %8, %8 : vector<16x32xf32>
    %cst_6 = arith.constant dense<0.000000e+00> : vector<16xf32>
    %10 = vector.multi_reduction <add>, %9, %cst_6 [1] : vector<16x32xf32> to vector<16xf32>
    %11 = vector.shape_cast %10 : vector<16xf32> to vector<16x1xf32>
    %cst_7 = arith.constant 3.200000e+01 : f32
    %12 = vector.broadcast %cst_7 : f32 to vector<16x1xf32>
    %13 = arith.divf %11, %12 : vector<16x1xf32>
    %14 = vector.broadcast %6 : vector<16x1xf32> to vector<16x32xf32>
    %15 = arith.subf %0, %14 : vector<16x32xf32>
    %cst_8 = arith.constant 9.99999974E-6 : f32
    %16 = vector.broadcast %cst_8 : f32 to vector<16x1xf32>
    %17 = arith.addf %13, %16 : vector<16x1xf32>
    %18 = math.rsqrt %17 : vector<16x1xf32>
    %19 = vector.broadcast %18 : vector<16x1xf32> to vector<16x32xf32>
    %20 = arith.mulf %15, %19 : vector<16x32xf32>
    %21 = vector.broadcast %1 : vector<1x32xf32> to vector<16x32xf32>
    %22 = arith.mulf %20, %21 : vector<16x32xf32>
    %23 = vector.broadcast %2 : vector<1x32xf32> to vector<16x32xf32>
    %24 = arith.addf %22, %23 : vector<16x32xf32>
    %25 = arith.truncf %24 : vector<16x32xf32> to vector<16x32xbf16>
    %c0_9 = arith.constant 0 : index
    %c0_10 = arith.constant 0 : index
    %26 = vector.load %arg4[%c0_9, %c0_10] : memref<32x96xbf16, #tpu.memory_space<vmem>>, vector<32x96xbf16>
    %cst_11 = arith.constant dense<0.000000e+00> : vector<16x96xf32>
    %27 = tpu.matmul %25, %26, %cst_11 {dimension_numbers = #tpu.dot_dimension_numbers<[1], [0], [0], [1], [0, 0, 1, 1], [], []>} : vector<16x32xbf16>, vector<32x96xbf16>, vector<16x96xf32> -> vector<16x96xf32>
    %c0_12 = arith.constant 0 : index
    %c0_13 = arith.constant 0 : index
    %28 = vector.load %arg5[%c0_12, %c0_13] : memref<1x96xf32, #tpu.memory_space<vmem>>, vector<1x96xf32>
    %29 = vector.broadcast %28 : vector<1x96xf32> to vector<16x96xf32>
    %30 = arith.addf %27, %29 : vector<16x96xf32>
    %31 = arith.truncf %30 : vector<16x96xf32> to vector<16x96xbf16>
    %c0_14 = arith.constant 0 : index
    %c0_15 = arith.constant 0 : index
    %32 = vector.load %arg6[%c0_14, %c0_15] : memref<16x96xbf16, #tpu.memory_space<vmem>>, vector<16x96xbf16>
    tpu.vector_store %arg6[%c0_14, %c0_15], %31 {strides = array<i32>} : memref<16x96xbf16, #tpu.memory_space<vmem>>, vector<16x96xbf16>,
    return
  }
  func.func @transform_0(%arg0: i32) -> (i32, i32) {
    %c0_i32 = arith.constant 0 : i32
    %c0_i32_0 = arith.constant 0 : i32
    return %arg0, %c0_i32 : i32, i32
  }
  func.func @transform_1(%arg0: i32) -> (i32, i32) {
    %c0_i32 = arith.constant 0 : i32
    %c0_i32_0 = arith.constant 0 : i32
    %c0_i32_1 = arith.constant 0 : i32
    return %c0_i32, %c0_i32_0 : i32, i32
  }
  func.func @transform_2(%arg0: i32) -> (i32, i32) {
    %c0_i32 = arith.constant 0 : i32
    %c0_i32_0 = arith.constant 0 : i32
    %c0_i32_1 = arith.constant 0 : i32
    return %c0_i32, %c0_i32_0 : i32, i32
  }
  func.func @transform_3(%arg0: i32) -> (i32, i32) {
    %c0_i32 = arith.constant 0 : i32
    %c0_i32_0 = arith.constant 0 : i32
    %c0_i32_1 = arith.constant 0 : i32
    return %c0_i32, %c0_i32_0 : i32, i32
  }
  func.func @transform_4(%arg0: i32) -> (i32, i32) {
    %c0_i32 = arith.constant 0 : i32
    %c0_i32_0 = arith.constant 0 : i32
    %c0_i32_1 = arith.constant 0 : i32
    return %c0_i32, %c0_i32_0 : i32, i32
  }
  func.func @transform_5(%arg0: i32) -> (i32, i32) {
    %c0_i32 = arith.constant 0 : i32
    %c0_i32_0 = arith.constant 0 : i32
    return %arg0, %c0_i32 : i32, i32
  }
}

module attributes {stable_mosaic.version = 11 : i64} {
  func.func @_self_attn_kernel(%arg0: i32, %arg1: memref<1x8x96xbf16, #tpu.memory_space<vmem>>, %arg2: memref<32x32xbf16, #tpu.memory_space<vmem>>, %arg3: memref<1x32xf32, #tpu.memory_space<vmem>>, %arg4: memref<1x8x32xf32, #tpu.memory_space<vmem>>, %arg5: memref<1x8x32xf32, #tpu.memory_space<vmem>>, %arg6: memref<8x32xbf16, #tpu.memory_space<vmem>>) attributes {dimension_semantics = [#tpu.dimension_semantics<parallel>], iteration_bounds = array<i64: 2>, scalar_prefetch = 0 : i64, scratch_operands = 1 : i64, tpu.core_type = #tpu.core_type<tc>, window_params = [{transform_indices = @transform_0, window_bounds = array<i64: 1, 8, 96>}, {pipeline_mode = #tpu.pipeline_mode<synchronous>, transform_indices = @transform_1, window_bounds = array<i64: 32, 32>}, {pipeline_mode = #tpu.pipeline_mode<synchronous>, transform_indices = @transform_2, window_bounds = array<i64: 1, 32>}, {transform_indices = @transform_3, window_bounds = array<i64: 1, 8, 32>}, {transform_indices = @transform_4, window_bounds = array<i64: 1, 8, 32>}]} {
    %0 = tpu.iota {dimensions = array<i32: 0>} : vector<8x8xi32>
    %1 = tpu.iota {dimensions = array<i32: 1>} : vector<8x8xi32>
    %2 = arith.cmpi sgt, %1, %0 : vector<8x8xi32>
    %cst = arith.constant -1.000000e+09 : f32
    %cst_0 = arith.constant 0.000000e+00 : f32
    %3 = vector.broadcast %cst : f32 to vector<8x8xf32>
    %4 = vector.broadcast %cst_0 : f32 to vector<8x8xf32>
    %5 = arith.select %2, %3, %4 : vector<8x8xi1>, vector<8x8xf32>
    %c0 = arith.constant 0 : index
    %c0_1 = arith.constant 0 : index
    %c0_2 = arith.constant 0 : index
    %6 = vector.load %arg1[%c0, %c0_1, %c0_2] : memref<1x8x96xbf16, #tpu.memory_space<vmem>>, vector<1x8x8xbf16>
    %7 = vector.shape_cast %6 : vector<1x8x8xbf16> to vector<8x8xbf16>
    %c0_3 = arith.constant 0 : index
    %c0_4 = arith.constant 0 : index
    %c32 = arith.constant 32 : index
    %8 = vector.load %arg1[%c0_3, %c0_4, %c32] : memref<1x8x96xbf16, #tpu.memory_space<vmem>>, vector<1x8x8xbf16>
    %9 = vector.shape_cast %8 : vector<1x8x8xbf16> to vector<8x8xbf16>
    %c0_5 = arith.constant 0 : index
    %c0_6 = arith.constant 0 : index
    %c64 = arith.constant 64 : index
    %10 = vector.load %arg1[%c0_5, %c0_6, %c64] : memref<1x8x96xbf16, #tpu.memory_space<vmem>>, vector<1x8x8xbf16>
    %11 = vector.shape_cast %10 : vector<1x8x8xbf16> to vector<8x8xbf16>
    %cst_7 = arith.constant dense<0.000000e+00> : vector<8x8xf32>
    %12 = tpu.matmul %7, %9, %cst_7 {dimension_numbers = #tpu.dot_dimension_numbers<[1], [1], [0], [0], [0, 0, 1, 0], [], []>} : vector<8x8xbf16>, vector<8x8xbf16>, vector<8x8xf32> -> vector<8x8xf32>
    %cst_8 = arith.constant 0.353553385 : f32
    %13 = vector.broadcast %cst_8 : f32 to vector<8x8xf32>
    %14 = arith.mulf %12, %13 : vector<8x8xf32>
    %15 = arith.addf %14, %5 : vector<8x8xf32>
    %cst_9 = arith.constant dense<0xFF800000> : vector<8xf32>
    %16 = vector.multi_reduction <maximumf>, %15, %cst_9 [1] : vector<8x8xf32> to vector<8xf32>
    %17 = vector.shape_cast %16 : vector<8xf32> to vector<8x1xf32>
    %18 = vector.broadcast %17 : vector<8x1xf32> to vector<8x8xf32>
    %19 = arith.subf %15, %18 : vector<8x8xf32>
    %20 = math.exp %19 : vector<8x8xf32>
    %cst_10 = arith.constant dense<0.000000e+00> : vector<8xf32>
    %21 = vector.multi_reduction <add>, %20, %cst_10 [1] : vector<8x8xf32> to vector<8xf32>
    %22 = vector.shape_cast %21 : vector<8xf32> to vector<8x1xf32>
    %23 = tpu.reciprocal %22 {approx = true} : vector<8x1xf32> -> vector<8x1xf32>
    %24 = vector.broadcast %23 : vector<8x1xf32> to vector<8x8xf32>
    %25 = arith.mulf %20, %24 : vector<8x8xf32>
    %26 = arith.truncf %25 : vector<8x8xf32> to vector<8x8xbf16>
    %cst_11 = arith.constant dense<0.000000e+00> : vector<8x8xf32>
    %27 = tpu.matmul %26, %11, %cst_11 {dimension_numbers = #tpu.dot_dimension_numbers<[1], [0], [0], [1], [0, 0, 1, 1], [], []>} : vector<8x8xbf16>, vector<8x8xbf16>, vector<8x8xf32> -> vector<8x8xf32>
    %28 = arith.truncf %27 : vector<8x8xf32> to vector<8x8xbf16>
    %c0_12 = arith.constant 0 : index
    %c0_13 = arith.constant 0 : index
    %29 = vector.load %arg6[%c0_12, %c0_13] : memref<8x32xbf16, #tpu.memory_space<vmem>>, vector<8x8xbf16>
    tpu.vector_store %arg6[%c0_12, %c0_13], %28 {strides = array<i32>} : memref<8x32xbf16, #tpu.memory_space<vmem>>, vector<8x8xbf16>,
    %c0_14 = arith.constant 0 : index
    %c0_15 = arith.constant 0 : index
    %c8 = arith.constant 8 : index
    %30 = vector.load %arg1[%c0_14, %c0_15, %c8] : memref<1x8x96xbf16, #tpu.memory_space<vmem>>, vector<1x8x8xbf16>
    %31 = vector.shape_cast %30 : vector<1x8x8xbf16> to vector<8x8xbf16>
    %c0_16 = arith.constant 0 : index
    %c0_17 = arith.constant 0 : index
    %c40 = arith.constant 40 : index
    %32 = vector.load %arg1[%c0_16, %c0_17, %c40] : memref<1x8x96xbf16, #tpu.memory_space<vmem>>, vector<1x8x8xbf16>
    %33 = vector.shape_cast %32 : vector<1x8x8xbf16> to vector<8x8xbf16>
    %c0_18 = arith.constant 0 : index
    %c0_19 = arith.constant 0 : index
    %c72 = arith.constant 72 : index
    %34 = vector.load %arg1[%c0_18, %c0_19, %c72] : memref<1x8x96xbf16, #tpu.memory_space<vmem>>, vector<1x8x8xbf16>
    %35 = vector.shape_cast %34 : vector<1x8x8xbf16> to vector<8x8xbf16>
    %cst_20 = arith.constant dense<0.000000e+00> : vector<8x8xf32>
    %36 = tpu.matmul %31, %33, %cst_20 {dimension_numbers = #tpu.dot_dimension_numbers<[1], [1], [0], [0], [0, 0, 1, 0], [], []>} : vector<8x8xbf16>, vector<8x8xbf16>, vector<8x8xf32> -> vector<8x8xf32>
    %cst_21 = arith.constant 0.353553385 : f32
    %37 = vector.broadcast %cst_21 : f32 to vector<8x8xf32>
    %38 = arith.mulf %36, %37 : vector<8x8xf32>
    %39 = arith.addf %38, %5 : vector<8x8xf32>
    %cst_22 = arith.constant dense<0xFF800000> : vector<8xf32>
    %40 = vector.multi_reduction <maximumf>, %39, %cst_22 [1] : vector<8x8xf32> to vector<8xf32>
    %41 = vector.shape_cast %40 : vector<8xf32> to vector<8x1xf32>
    %42 = vector.broadcast %41 : vector<8x1xf32> to vector<8x8xf32>
    %43 = arith.subf %39, %42 : vector<8x8xf32>
    %44 = math.exp %43 : vector<8x8xf32>
    %cst_23 = arith.constant dense<0.000000e+00> : vector<8xf32>
    %45 = vector.multi_reduction <add>, %44, %cst_23 [1] : vector<8x8xf32> to vector<8xf32>
    %46 = vector.shape_cast %45 : vector<8xf32> to vector<8x1xf32>
    %47 = tpu.reciprocal %46 {approx = true} : vector<8x1xf32> -> vector<8x1xf32>
    %48 = vector.broadcast %47 : vector<8x1xf32> to vector<8x8xf32>
    %49 = arith.mulf %44, %48 : vector<8x8xf32>
    %50 = arith.truncf %49 : vector<8x8xf32> to vector<8x8xbf16>
    %cst_24 = arith.constant dense<0.000000e+00> : vector<8x8xf32>
    %51 = tpu.matmul %50, %35, %cst_24 {dimension_numbers = #tpu.dot_dimension_numbers<[1], [0], [0], [1], [0, 0, 1, 1], [], []>} : vector<8x8xbf16>, vector<8x8xbf16>, vector<8x8xf32> -> vector<8x8xf32>
    %52 = arith.truncf %51 : vector<8x8xf32> to vector<8x8xbf16>
    %c0_25 = arith.constant 0 : index
    %c8_26 = arith.constant 8 : index
    %53 = vector.load %arg6[%c0_25, %c8_26] : memref<8x32xbf16, #tpu.memory_space<vmem>>, vector<8x8xbf16>
    tpu.vector_store %arg6[%c0_25, %c8_26], %52 {strides = array<i32>} : memref<8x32xbf16, #tpu.memory_space<vmem>>, vector<8x8xbf16>,
    %c0_27 = arith.constant 0 : index
    %c0_28 = arith.constant 0 : index
    %c16 = arith.constant 16 : index
    %54 = vector.load %arg1[%c0_27, %c0_28, %c16] : memref<1x8x96xbf16, #tpu.memory_space<vmem>>, vector<1x8x8xbf16>
    %55 = vector.shape_cast %54 : vector<1x8x8xbf16> to vector<8x8xbf16>
    %c0_29 = arith.constant 0 : index
    %c0_30 = arith.constant 0 : index
    %c48 = arith.constant 48 : index
    %56 = vector.load %arg1[%c0_29, %c0_30, %c48] : memref<1x8x96xbf16, #tpu.memory_space<vmem>>, vector<1x8x8xbf16>
    %57 = vector.shape_cast %56 : vector<1x8x8xbf16> to vector<8x8xbf16>
    %c0_31 = arith.constant 0 : index
    %c0_32 = arith.constant 0 : index
    %c80 = arith.constant 80 : index
    %58 = vector.load %arg1[%c0_31, %c0_32, %c80] : memref<1x8x96xbf16, #tpu.memory_space<vmem>>, vector<1x8x8xbf16>
    %59 = vector.shape_cast %58 : vector<1x8x8xbf16> to vector<8x8xbf16>
    %cst_33 = arith.constant dense<0.000000e+00> : vector<8x8xf32>
    %60 = tpu.matmul %55, %57, %cst_33 {dimension_numbers = #tpu.dot_dimension_numbers<[1], [1], [0], [0], [0, 0, 1, 0], [], []>} : vector<8x8xbf16>, vector<8x8xbf16>, vector<8x8xf32> -> vector<8x8xf32>
    %cst_34 = arith.constant 0.353553385 : f32
    %61 = vector.broadcast %cst_34 : f32 to vector<8x8xf32>
    %62 = arith.mulf %60, %61 : vector<8x8xf32>
    %63 = arith.addf %62, %5 : vector<8x8xf32>
    %cst_35 = arith.constant dense<0xFF800000> : vector<8xf32>
    %64 = vector.multi_reduction <maximumf>, %63, %cst_35 [1] : vector<8x8xf32> to vector<8xf32>
    %65 = vector.shape_cast %64 : vector<8xf32> to vector<8x1xf32>
    %66 = vector.broadcast %65 : vector<8x1xf32> to vector<8x8xf32>
    %67 = arith.subf %63, %66 : vector<8x8xf32>
    %68 = math.exp %67 : vector<8x8xf32>
    %cst_36 = arith.constant dense<0.000000e+00> : vector<8xf32>
    %69 = vector.multi_reduction <add>, %68, %cst_36 [1] : vector<8x8xf32> to vector<8xf32>
    %70 = vector.shape_cast %69 : vector<8xf32> to vector<8x1xf32>
    %71 = tpu.reciprocal %70 {approx = true} : vector<8x1xf32> -> vector<8x1xf32>
    %72 = vector.broadcast %71 : vector<8x1xf32> to vector<8x8xf32>
    %73 = arith.mulf %68, %72 : vector<8x8xf32>
    %74 = arith.truncf %73 : vector<8x8xf32> to vector<8x8xbf16>
    %cst_37 = arith.constant dense<0.000000e+00> : vector<8x8xf32>
    %75 = tpu.matmul %74, %59, %cst_37 {dimension_numbers = #tpu.dot_dimension_numbers<[1], [0], [0], [1], [0, 0, 1, 1], [], []>} : vector<8x8xbf16>, vector<8x8xbf16>, vector<8x8xf32> -> vector<8x8xf32>
    %76 = arith.truncf %75 : vector<8x8xf32> to vector<8x8xbf16>
    %c0_38 = arith.constant 0 : index
    %c16_39 = arith.constant 16 : index
    %77 = vector.load %arg6[%c0_38, %c16_39] : memref<8x32xbf16, #tpu.memory_space<vmem>>, vector<8x8xbf16>
    tpu.vector_store %arg6[%c0_38, %c16_39], %76 {strides = array<i32>} : memref<8x32xbf16, #tpu.memory_space<vmem>>, vector<8x8xbf16>,
    %c0_40 = arith.constant 0 : index
    %c0_41 = arith.constant 0 : index
    %c24 = arith.constant 24 : index
    %78 = vector.load %arg1[%c0_40, %c0_41, %c24] : memref<1x8x96xbf16, #tpu.memory_space<vmem>>, vector<1x8x8xbf16>
    %79 = vector.shape_cast %78 : vector<1x8x8xbf16> to vector<8x8xbf16>
    %c0_42 = arith.constant 0 : index
    %c0_43 = arith.constant 0 : index
    %c56 = arith.constant 56 : index
    %80 = vector.load %arg1[%c0_42, %c0_43, %c56] : memref<1x8x96xbf16, #tpu.memory_space<vmem>>, vector<1x8x8xbf16>
    %81 = vector.shape_cast %80 : vector<1x8x8xbf16> to vector<8x8xbf16>
    %c0_44 = arith.constant 0 : index
    %c0_45 = arith.constant 0 : index
    %c88 = arith.constant 88 : index
    %82 = vector.load %arg1[%c0_44, %c0_45, %c88] : memref<1x8x96xbf16, #tpu.memory_space<vmem>>, vector<1x8x8xbf16>
    %83 = vector.shape_cast %82 : vector<1x8x8xbf16> to vector<8x8xbf16>
    %cst_46 = arith.constant dense<0.000000e+00> : vector<8x8xf32>
    %84 = tpu.matmul %79, %81, %cst_46 {dimension_numbers = #tpu.dot_dimension_numbers<[1], [1], [0], [0], [0, 0, 1, 0], [], []>} : vector<8x8xbf16>, vector<8x8xbf16>, vector<8x8xf32> -> vector<8x8xf32>
    %cst_47 = arith.constant 0.353553385 : f32
    %85 = vector.broadcast %cst_47 : f32 to vector<8x8xf32>
    %86 = arith.mulf %84, %85 : vector<8x8xf32>
    %87 = arith.addf %86, %5 : vector<8x8xf32>
    %cst_48 = arith.constant dense<0xFF800000> : vector<8xf32>
    %88 = vector.multi_reduction <maximumf>, %87, %cst_48 [1] : vector<8x8xf32> to vector<8xf32>
    %89 = vector.shape_cast %88 : vector<8xf32> to vector<8x1xf32>
    %90 = vector.broadcast %89 : vector<8x1xf32> to vector<8x8xf32>
    %91 = arith.subf %87, %90 : vector<8x8xf32>
    %92 = math.exp %91 : vector<8x8xf32>
    %cst_49 = arith.constant dense<0.000000e+00> : vector<8xf32>
    %93 = vector.multi_reduction <add>, %92, %cst_49 [1] : vector<8x8xf32> to vector<8xf32>
    %94 = vector.shape_cast %93 : vector<8xf32> to vector<8x1xf32>
    %95 = tpu.reciprocal %94 {approx = true} : vector<8x1xf32> -> vector<8x1xf32>
    %96 = vector.broadcast %95 : vector<8x1xf32> to vector<8x8xf32>
    %97 = arith.mulf %92, %96 : vector<8x8xf32>
    %98 = arith.truncf %97 : vector<8x8xf32> to vector<8x8xbf16>
    %cst_50 = arith.constant dense<0.000000e+00> : vector<8x8xf32>
    %99 = tpu.matmul %98, %83, %cst_50 {dimension_numbers = #tpu.dot_dimension_numbers<[1], [0], [0], [1], [0, 0, 1, 1], [], []>} : vector<8x8xbf16>, vector<8x8xbf16>, vector<8x8xf32> -> vector<8x8xf32>
    %100 = arith.truncf %99 : vector<8x8xf32> to vector<8x8xbf16>
    %c0_51 = arith.constant 0 : index
    %c24_52 = arith.constant 24 : index
    %101 = vector.load %arg6[%c0_51, %c24_52] : memref<8x32xbf16, #tpu.memory_space<vmem>>, vector<8x8xbf16>
    tpu.vector_store %arg6[%c0_51, %c24_52], %100 {strides = array<i32>} : memref<8x32xbf16, #tpu.memory_space<vmem>>, vector<8x8xbf16>,
    %c0_53 = arith.constant 0 : index
    %c0_54 = arith.constant 0 : index
    %102 = vector.load %arg6[%c0_53, %c0_54] : memref<8x32xbf16, #tpu.memory_space<vmem>>, vector<8x32xbf16>
    %c0_55 = arith.constant 0 : index
    %c0_56 = arith.constant 0 : index
    %103 = vector.load %arg2[%c0_55, %c0_56] : memref<32x32xbf16, #tpu.memory_space<vmem>>, vector<32x32xbf16>
    %cst_57 = arith.constant dense<0.000000e+00> : vector<8x32xf32>
    %104 = tpu.matmul %102, %103, %cst_57 {dimension_numbers = #tpu.dot_dimension_numbers<[1], [0], [0], [1], [0, 0, 1, 1], [], []>} : vector<8x32xbf16>, vector<32x32xbf16>, vector<8x32xf32> -> vector<8x32xf32>
    %c0_58 = arith.constant 0 : index
    %c0_59 = arith.constant 0 : index
    %105 = vector.load %arg3[%c0_58, %c0_59] : memref<1x32xf32, #tpu.memory_space<vmem>>, vector<1x32xf32>
    %106 = vector.broadcast %105 : vector<1x32xf32> to vector<8x32xf32>
    %107 = arith.addf %104, %106 : vector<8x32xf32>
    %c0_60 = arith.constant 0 : index
    %c0_61 = arith.constant 0 : index
    %c0_62 = arith.constant 0 : index
    %108 = vector.load %arg4[%c0_60, %c0_61, %c0_62] : memref<1x8x32xf32, #tpu.memory_space<vmem>>, vector<1x8x32xf32>
    %109 = vector.shape_cast %108 : vector<1x8x32xf32> to vector<8x32xf32>
    %110 = arith.addf %107, %109 : vector<8x32xf32>
    %c0_63 = arith.constant 0 : index
    %c0_64 = arith.constant 0 : index
    %c0_65 = arith.constant 0 : index
    %111 = vector.load %arg5[%c0_63, %c0_64, %c0_65] : memref<1x8x32xf32, #tpu.memory_space<vmem>>, vector<1x8x32xf32>
    %112 = vector.shape_cast %111 : vector<1x8x32xf32> to vector<8x32xf32>
    %113 = vector.shape_cast %110 : vector<8x32xf32> to vector<1x8x32xf32>
    tpu.vector_store %arg5[%c0_63, %c0_64, %c0_65], %113 {strides = array<i32>} : memref<1x8x32xf32, #tpu.memory_space<vmem>>, vector<1x8x32xf32>,
    return
  }
  func.func @transform_0(%arg0: i32) -> (i32, i32, i32) {
    %c0_i32 = arith.constant 0 : i32
    %c0_i32_0 = arith.constant 0 : i32
    %c0_i32_1 = arith.constant 0 : i32
    return %arg0, %c0_i32, %c0_i32_0 : i32, i32, i32
  }
  func.func @transform_1(%arg0: i32) -> (i32, i32) {
    %c0_i32 = arith.constant 0 : i32
    %c0_i32_0 = arith.constant 0 : i32
    %c0_i32_1 = arith.constant 0 : i32
    return %c0_i32, %c0_i32_0 : i32, i32
  }
  func.func @transform_2(%arg0: i32) -> (i32, i32) {
    %c0_i32 = arith.constant 0 : i32
    %c0_i32_0 = arith.constant 0 : i32
    %c0_i32_1 = arith.constant 0 : i32
    return %c0_i32, %c0_i32_0 : i32, i32
  }
  func.func @transform_3(%arg0: i32) -> (i32, i32, i32) {
    %c0_i32 = arith.constant 0 : i32
    %c0_i32_0 = arith.constant 0 : i32
    %c0_i32_1 = arith.constant 0 : i32
    return %arg0, %c0_i32, %c0_i32_0 : i32, i32, i32
  }
  func.func @transform_4(%arg0: i32) -> (i32, i32, i32) {
    %c0_i32 = arith.constant 0 : i32
    %c0_i32_0 = arith.constant 0 : i32
    %c0_i32_1 = arith.constant 0 : i32
    return %arg0, %c0_i32, %c0_i32_0 : i32, i32, i32
  }
}

module attributes {stable_mosaic.version = 11 : i64} {
  func.func @_ln_linear_kernel(%arg0: i32, %arg1: memref<16x32xf32, #tpu.memory_space<vmem>>, %arg2: memref<1x32xf32, #tpu.memory_space<vmem>>, %arg3: memref<1x32xf32, #tpu.memory_space<vmem>>, %arg4: memref<32x32xbf16, #tpu.memory_space<vmem>>, %arg5: memref<1x32xf32, #tpu.memory_space<vmem>>, %arg6: memref<16x32xbf16, #tpu.memory_space<vmem>>) attributes {dimension_semantics = [#tpu.dimension_semantics<parallel>], iteration_bounds = array<i64: 1>, scalar_prefetch = 0 : i64, scratch_operands = 0 : i64, tpu.core_type = #tpu.core_type<tc>, window_params = [{transform_indices = @transform_0, window_bounds = array<i64: 16, 32>}, {pipeline_mode = #tpu.pipeline_mode<synchronous>, transform_indices = @transform_1, window_bounds = array<i64: 1, 32>}, {pipeline_mode = #tpu.pipeline_mode<synchronous>, transform_indices = @transform_2, window_bounds = array<i64: 1, 32>}, {pipeline_mode = #tpu.pipeline_mode<synchronous>, transform_indices = @transform_3, window_bounds = array<i64: 32, 32>}, {pipeline_mode = #tpu.pipeline_mode<synchronous>, transform_indices = @transform_4, window_bounds = array<i64: 1, 32>}, {transform_indices = @transform_5, window_bounds = array<i64: 16, 32>}]} {
    %c0 = arith.constant 0 : index
    %c0_0 = arith.constant 0 : index
    %0 = vector.load %arg1[%c0, %c0_0] : memref<16x32xf32, #tpu.memory_space<vmem>>, vector<16x32xf32>
    %c0_1 = arith.constant 0 : index
    %c0_2 = arith.constant 0 : index
    %1 = vector.load %arg2[%c0_1, %c0_2] : memref<1x32xf32, #tpu.memory_space<vmem>>, vector<1x32xf32>
    %c0_3 = arith.constant 0 : index
    %c0_4 = arith.constant 0 : index
    %2 = vector.load %arg3[%c0_3, %c0_4] : memref<1x32xf32, #tpu.memory_space<vmem>>, vector<1x32xf32>
    %cst = arith.constant dense<0.000000e+00> : vector<16xf32>
    %3 = vector.multi_reduction <add>, %0, %cst [1] : vector<16x32xf32> to vector<16xf32>
    %4 = vector.shape_cast %3 : vector<16xf32> to vector<16x1xf32>
    %cst_5 = arith.constant 3.200000e+01 : f32
    %5 = vector.broadcast %cst_5 : f32 to vector<16x1xf32>
    %6 = arith.divf %4, %5 : vector<16x1xf32>
    %7 = vector.broadcast %6 : vector<16x1xf32> to vector<16x32xf32>
    %8 = arith.subf %0, %7 : vector<16x32xf32>
    %9 = arith.mulf %8, %8 : vector<16x32xf32>
    %cst_6 = arith.constant dense<0.000000e+00> : vector<16xf32>
    %10 = vector.multi_reduction <add>, %9, %cst_6 [1] : vector<16x32xf32> to vector<16xf32>
    %11 = vector.shape_cast %10 : vector<16xf32> to vector<16x1xf32>
    %cst_7 = arith.constant 3.200000e+01 : f32
    %12 = vector.broadcast %cst_7 : f32 to vector<16x1xf32>
    %13 = arith.divf %11, %12 : vector<16x1xf32>
    %14 = vector.broadcast %6 : vector<16x1xf32> to vector<16x32xf32>
    %15 = arith.subf %0, %14 : vector<16x32xf32>
    %cst_8 = arith.constant 9.99999974E-6 : f32
    %16 = vector.broadcast %cst_8 : f32 to vector<16x1xf32>
    %17 = arith.addf %13, %16 : vector<16x1xf32>
    %18 = math.rsqrt %17 : vector<16x1xf32>
    %19 = vector.broadcast %18 : vector<16x1xf32> to vector<16x32xf32>
    %20 = arith.mulf %15, %19 : vector<16x32xf32>
    %21 = vector.broadcast %1 : vector<1x32xf32> to vector<16x32xf32>
    %22 = arith.mulf %20, %21 : vector<16x32xf32>
    %23 = vector.broadcast %2 : vector<1x32xf32> to vector<16x32xf32>
    %24 = arith.addf %22, %23 : vector<16x32xf32>
    %25 = arith.truncf %24 : vector<16x32xf32> to vector<16x32xbf16>
    %c0_9 = arith.constant 0 : index
    %c0_10 = arith.constant 0 : index
    %26 = vector.load %arg4[%c0_9, %c0_10] : memref<32x32xbf16, #tpu.memory_space<vmem>>, vector<32x32xbf16>
    %cst_11 = arith.constant dense<0.000000e+00> : vector<16x32xf32>
    %27 = tpu.matmul %25, %26, %cst_11 {dimension_numbers = #tpu.dot_dimension_numbers<[1], [0], [0], [1], [0, 0, 1, 1], [], []>} : vector<16x32xbf16>, vector<32x32xbf16>, vector<16x32xf32> -> vector<16x32xf32>
    %c0_12 = arith.constant 0 : index
    %c0_13 = arith.constant 0 : index
    %28 = vector.load %arg5[%c0_12, %c0_13] : memref<1x32xf32, #tpu.memory_space<vmem>>, vector<1x32xf32>
    %29 = vector.broadcast %28 : vector<1x32xf32> to vector<16x32xf32>
    %30 = arith.addf %27, %29 : vector<16x32xf32>
    %31 = arith.truncf %30 : vector<16x32xf32> to vector<16x32xbf16>
    %c0_14 = arith.constant 0 : index
    %c0_15 = arith.constant 0 : index
    %32 = vector.load %arg6[%c0_14, %c0_15] : memref<16x32xbf16, #tpu.memory_space<vmem>>, vector<16x32xbf16>
    tpu.vector_store %arg6[%c0_14, %c0_15], %31 {strides = array<i32>} : memref<16x32xbf16, #tpu.memory_space<vmem>>, vector<16x32xbf16>,
    return
  }
  func.func @transform_0(%arg0: i32) -> (i32, i32) {
    %c0_i32 = arith.constant 0 : i32
    %c0_i32_0 = arith.constant 0 : i32
    return %arg0, %c0_i32 : i32, i32
  }
  func.func @transform_1(%arg0: i32) -> (i32, i32) {
    %c0_i32 = arith.constant 0 : i32
    %c0_i32_0 = arith.constant 0 : i32
    %c0_i32_1 = arith.constant 0 : i32
    return %c0_i32, %c0_i32_0 : i32, i32
  }
  func.func @transform_2(%arg0: i32) -> (i32, i32) {
    %c0_i32 = arith.constant 0 : i32
    %c0_i32_0 = arith.constant 0 : i32
    %c0_i32_1 = arith.constant 0 : i32
    return %c0_i32, %c0_i32_0 : i32, i32
  }
  func.func @transform_3(%arg0: i32) -> (i32, i32) {
    %c0_i32 = arith.constant 0 : i32
    %c0_i32_0 = arith.constant 0 : i32
    %c0_i32_1 = arith.constant 0 : i32
    return %c0_i32, %c0_i32_0 : i32, i32
  }
  func.func @transform_4(%arg0: i32) -> (i32, i32) {
    %c0_i32 = arith.constant 0 : i32
    %c0_i32_0 = arith.constant 0 : i32
    %c0_i32_1 = arith.constant 0 : i32
    return %c0_i32, %c0_i32_0 : i32, i32
  }
  func.func @transform_5(%arg0: i32) -> (i32, i32) {
    %c0_i32 = arith.constant 0 : i32
    %c0_i32_0 = arith.constant 0 : i32
    return %arg0, %c0_i32 : i32, i32
  }
}

module attributes {stable_mosaic.version = 11 : i64} {
  func.func @_linear_kernel(%arg0: i32, %arg1: memref<32x32xf32, #tpu.memory_space<vmem>>, %arg2: memref<32x64xbf16, #tpu.memory_space<vmem>>, %arg3: memref<1x64xf32, #tpu.memory_space<vmem>>, %arg4: memref<32x64xbf16, #tpu.memory_space<vmem>>) attributes {dimension_semantics = [#tpu.dimension_semantics<parallel>], iteration_bounds = array<i64: 1>, scalar_prefetch = 0 : i64, scratch_operands = 0 : i64, tpu.core_type = #tpu.core_type<tc>, window_params = [{transform_indices = @transform_0, window_bounds = array<i64: 32, 32>}, {pipeline_mode = #tpu.pipeline_mode<synchronous>, transform_indices = @transform_1, window_bounds = array<i64: 32, 64>}, {pipeline_mode = #tpu.pipeline_mode<synchronous>, transform_indices = @transform_2, window_bounds = array<i64: 1, 64>}, {transform_indices = @transform_3, window_bounds = array<i64: 32, 64>}]} {
    %c0 = arith.constant 0 : index
    %c0_0 = arith.constant 0 : index
    %0 = vector.load %arg1[%c0, %c0_0] : memref<32x32xf32, #tpu.memory_space<vmem>>, vector<32x32xf32>
    %1 = arith.truncf %0 : vector<32x32xf32> to vector<32x32xbf16>
    %c0_1 = arith.constant 0 : index
    %c0_2 = arith.constant 0 : index
    %2 = vector.load %arg2[%c0_1, %c0_2] : memref<32x64xbf16, #tpu.memory_space<vmem>>, vector<32x64xbf16>
    %cst = arith.constant dense<0.000000e+00> : vector<32x64xf32>
    %3 = tpu.matmul %1, %2, %cst {dimension_numbers = #tpu.dot_dimension_numbers<[1], [0], [0], [1], [0, 0, 1, 1], [], []>} : vector<32x32xbf16>, vector<32x64xbf16>, vector<32x64xf32> -> vector<32x64xf32>
    %c0_3 = arith.constant 0 : index
    %c0_4 = arith.constant 0 : index
    %4 = vector.load %arg3[%c0_3, %c0_4] : memref<1x64xf32, #tpu.memory_space<vmem>>, vector<1x64xf32>
    %5 = vector.broadcast %4 : vector<1x64xf32> to vector<32x64xf32>
    %6 = arith.addf %3, %5 : vector<32x64xf32>
    %7 = arith.truncf %6 : vector<32x64xf32> to vector<32x64xbf16>
    %c0_5 = arith.constant 0 : index
    %c0_6 = arith.constant 0 : index
    %8 = vector.load %arg4[%c0_5, %c0_6] : memref<32x64xbf16, #tpu.memory_space<vmem>>, vector<32x64xbf16>
    tpu.vector_store %arg4[%c0_5, %c0_6], %7 {strides = array<i32>} : memref<32x64xbf16, #tpu.memory_space<vmem>>, vector<32x64xbf16>,
    return
  }
  func.func @transform_0(%arg0: i32) -> (i32, i32) {
    %c0_i32 = arith.constant 0 : i32
    %c0_i32_0 = arith.constant 0 : i32
    return %arg0, %c0_i32 : i32, i32
  }
  func.func @transform_1(%arg0: i32) -> (i32, i32) {
    %c0_i32 = arith.constant 0 : i32
    %c0_i32_0 = arith.constant 0 : i32
    %c0_i32_1 = arith.constant 0 : i32
    return %c0_i32, %c0_i32_0 : i32, i32
  }
  func.func @transform_2(%arg0: i32) -> (i32, i32) {
    %c0_i32 = arith.constant 0 : i32
    %c0_i32_0 = arith.constant 0 : i32
    %c0_i32_1 = arith.constant 0 : i32
    return %c0_i32, %c0_i32_0 : i32, i32
  }
  func.func @transform_3(%arg0: i32) -> (i32, i32) {
    %c0_i32 = arith.constant 0 : i32
    %c0_i32_0 = arith.constant 0 : i32
    return %arg0, %c0_i32 : i32, i32
  }
}

module attributes {stable_mosaic.version = 11 : i64} {
  func.func @_cross_attn_kernel(%arg0: i32, %arg1: memref<1x8x32xbf16, #tpu.memory_space<vmem>>, %arg2: memref<1x16x64xbf16, #tpu.memory_space<vmem>>, %arg3: memref<1x1x16xf32, #tpu.memory_space<vmem>>, %arg4: memref<32x32xbf16, #tpu.memory_space<vmem>>, %arg5: memref<1x32xf32, #tpu.memory_space<vmem>>, %arg6: memref<1x8x32xf32, #tpu.memory_space<vmem>>, %arg7: memref<1x8x32xf32, #tpu.memory_space<vmem>>, %arg8: memref<1x8x16xf32, #tpu.memory_space<vmem>>, %arg9: memref<8x32xbf16, #tpu.memory_space<vmem>>) attributes {dimension_semantics = [#tpu.dimension_semantics<parallel>], iteration_bounds = array<i64: 2>, scalar_prefetch = 0 : i64, scratch_operands = 1 : i64, tpu.core_type = #tpu.core_type<tc>, window_params = [{transform_indices = @transform_0, window_bounds = array<i64: 1, 8, 32>}, {transform_indices = @transform_1, window_bounds = array<i64: 1, 16, 64>}, {transform_indices = @transform_2, window_bounds = array<i64: 1, 1, 16>}, {pipeline_mode = #tpu.pipeline_mode<synchronous>, transform_indices = @transform_3, window_bounds = array<i64: 32, 32>}, {pipeline_mode = #tpu.pipeline_mode<synchronous>, transform_indices = @transform_4, window_bounds = array<i64: 1, 32>}, {transform_indices = @transform_5, window_bounds = array<i64: 1, 8, 32>}, {transform_indices = @transform_6, window_bounds = array<i64: 1, 8, 32>}, {transform_indices = @transform_7, window_bounds = array<i64: 1, 8, 16>}]} {
    %c0 = arith.constant 0 : index
    %c0_0 = arith.constant 0 : index
    %c0_1 = arith.constant 0 : index
    %0 = vector.load %arg3[%c0, %c0_0, %c0_1] : memref<1x1x16xf32, #tpu.memory_space<vmem>>, vector<1x1x16xf32>
    %1 = vector.shape_cast %0 : vector<1x1x16xf32> to vector<1x16xf32>
    %c0_2 = arith.constant 0 : index
    %c0_3 = arith.constant 0 : index
    %c0_4 = arith.constant 0 : index
    %2 = vector.load %arg1[%c0_2, %c0_3, %c0_4] : memref<1x8x32xbf16, #tpu.memory_space<vmem>>, vector<1x8x8xbf16>
    %3 = vector.shape_cast %2 : vector<1x8x8xbf16> to vector<8x8xbf16>
    %c0_5 = arith.constant 0 : index
    %c0_6 = arith.constant 0 : index
    %c0_7 = arith.constant 0 : index
    %4 = vector.load %arg2[%c0_5, %c0_6, %c0_7] : memref<1x16x64xbf16, #tpu.memory_space<vmem>>, vector<1x16x8xbf16>
    %5 = vector.shape_cast %4 : vector<1x16x8xbf16> to vector<16x8xbf16>
    %c0_8 = arith.constant 0 : index
    %c0_9 = arith.constant 0 : index
    %c32 = arith.constant 32 : index
    %6 = vector.load %arg2[%c0_8, %c0_9, %c32] : memref<1x16x64xbf16, #tpu.memory_space<vmem>>, vector<1x16x8xbf16>
    %7 = vector.shape_cast %6 : vector<1x16x8xbf16> to vector<16x8xbf16>
    %cst = arith.constant dense<0.000000e+00> : vector<8x16xf32>
    %8 = tpu.matmul %3, %5, %cst {dimension_numbers = #tpu.dot_dimension_numbers<[1], [1], [0], [0], [0, 0, 1, 0], [], []>} : vector<8x8xbf16>, vector<16x8xbf16>, vector<8x16xf32> -> vector<8x16xf32>
    %cst_10 = arith.constant 0.353553385 : f32
    %9 = vector.broadcast %cst_10 : f32 to vector<8x16xf32>
    %10 = arith.mulf %8, %9 : vector<8x16xf32>
    %11 = vector.broadcast %1 : vector<1x16xf32> to vector<8x16xf32>
    %12 = arith.addf %10, %11 : vector<8x16xf32>
    %cst_11 = arith.constant dense<0xFF800000> : vector<8xf32>
    %13 = vector.multi_reduction <maximumf>, %12, %cst_11 [1] : vector<8x16xf32> to vector<8xf32>
    %14 = vector.shape_cast %13 : vector<8xf32> to vector<8x1xf32>
    %15 = vector.broadcast %14 : vector<8x1xf32> to vector<8x16xf32>
    %16 = arith.subf %12, %15 : vector<8x16xf32>
    %17 = math.exp %16 : vector<8x16xf32>
    %cst_12 = arith.constant dense<0.000000e+00> : vector<8xf32>
    %18 = vector.multi_reduction <add>, %17, %cst_12 [1] : vector<8x16xf32> to vector<8xf32>
    %19 = vector.shape_cast %18 : vector<8xf32> to vector<8x1xf32>
    %20 = tpu.reciprocal %19 {approx = true} : vector<8x1xf32> -> vector<8x1xf32>
    %21 = vector.broadcast %20 : vector<8x1xf32> to vector<8x16xf32>
    %22 = arith.mulf %17, %21 : vector<8x16xf32>
    %23 = arith.truncf %22 : vector<8x16xf32> to vector<8x16xbf16>
    %cst_13 = arith.constant dense<0.000000e+00> : vector<8x8xf32>
    %24 = tpu.matmul %23, %7, %cst_13 {dimension_numbers = #tpu.dot_dimension_numbers<[1], [0], [0], [1], [0, 0, 1, 1], [], []>} : vector<8x16xbf16>, vector<16x8xbf16>, vector<8x8xf32> -> vector<8x8xf32>
    %25 = arith.truncf %24 : vector<8x8xf32> to vector<8x8xbf16>
    %c0_14 = arith.constant 0 : index
    %c0_15 = arith.constant 0 : index
    %26 = vector.load %arg9[%c0_14, %c0_15] : memref<8x32xbf16, #tpu.memory_space<vmem>>, vector<8x8xbf16>
    tpu.vector_store %arg9[%c0_14, %c0_15], %25 {strides = array<i32>} : memref<8x32xbf16, #tpu.memory_space<vmem>>, vector<8x8xbf16>,
    %c0_16 = arith.constant 0 : index
    %c0_17 = arith.constant 0 : index
    %c8 = arith.constant 8 : index
    %27 = vector.load %arg1[%c0_16, %c0_17, %c8] : memref<1x8x32xbf16, #tpu.memory_space<vmem>>, vector<1x8x8xbf16>
    %28 = vector.shape_cast %27 : vector<1x8x8xbf16> to vector<8x8xbf16>
    %c0_18 = arith.constant 0 : index
    %c0_19 = arith.constant 0 : index
    %c8_20 = arith.constant 8 : index
    %29 = vector.load %arg2[%c0_18, %c0_19, %c8_20] : memref<1x16x64xbf16, #tpu.memory_space<vmem>>, vector<1x16x8xbf16>
    %30 = vector.shape_cast %29 : vector<1x16x8xbf16> to vector<16x8xbf16>
    %c0_21 = arith.constant 0 : index
    %c0_22 = arith.constant 0 : index
    %c40 = arith.constant 40 : index
    %31 = vector.load %arg2[%c0_21, %c0_22, %c40] : memref<1x16x64xbf16, #tpu.memory_space<vmem>>, vector<1x16x8xbf16>
    %32 = vector.shape_cast %31 : vector<1x16x8xbf16> to vector<16x8xbf16>
    %cst_23 = arith.constant dense<0.000000e+00> : vector<8x16xf32>
    %33 = tpu.matmul %28, %30, %cst_23 {dimension_numbers = #tpu.dot_dimension_numbers<[1], [1], [0], [0], [0, 0, 1, 0], [], []>} : vector<8x8xbf16>, vector<16x8xbf16>, vector<8x16xf32> -> vector<8x16xf32>
    %cst_24 = arith.constant 0.353553385 : f32
    %34 = vector.broadcast %cst_24 : f32 to vector<8x16xf32>
    %35 = arith.mulf %33, %34 : vector<8x16xf32>
    %36 = vector.broadcast %1 : vector<1x16xf32> to vector<8x16xf32>
    %37 = arith.addf %35, %36 : vector<8x16xf32>
    %cst_25 = arith.constant dense<0xFF800000> : vector<8xf32>
    %38 = vector.multi_reduction <maximumf>, %37, %cst_25 [1] : vector<8x16xf32> to vector<8xf32>
    %39 = vector.shape_cast %38 : vector<8xf32> to vector<8x1xf32>
    %40 = vector.broadcast %39 : vector<8x1xf32> to vector<8x16xf32>
    %41 = arith.subf %37, %40 : vector<8x16xf32>
    %42 = math.exp %41 : vector<8x16xf32>
    %cst_26 = arith.constant dense<0.000000e+00> : vector<8xf32>
    %43 = vector.multi_reduction <add>, %42, %cst_26 [1] : vector<8x16xf32> to vector<8xf32>
    %44 = vector.shape_cast %43 : vector<8xf32> to vector<8x1xf32>
    %45 = tpu.reciprocal %44 {approx = true} : vector<8x1xf32> -> vector<8x1xf32>
    %46 = vector.broadcast %45 : vector<8x1xf32> to vector<8x16xf32>
    %47 = arith.mulf %42, %46 : vector<8x16xf32>
    %48 = arith.truncf %47 : vector<8x16xf32> to vector<8x16xbf16>
    %cst_27 = arith.constant dense<0.000000e+00> : vector<8x8xf32>
    %49 = tpu.matmul %48, %32, %cst_27 {dimension_numbers = #tpu.dot_dimension_numbers<[1], [0], [0], [1], [0, 0, 1, 1], [], []>} : vector<8x16xbf16>, vector<16x8xbf16>, vector<8x8xf32> -> vector<8x8xf32>
    %50 = arith.truncf %49 : vector<8x8xf32> to vector<8x8xbf16>
    %c0_28 = arith.constant 0 : index
    %c8_29 = arith.constant 8 : index
    %51 = vector.load %arg9[%c0_28, %c8_29] : memref<8x32xbf16, #tpu.memory_space<vmem>>, vector<8x8xbf16>
    tpu.vector_store %arg9[%c0_28, %c8_29], %50 {strides = array<i32>} : memref<8x32xbf16, #tpu.memory_space<vmem>>, vector<8x8xbf16>,
    %52 = arith.addf %22, %47 : vector<8x16xf32>
    %c0_30 = arith.constant 0 : index
    %c0_31 = arith.constant 0 : index
    %c16 = arith.constant 16 : index
    %53 = vector.load %arg1[%c0_30, %c0_31, %c16] : memref<1x8x32xbf16, #tpu.memory_space<vmem>>, vector<1x8x8xbf16>
    %54 = vector.shape_cast %53 : vector<1x8x8xbf16> to vector<8x8xbf16>
    %c0_32 = arith.constant 0 : index
    %c0_33 = arith.constant 0 : index
    %c16_34 = arith.constant 16 : index
    %55 = vector.load %arg2[%c0_32, %c0_33, %c16_34] : memref<1x16x64xbf16, #tpu.memory_space<vmem>>, vector<1x16x8xbf16>
    %56 = vector.shape_cast %55 : vector<1x16x8xbf16> to vector<16x8xbf16>
    %c0_35 = arith.constant 0 : index
    %c0_36 = arith.constant 0 : index
    %c48 = arith.constant 48 : index
    %57 = vector.load %arg2[%c0_35, %c0_36, %c48] : memref<1x16x64xbf16, #tpu.memory_space<vmem>>, vector<1x16x8xbf16>
    %58 = vector.shape_cast %57 : vector<1x16x8xbf16> to vector<16x8xbf16>
    %cst_37 = arith.constant dense<0.000000e+00> : vector<8x16xf32>
    %59 = tpu.matmul %54, %56, %cst_37 {dimension_numbers = #tpu.dot_dimension_numbers<[1], [1], [0], [0], [0, 0, 1, 0], [], []>} : vector<8x8xbf16>, vector<16x8xbf16>, vector<8x16xf32> -> vector<8x16xf32>
    %cst_38 = arith.constant 0.353553385 : f32
    %60 = vector.broadcast %cst_38 : f32 to vector<8x16xf32>
    %61 = arith.mulf %59, %60 : vector<8x16xf32>
    %62 = vector.broadcast %1 : vector<1x16xf32> to vector<8x16xf32>
    %63 = arith.addf %61, %62 : vector<8x16xf32>
    %cst_39 = arith.constant dense<0xFF800000> : vector<8xf32>
    %64 = vector.multi_reduction <maximumf>, %63, %cst_39 [1] : vector<8x16xf32> to vector<8xf32>
    %65 = vector.shape_cast %64 : vector<8xf32> to vector<8x1xf32>
    %66 = vector.broadcast %65 : vector<8x1xf32> to vector<8x16xf32>
    %67 = arith.subf %63, %66 : vector<8x16xf32>
    %68 = math.exp %67 : vector<8x16xf32>
    %cst_40 = arith.constant dense<0.000000e+00> : vector<8xf32>
    %69 = vector.multi_reduction <add>, %68, %cst_40 [1] : vector<8x16xf32> to vector<8xf32>
    %70 = vector.shape_cast %69 : vector<8xf32> to vector<8x1xf32>
    %71 = tpu.reciprocal %70 {approx = true} : vector<8x1xf32> -> vector<8x1xf32>
    %72 = vector.broadcast %71 : vector<8x1xf32> to vector<8x16xf32>
    %73 = arith.mulf %68, %72 : vector<8x16xf32>
    %74 = arith.truncf %73 : vector<8x16xf32> to vector<8x16xbf16>
    %cst_41 = arith.constant dense<0.000000e+00> : vector<8x8xf32>
    %75 = tpu.matmul %74, %58, %cst_41 {dimension_numbers = #tpu.dot_dimension_numbers<[1], [0], [0], [1], [0, 0, 1, 1], [], []>} : vector<8x16xbf16>, vector<16x8xbf16>, vector<8x8xf32> -> vector<8x8xf32>
    %76 = arith.truncf %75 : vector<8x8xf32> to vector<8x8xbf16>
    %c0_42 = arith.constant 0 : index
    %c16_43 = arith.constant 16 : index
    %77 = vector.load %arg9[%c0_42, %c16_43] : memref<8x32xbf16, #tpu.memory_space<vmem>>, vector<8x8xbf16>
    tpu.vector_store %arg9[%c0_42, %c16_43], %76 {strides = array<i32>} : memref<8x32xbf16, #tpu.memory_space<vmem>>, vector<8x8xbf16>,
    %78 = arith.addf %52, %73 : vector<8x16xf32>
    %c0_44 = arith.constant 0 : index
    %c0_45 = arith.constant 0 : index
    %c24 = arith.constant 24 : index
    %79 = vector.load %arg1[%c0_44, %c0_45, %c24] : memref<1x8x32xbf16, #tpu.memory_space<vmem>>, vector<1x8x8xbf16>
    %80 = vector.shape_cast %79 : vector<1x8x8xbf16> to vector<8x8xbf16>
    %c0_46 = arith.constant 0 : index
    %c0_47 = arith.constant 0 : index
    %c24_48 = arith.constant 24 : index
    %81 = vector.load %arg2[%c0_46, %c0_47, %c24_48] : memref<1x16x64xbf16, #tpu.memory_space<vmem>>, vector<1x16x8xbf16>
    %82 = vector.shape_cast %81 : vector<1x16x8xbf16> to vector<16x8xbf16>
    %c0_49 = arith.constant 0 : index
    %c0_50 = arith.constant 0 : index
    %c56 = arith.constant 56 : index
    %83 = vector.load %arg2[%c0_49, %c0_50, %c56] : memref<1x16x64xbf16, #tpu.memory_space<vmem>>, vector<1x16x8xbf16>
    %84 = vector.shape_cast %83 : vector<1x16x8xbf16> to vector<16x8xbf16>
    %cst_51 = arith.constant dense<0.000000e+00> : vector<8x16xf32>
    %85 = tpu.matmul %80, %82, %cst_51 {dimension_numbers = #tpu.dot_dimension_numbers<[1], [1], [0], [0], [0, 0, 1, 0], [], []>} : vector<8x8xbf16>, vector<16x8xbf16>, vector<8x16xf32> -> vector<8x16xf32>
    %cst_52 = arith.constant 0.353553385 : f32
    %86 = vector.broadcast %cst_52 : f32 to vector<8x16xf32>
    %87 = arith.mulf %85, %86 : vector<8x16xf32>
    %88 = vector.broadcast %1 : vector<1x16xf32> to vector<8x16xf32>
    %89 = arith.addf %87, %88 : vector<8x16xf32>
    %cst_53 = arith.constant dense<0xFF800000> : vector<8xf32>
    %90 = vector.multi_reduction <maximumf>, %89, %cst_53 [1] : vector<8x16xf32> to vector<8xf32>
    %91 = vector.shape_cast %90 : vector<8xf32> to vector<8x1xf32>
    %92 = vector.broadcast %91 : vector<8x1xf32> to vector<8x16xf32>
    %93 = arith.subf %89, %92 : vector<8x16xf32>
    %94 = math.exp %93 : vector<8x16xf32>
    %cst_54 = arith.constant dense<0.000000e+00> : vector<8xf32>
    %95 = vector.multi_reduction <add>, %94, %cst_54 [1] : vector<8x16xf32> to vector<8xf32>
    %96 = vector.shape_cast %95 : vector<8xf32> to vector<8x1xf32>
    %97 = tpu.reciprocal %96 {approx = true} : vector<8x1xf32> -> vector<8x1xf32>
    %98 = vector.broadcast %97 : vector<8x1xf32> to vector<8x16xf32>
    %99 = arith.mulf %94, %98 : vector<8x16xf32>
    %100 = arith.truncf %99 : vector<8x16xf32> to vector<8x16xbf16>
    %cst_55 = arith.constant dense<0.000000e+00> : vector<8x8xf32>
    %101 = tpu.matmul %100, %84, %cst_55 {dimension_numbers = #tpu.dot_dimension_numbers<[1], [0], [0], [1], [0, 0, 1, 1], [], []>} : vector<8x16xbf16>, vector<16x8xbf16>, vector<8x8xf32> -> vector<8x8xf32>
    %102 = arith.truncf %101 : vector<8x8xf32> to vector<8x8xbf16>
    %c0_56 = arith.constant 0 : index
    %c24_57 = arith.constant 24 : index
    %103 = vector.load %arg9[%c0_56, %c24_57] : memref<8x32xbf16, #tpu.memory_space<vmem>>, vector<8x8xbf16>
    tpu.vector_store %arg9[%c0_56, %c24_57], %102 {strides = array<i32>} : memref<8x32xbf16, #tpu.memory_space<vmem>>, vector<8x8xbf16>,
    %104 = arith.addf %78, %99 : vector<8x16xf32>
    %c0_58 = arith.constant 0 : index
    %c0_59 = arith.constant 0 : index
    %105 = vector.load %arg9[%c0_58, %c0_59] : memref<8x32xbf16, #tpu.memory_space<vmem>>, vector<8x32xbf16>
    %c0_60 = arith.constant 0 : index
    %c0_61 = arith.constant 0 : index
    %106 = vector.load %arg4[%c0_60, %c0_61] : memref<32x32xbf16, #tpu.memory_space<vmem>>, vector<32x32xbf16>
    %cst_62 = arith.constant dense<0.000000e+00> : vector<8x32xf32>
    %107 = tpu.matmul %105, %106, %cst_62 {dimension_numbers = #tpu.dot_dimension_numbers<[1], [0], [0], [1], [0, 0, 1, 1], [], []>} : vector<8x32xbf16>, vector<32x32xbf16>, vector<8x32xf32> -> vector<8x32xf32>
    %c0_63 = arith.constant 0 : index
    %c0_64 = arith.constant 0 : index
    %108 = vector.load %arg5[%c0_63, %c0_64] : memref<1x32xf32, #tpu.memory_space<vmem>>, vector<1x32xf32>
    %109 = vector.broadcast %108 : vector<1x32xf32> to vector<8x32xf32>
    %110 = arith.addf %107, %109 : vector<8x32xf32>
    %c0_65 = arith.constant 0 : index
    %c0_66 = arith.constant 0 : index
    %c0_67 = arith.constant 0 : index
    %111 = vector.load %arg6[%c0_65, %c0_66, %c0_67] : memref<1x8x32xf32, #tpu.memory_space<vmem>>, vector<1x8x32xf32>
    %112 = vector.shape_cast %111 : vector<1x8x32xf32> to vector<8x32xf32>
    %113 = arith.addf %110, %112 : vector<8x32xf32>
    %c0_68 = arith.constant 0 : index
    %c0_69 = arith.constant 0 : index
    %c0_70 = arith.constant 0 : index
    %114 = vector.load %arg7[%c0_68, %c0_69, %c0_70] : memref<1x8x32xf32, #tpu.memory_space<vmem>>, vector<1x8x32xf32>
    %115 = vector.shape_cast %114 : vector<1x8x32xf32> to vector<8x32xf32>
    %116 = vector.shape_cast %113 : vector<8x32xf32> to vector<1x8x32xf32>
    tpu.vector_store %arg7[%c0_68, %c0_69, %c0_70], %116 {strides = array<i32>} : memref<1x8x32xf32, #tpu.memory_space<vmem>>, vector<1x8x32xf32>,
    %cst_71 = arith.constant 2.500000e-01 : f32
    %117 = vector.broadcast %cst_71 : f32 to vector<8x16xf32>
    %118 = arith.mulf %104, %117 : vector<8x16xf32>
    %c0_72 = arith.constant 0 : index
    %c0_73 = arith.constant 0 : index
    %c0_74 = arith.constant 0 : index
    %119 = vector.load %arg8[%c0_72, %c0_73, %c0_74] : memref<1x8x16xf32, #tpu.memory_space<vmem>>, vector<1x8x16xf32>
    %120 = vector.shape_cast %119 : vector<1x8x16xf32> to vector<8x16xf32>
    %121 = vector.shape_cast %118 : vector<8x16xf32> to vector<1x8x16xf32>
    tpu.vector_store %arg8[%c0_72, %c0_73, %c0_74], %121 {strides = array<i32>} : memref<1x8x16xf32, #tpu.memory_space<vmem>>, vector<1x8x16xf32>,
    return
  }
  func.func @transform_0(%arg0: i32) -> (i32, i32, i32) {
    %c0_i32 = arith.constant 0 : i32
    %c0_i32_0 = arith.constant 0 : i32
    %c0_i32_1 = arith.constant 0 : i32
    return %arg0, %c0_i32, %c0_i32_0 : i32, i32, i32
  }
  func.func @transform_1(%arg0: i32) -> (i32, i32, i32) {
    %c0_i32 = arith.constant 0 : i32
    %c0_i32_0 = arith.constant 0 : i32
    %c0_i32_1 = arith.constant 0 : i32
    return %arg0, %c0_i32, %c0_i32_0 : i32, i32, i32
  }
  func.func @transform_2(%arg0: i32) -> (i32, i32, i32) {
    %c0_i32 = arith.constant 0 : i32
    %c0_i32_0 = arith.constant 0 : i32
    %c0_i32_1 = arith.constant 0 : i32
    return %arg0, %c0_i32, %c0_i32_0 : i32, i32, i32
  }
  func.func @transform_3(%arg0: i32) -> (i32, i32) {
    %c0_i32 = arith.constant 0 : i32
    %c0_i32_0 = arith.constant 0 : i32
    %c0_i32_1 = arith.constant 0 : i32
    return %c0_i32, %c0_i32_0 : i32, i32
  }
  func.func @transform_4(%arg0: i32) -> (i32, i32) {
    %c0_i32 = arith.constant 0 : i32
    %c0_i32_0 = arith.constant 0 : i32
    %c0_i32_1 = arith.constant 0 : i32
    return %c0_i32, %c0_i32_0 : i32, i32
  }
  func.func @transform_5(%arg0: i32) -> (i32, i32, i32) {
    %c0_i32 = arith.constant 0 : i32
    %c0_i32_0 = arith.constant 0 : i32
    %c0_i32_1 = arith.constant 0 : i32
    return %arg0, %c0_i32, %c0_i32_0 : i32, i32, i32
  }
  func.func @transform_6(%arg0: i32) -> (i32, i32, i32) {
    %c0_i32 = arith.constant 0 : i32
    %c0_i32_0 = arith.constant 0 : i32
    %c0_i32_1 = arith.constant 0 : i32
    return %arg0, %c0_i32, %c0_i32_0 : i32, i32, i32
  }
  func.func @transform_7(%arg0: i32) -> (i32, i32, i32) {
    %c0_i32 = arith.constant 0 : i32
    %c0_i32_0 = arith.constant 0 : i32
    %c0_i32_1 = arith.constant 0 : i32
    return %arg0, %c0_i32, %c0_i32_0 : i32, i32, i32
  }
}

module attributes {stable_mosaic.version = 11 : i64} {
  func.func @_ln_ffn_residual_kernel(%arg0: i32, %arg1: memref<16x32xf32, #tpu.memory_space<vmem>>, %arg2: memref<1x32xf32, #tpu.memory_space<vmem>>, %arg3: memref<1x32xf32, #tpu.memory_space<vmem>>, %arg4: memref<32x64xbf16, #tpu.memory_space<vmem>>, %arg5: memref<1x64xf32, #tpu.memory_space<vmem>>, %arg6: memref<64x32xbf16, #tpu.memory_space<vmem>>, %arg7: memref<1x32xf32, #tpu.memory_space<vmem>>, %arg8: memref<16x32xf32, #tpu.memory_space<vmem>>, %arg9: memref<16x32xf32, #tpu.memory_space<vmem>>) attributes {dimension_semantics = [#tpu.dimension_semantics<parallel>], iteration_bounds = array<i64: 1>, scalar_prefetch = 0 : i64, scratch_operands = 0 : i64, tpu.core_type = #tpu.core_type<tc>, window_params = [{transform_indices = @transform_0, window_bounds = array<i64: 16, 32>}, {pipeline_mode = #tpu.pipeline_mode<synchronous>, transform_indices = @transform_1, window_bounds = array<i64: 1, 32>}, {pipeline_mode = #tpu.pipeline_mode<synchronous>, transform_indices = @transform_2, window_bounds = array<i64: 1, 32>}, {pipeline_mode = #tpu.pipeline_mode<synchronous>, transform_indices = @transform_3, window_bounds = array<i64: 32, 64>}, {pipeline_mode = #tpu.pipeline_mode<synchronous>, transform_indices = @transform_4, window_bounds = array<i64: 1, 64>}, {pipeline_mode = #tpu.pipeline_mode<synchronous>, transform_indices = @transform_5, window_bounds = array<i64: 64, 32>}, {pipeline_mode = #tpu.pipeline_mode<synchronous>, transform_indices = @transform_6, window_bounds = array<i64: 1, 32>}, {transform_indices = @transform_7, window_bounds = array<i64: 16, 32>}, {transform_indices = @transform_8, window_bounds = array<i64: 16, 32>}]} {
    %c0 = arith.constant 0 : index
    %c0_0 = arith.constant 0 : index
    %0 = vector.load %arg1[%c0, %c0_0] : memref<16x32xf32, #tpu.memory_space<vmem>>, vector<16x32xf32>
    %c0_1 = arith.constant 0 : index
    %c0_2 = arith.constant 0 : index
    %1 = vector.load %arg2[%c0_1, %c0_2] : memref<1x32xf32, #tpu.memory_space<vmem>>, vector<1x32xf32>
    %c0_3 = arith.constant 0 : index
    %c0_4 = arith.constant 0 : index
    %2 = vector.load %arg3[%c0_3, %c0_4] : memref<1x32xf32, #tpu.memory_space<vmem>>, vector<1x32xf32>
    %cst = arith.constant dense<0.000000e+00> : vector<16xf32>
    %3 = vector.multi_reduction <add>, %0, %cst [1] : vector<16x32xf32> to vector<16xf32>
    %4 = vector.shape_cast %3 : vector<16xf32> to vector<16x1xf32>
    %cst_5 = arith.constant 3.200000e+01 : f32
    %5 = vector.broadcast %cst_5 : f32 to vector<16x1xf32>
    %6 = arith.divf %4, %5 : vector<16x1xf32>
    %7 = vector.broadcast %6 : vector<16x1xf32> to vector<16x32xf32>
    %8 = arith.subf %0, %7 : vector<16x32xf32>
    %9 = arith.mulf %8, %8 : vector<16x32xf32>
    %cst_6 = arith.constant dense<0.000000e+00> : vector<16xf32>
    %10 = vector.multi_reduction <add>, %9, %cst_6 [1] : vector<16x32xf32> to vector<16xf32>
    %11 = vector.shape_cast %10 : vector<16xf32> to vector<16x1xf32>
    %cst_7 = arith.constant 3.200000e+01 : f32
    %12 = vector.broadcast %cst_7 : f32 to vector<16x1xf32>
    %13 = arith.divf %11, %12 : vector<16x1xf32>
    %14 = vector.broadcast %6 : vector<16x1xf32> to vector<16x32xf32>
    %15 = arith.subf %0, %14 : vector<16x32xf32>
    %cst_8 = arith.constant 9.99999974E-6 : f32
    %16 = vector.broadcast %cst_8 : f32 to vector<16x1xf32>
    %17 = arith.addf %13, %16 : vector<16x1xf32>
    %18 = math.rsqrt %17 : vector<16x1xf32>
    %19 = vector.broadcast %18 : vector<16x1xf32> to vector<16x32xf32>
    %20 = arith.mulf %15, %19 : vector<16x32xf32>
    %21 = vector.broadcast %1 : vector<1x32xf32> to vector<16x32xf32>
    %22 = arith.mulf %20, %21 : vector<16x32xf32>
    %23 = vector.broadcast %2 : vector<1x32xf32> to vector<16x32xf32>
    %24 = arith.addf %22, %23 : vector<16x32xf32>
    %25 = arith.truncf %24 : vector<16x32xf32> to vector<16x32xbf16>
    %c0_9 = arith.constant 0 : index
    %c0_10 = arith.constant 0 : index
    %26 = vector.load %arg4[%c0_9, %c0_10] : memref<32x64xbf16, #tpu.memory_space<vmem>>, vector<32x64xbf16>
    %cst_11 = arith.constant dense<0.000000e+00> : vector<16x64xf32>
    %27 = tpu.matmul %25, %26, %cst_11 {dimension_numbers = #tpu.dot_dimension_numbers<[1], [0], [0], [1], [0, 0, 1, 1], [], []>} : vector<16x32xbf16>, vector<32x64xbf16>, vector<16x64xf32> -> vector<16x64xf32>
    %c0_12 = arith.constant 0 : index
    %c0_13 = arith.constant 0 : index
    %28 = vector.load %arg5[%c0_12, %c0_13] : memref<1x64xf32, #tpu.memory_space<vmem>>, vector<1x64xf32>
    %29 = vector.broadcast %28 : vector<1x64xf32> to vector<16x64xf32>
    %30 = arith.addf %27, %29 : vector<16x64xf32>
    %cst_14 = arith.constant 0.000000e+00 : f32
    %31 = vector.broadcast %cst_14 : f32 to vector<16x64xf32>
    %32 = arith.maximumf %30, %31 : vector<16x64xf32>
    %33 = arith.truncf %32 : vector<16x64xf32> to vector<16x64xbf16>
    %c0_15 = arith.constant 0 : index
    %c0_16 = arith.constant 0 : index
    %34 = vector.load %arg6[%c0_15, %c0_16] : memref<64x32xbf16, #tpu.memory_space<vmem>>, vector<64x32xbf16>
    %cst_17 = arith.constant dense<0.000000e+00> : vector<16x32xf32>
    %35 = tpu.matmul %33, %34, %cst_17 {dimension_numbers = #tpu.dot_dimension_numbers<[1], [0], [0], [1], [0, 0, 1, 1], [], []>} : vector<16x64xbf16>, vector<64x32xbf16>, vector<16x32xf32> -> vector<16x32xf32>
    %c0_18 = arith.constant 0 : index
    %c0_19 = arith.constant 0 : index
    %36 = vector.load %arg7[%c0_18, %c0_19] : memref<1x32xf32, #tpu.memory_space<vmem>>, vector<1x32xf32>
    %37 = vector.broadcast %36 : vector<1x32xf32> to vector<16x32xf32>
    %38 = arith.addf %35, %37 : vector<16x32xf32>
    %c0_20 = arith.constant 0 : index
    %c0_21 = arith.constant 0 : index
    %39 = vector.load %arg8[%c0_20, %c0_21] : memref<16x32xf32, #tpu.memory_space<vmem>>, vector<16x32xf32>
    %40 = arith.addf %38, %39 : vector<16x32xf32>
    %cst_22 = arith.constant -3.40282347E+38 : f32
    %cst_23 = arith.constant 3.40282347E+38 : f32
    %41 = vector.broadcast %cst_22 : f32 to vector<16x32xf32>
    %42 = arith.maximumf %41, %40 : vector<16x32xf32>
    %43 = vector.broadcast %cst_23 : f32 to vector<16x32xf32>
    %44 = arith.minimumf %43, %42 : vector<16x32xf32>
    %c0_24 = arith.constant 0 : index
    %c0_25 = arith.constant 0 : index
    %45 = vector.load %arg9[%c0_24, %c0_25] : memref<16x32xf32, #tpu.memory_space<vmem>>, vector<16x32xf32>
    tpu.vector_store %arg9[%c0_24, %c0_25], %44 {strides = array<i32>} : memref<16x32xf32, #tpu.memory_space<vmem>>, vector<16x32xf32>,
    return
  }
  func.func @transform_0(%arg0: i32) -> (i32, i32) {
    %c0_i32 = arith.constant 0 : i32
    %c0_i32_0 = arith.constant 0 : i32
    return %arg0, %c0_i32 : i32, i32
  }
  func.func @transform_1(%arg0: i32) -> (i32, i32) {
    %c0_i32 = arith.constant 0 : i32
    %c0_i32_0 = arith.constant 0 : i32
    %c0_i32_1 = arith.constant 0 : i32
    return %c0_i32, %c0_i32_0 : i32, i32
  }
  func.func @transform_2(%arg0: i32) -> (i32, i32) {
    %c0_i32 = arith.constant 0 : i32
    %c0_i32_0 = arith.constant 0 : i32
    %c0_i32_1 = arith.constant 0 : i32
    return %c0_i32, %c0_i32_0 : i32, i32
  }
  func.func @transform_3(%arg0: i32) -> (i32, i32) {
    %c0_i32 = arith.constant 0 : i32
    %c0_i32_0 = arith.constant 0 : i32
    %c0_i32_1 = arith.constant 0 : i32
    return %c0_i32, %c0_i32_0 : i32, i32
  }
  func.func @transform_4(%arg0: i32) -> (i32, i32) {
    %c0_i32 = arith.constant 0 : i32
    %c0_i32_0 = arith.constant 0 : i32
    %c0_i32_1 = arith.constant 0 : i32
    return %c0_i32, %c0_i32_0 : i32, i32
  }
  func.func @transform_5(%arg0: i32) -> (i32, i32) {
    %c0_i32 = arith.constant 0 : i32
    %c0_i32_0 = arith.constant 0 : i32
    %c0_i32_1 = arith.constant 0 : i32
    return %c0_i32, %c0_i32_0 : i32, i32
  }
  func.func @transform_6(%arg0: i32) -> (i32, i32) {
    %c0_i32 = arith.constant 0 : i32
    %c0_i32_0 = arith.constant 0 : i32
    %c0_i32_1 = arith.constant 0 : i32
    return %c0_i32, %c0_i32_0 : i32, i32
  }
  func.func @transform_7(%arg0: i32) -> (i32, i32) {
    %c0_i32 = arith.constant 0 : i32
    %c0_i32_0 = arith.constant 0 : i32
    return %arg0, %c0_i32 : i32, i32
  }
  func.func @transform_8(%arg0: i32) -> (i32, i32) {
    %c0_i32 = arith.constant 0 : i32
    %c0_i32_0 = arith.constant 0 : i32
    return %arg0, %c0_i32 : i32, i32
  }
}

</mosaic_0001>

<llo_original>
// kernel: decoder_layer_forward.8
$region0: #{decoder_layer_forward.8}
  #allocation0 [shape = 'u32[]', space=smem, size = 0x4, offset = 0x4, fixed_abs, tag = 'smem constant byte address 0x4 - core index']
  #allocation1 [shape = 'u32[144,128]{1,0:T(1,128)}', space=vmem, size = 0x12000, scoped, tag = 'internal scratch']
  %s0 = inlined_call_operand.vmem [shape: f32[16,32], index: 0, kind: input, shape index: {}]
  %s1 = inlined_call_operand.vmem [shape: f32[1,32], index: 1, kind: input, shape index: {}]
  %s2 = inlined_call_operand.vmem [shape: f32[1,32], index: 2, kind: input, shape index: {}]
  %s3 = inlined_call_operand.vmem [shape: bf16[32,32], index: 3, kind: input, shape index: {}]
  %s4 = inlined_call_operand.vmem [shape: f32[1,32], index: 4, kind: input, shape index: {}]
  %s5 = inlined_call_operand.vmem [shape: bf16[16,32], index: 5, kind: output, shape index: {}]
  %s6 = sld [smem:[#allocation0]]
  $region30: #{decoder_layer_forward.8} parent=0
    _
  %s8 = ssub.s32 1, %s6
  %s9 = scalar_select 0, %s8, %s6
  // Predicated region
  $region2: #{decoder_layer_forward.8} parent=0 // pred_check
    _
  $region3: #{decoder_layer_forward.8} parent=0 // pred_check_branch
    %11 = sbr.rel (0) target = $region5
  $region4: #{decoder_layer_forward.8} parent=0 // pred_region
    _
  $region5: #{decoder_layer_forward.8} parent=0 // pred_fallthru
    _
  // Predicated region
  $region6: #{decoder_layer_forward.8} parent=0 // pred_check
    _
  $region7: #{decoder_layer_forward.8} parent=0 // pred_check_branch
    %13 = sbr.rel (0) target = $region9
  $region8: #{decoder_layer_forward.8} parent=0 // pred_region
    _
  $region9: #{decoder_layer_forward.8} parent=0 // pred_fallthru
    _
  // Predicated region
  $region10: #{decoder_layer_forward.8} parent=0 // pred_check
    _
  $region11: #{decoder_layer_forward.8} parent=0 // pred_check_branch
    %15 = sbr.rel (0) target = $region13
  $region12: #{decoder_layer_forward.8} parent=0 // pred_region
    _
  $region13: #{decoder_layer_forward.8} parent=0 // pred_fallthru
    _
  // Predicated region
  $region14: #{decoder_layer_forward.8} parent=0 // pred_check
    _
  $region15: #{decoder_layer_forward.8} parent=0 // pred_check_branch
    %17 = sbr.rel (0) target = $region17
  $region16: #{decoder_layer_forward.8} parent=0 // pred_region
    _
  $region17: #{decoder_layer_forward.8} parent=0 // pred_fallthru
    _
  // Predicated region
  $region18: #{decoder_layer_forward.8} parent=0 // pred_check
    _
  $region19: #{decoder_layer_forward.8} parent=0 // pred_check_branch
    %19 = sbr.rel (0) target = $region21
  $region20: #{decoder_layer_forward.8} parent=0 // pred_region
    _
  $region21: #{decoder_layer_forward.8} parent=0 // pred_fallthru
    _
  %v21 = vld [vmem:[%s0] sm:$0xff]
  %v22 = vld [vmem:[%s0 + $0x8] sm:$0xff]
  %v23 = vld [vmem:[%s1] sm:$0x1]
  %v24 = vld [vmem:[%s2] sm:$0x1]
  %vm25 = vcmask 261120
  %v26 = vsel %vm25, %v21, 0.0
  %27 = vadd.xlane.f32.xlu0 %v26
  %v28 = vpop.xlane.xlu0 %27
  %v29 = vsel %vm25, %v22, 0.0
  %30 = vadd.xlane.f32.xlu0 %v29
  %v31 = vpop.xlane.xlu0 %30
  %v32 = vrcp.pop 32.0
  %v33 = vmul.f32 %v28, %v32
  %v34 = vmul.f32 %v31, %v32
  %v35 = vsub.f32 %v21, %v33
  %v36 = vsub.f32 %v22, %v34
  %v37 = vmul.f32 %v35, %v35
  %v38 = vmul.f32 %v36, %v36
  %v39 = vsel %vm25, %v37, 0.0
  %40 = vadd.xlane.f32.xlu0 %v39
  %v41 = vpop.xlane.xlu0 %40
  %v42 = vsel %vm25, %v38, 0.0
  %43 = vadd.xlane.f32.xlu0 %v42
  %v44 = vpop.xlane.xlu0 %43
  %v45 = vmul.f32 %v41, %v32
  %v46 = vmul.f32 %v44, %v32
  %v47 = vadd.f32 %v45, 1e-05
  %v48 = vadd.f32 %v46, 1e-05
  %v49 = vrsqrt.pop %v47
  %v50 = vrsqrt.pop %v48
  %v51 = vmul.f32 %v35, %v49
  %v52 = vmul.f32 %v36, %v50
  %v54 = vlaneseq
  %v55 = vshrl.u32 %v54, 7
  %v56 = vsub.s32 0, %v55
  %v57 = vrot.slane %v23, %v56
  %v59 = vmul.f32 %v51, %v57
  %v60 = vmul.f32 %v52, %v57
  %v62 = vlaneseq
  %v63 = vshrl.u32 %v62, 7
  %v64 = vsub.s32 0, %v63
  %v65 = vrot.slane %v24, %v64
  %v67 = vadd.f32 %v59, %v65
  %v68 = vadd.f32 %v60, %v65
  %v69 = vpack.c.bf16 %v68, %v67
  %v70 = vld [vmem:[%s3] sm:$0xf]
  %v71 = vld [vmem:[%s3 + $0x4] sm:$0xf]
  %v72 = vld [vmem:[%s3 + $0x8] sm:$0xf]
  %v73 = vld [vmem:[%s3 + $0xc] sm:$0xf]
  %v74 = vld [vmem:[%s4] sm:$0x1]
  %v76 = vlaneseq
  %v77 = vshrl.u32 %v76, 7
  %v78 = vsub.s32 0, %v77
  %v79 = vrot.slane %v74, %v78
  %v85 = vunpack.c.l.b16 %v70
  %v86 = vunpack.c.l.b16 %v71
  %v87 = vunpack.c.l.b16 %v72
  %v88 = vunpack.c.l.b16 %v73
  %v89 = vpack.c.b16 %v86, %v85
  %v90 = vpack.c.b16 %v88, %v87
  %v94 = vsel %vm25, %v69, 0
  %96 = vmatprep.subr.bf16.mxu0 0
  %97 = vmatpush1.bf16.msra.mxu0 0
  %98 = vmatprep.subr.bf16.mxu0 0
  %99 = vmatpush1.bf16.msra.mxu0 0
  %100 = vmatprep.subr.bf16.mxu0 0
  %101 = vmatpush1.bf16.msra.mxu0 0
  %102 = vmatprep.subr.bf16.mxu0 0
  %103 = vmatpush1.bf16.msra.mxu0 0
  %104 = vmatprep.subr.bf16.mxu0 0
  %105 = vmatpush1.bf16.msra.mxu0 0
  %106 = vmatprep.subr.bf16.mxu0 0
  %107 = vmatpush1.bf16.msra.mxu0 0
  %108 = vmatprep.subr.bf16.mxu0 0
  %109 = vmatpush1.bf16.msra.mxu0 %v90
  %110 = vmatprep.subr.bf16.mxu0 0
  %111 = vmatpush1.bf16.msra.mxu0 %v89
  %112 = vmatprep.subr.bf16.mxu0 0
  %113 = vmatpush2.bf16.msra.mxu0 0
  %114 = vmatprep.subr.bf16.mxu0 0
  %115 = vmatpush2.bf16.msra.mxu0 0
  %116 = vmatprep.subr.bf16.mxu0 0
  %117 = vmatpush2.bf16.msra.mxu0 0
  %118 = vmatprep.subr.bf16.mxu0 0
  %119 = vmatpush2.bf16.msra.mxu0 0
  %120 = vmatprep.subr.bf16.mxu0 0
  %121 = vmatpush2.bf16.msra.mxu0 0
  %122 = vmatprep.subr.bf16.mxu0 0
  %123 = vmatpush2.bf16.msra.mxu0 0
  %124 = vmatprep.subr.bf16.mxu0 0
  %125 = vmatpush2.bf16.msra.mxu0 0
  %126 = vmatprep.subr.bf16.mxu0 0
  %127 = vmatpush2.bf16.msra.mxu0 0
  %128 = vmatprep.mubr.bf16.mxu0 0
  %129 = vmatmul.mubr.bf16.gmra.mxu0 %v94
  %v130 = vpop.f32.mrf.mxu0
  %v131 = vadd.f32 %v79, %v130
  %v132 = vpop.f32.mrf.mxu0
  %v133 = vpop.f32.mrf.mxu0
  %v134 = vadd.f32 %v79, %v133
  %v135 = vpop.f32.mrf.mxu0
  %136 = vdwg.mxu0
  %v137 = vpack.c.bf16 %v134, %v131
  %v139 = vunpack.c.l.b16 %v137
  %v140 = vunpack.c.h.b16 %v137
  %v141 = vpack.c.b16 %v139, %v139
  %v142 = vpack.c.b16 %v140, %v140
  %vm145 = vcmask 257024
  %146 = vst.msk [vmem:[%s5] sm:$0xf] %vm145, %v141
  %147 = vst.msk [vmem:[%s5 + $0x4] sm:$0xf] %vm145, %v142
  // Predicated region
  $region22: #{decoder_layer_forward.8} parent=0 // pred_check
    _
  $region23: #{decoder_layer_forward.8} parent=0 // pred_check_branch
    %149 = sbr.rel (0) target = $region25
  $region24: #{decoder_layer_forward.8} parent=0 // pred_region
    _
  $region25: #{decoder_layer_forward.8} parent=0 // pred_fallthru
    _
  // Predicated region
  $region26: #{decoder_layer_forward.8} parent=0 // pred_check
    _
  $region27: #{decoder_layer_forward.8} parent=0 // pred_check_branch
    %151 = sbr.rel (0) target = $region29
  $region28: #{decoder_layer_forward.8} parent=0 // pred_region
    _
  $region29: #{decoder_layer_forward.8} parent=0 // pred_fallthru
    _

// kernel: decoder_layer_forward.6
$region0: #{decoder_layer_forward.6}
  #allocation0 [shape = 'u32[]', space=smem, size = 0x4, offset = 0x4, fixed_abs, tag = 'smem constant byte address 0x4 - core index']
  #allocation1 [shape = 'u32[144,128]{1,0:T(1,128)}', space=vmem, size = 0x12000, scoped, tag = 'internal scratch']
  %s0 = inlined_call_operand.vmem [shape: f32[16,32], index: 0, kind: input, shape index: {}]
  %s1 = inlined_call_operand.vmem [shape: f32[1,32], index: 1, kind: input, shape index: {}]
  %s2 = inlined_call_operand.vmem [shape: f32[1,32], index: 2, kind: input, shape index: {}]
  %s3 = inlined_call_operand.vmem [shape: bf16[32,96], index: 3, kind: input, shape index: {}]
  %s4 = inlined_call_operand.vmem [shape: f32[1,96], index: 4, kind: input, shape index: {}]
  %s5 = inlined_call_operand.vmem [shape: bf16[16,96], index: 5, kind: output, shape index: {}]
  %s6 = sld [smem:[#allocation0]]
  $region30: #{decoder_layer_forward.6} parent=0
    _
  %s8 = ssub.s32 1, %s6
  %s9 = scalar_select 0, %s8, %s6
  // Predicated region
  $region2: #{decoder_layer_forward.6} parent=0 // pred_check
    _
  $region3: #{decoder_layer_forward.6} parent=0 // pred_check_branch
    %11 = sbr.rel (0) target = $region5
  $region4: #{decoder_layer_forward.6} parent=0 // pred_region
    _
  $region5: #{decoder_layer_forward.6} parent=0 // pred_fallthru
    _
  // Predicated region
  $region6: #{decoder_layer_forward.6} parent=0 // pred_check
    _
  $region7: #{decoder_layer_forward.6} parent=0 // pred_check_branch
    %13 = sbr.rel (0) target = $region9
  $region8: #{decoder_layer_forward.6} parent=0 // pred_region
    _
  $region9: #{decoder_layer_forward.6} parent=0 // pred_fallthru
    _
  // Predicated region
  $region10: #{decoder_layer_forward.6} parent=0 // pred_check
    _
  $region11: #{decoder_layer_forward.6} parent=0 // pred_check_branch
    %15 = sbr.rel (0) target = $region13
  $region12: #{decoder_layer_forward.6} parent=0 // pred_region
    _
  $region13: #{decoder_layer_forward.6} parent=0 // pred_fallthru
    _
  // Predicated region
  $region14: #{decoder_layer_forward.6} parent=0 // pred_check
    _
  $region15: #{decoder_layer_forward.6} parent=0 // pred_check_branch
    %17 = sbr.rel (0) target = $region17
  $region16: #{decoder_layer_forward.6} parent=0 // pred_region
    _
  $region17: #{decoder_layer_forward.6} parent=0 // pred_fallthru
    _
  // Predicated region
  $region18: #{decoder_layer_forward.6} parent=0 // pred_check
    _
  $region19: #{decoder_layer_forward.6} parent=0 // pred_check_branch
    %19 = sbr.rel (0) target = $region21
  $region20: #{decoder_layer_forward.6} parent=0 // pred_region
    _
  $region21: #{decoder_layer_forward.6} parent=0 // pred_fallthru
    _
  %v21 = vld [vmem:[%s0] sm:$0xff]
  %v22 = vld [vmem:[%s0 + $0x8] sm:$0xff]
  %v23 = vld [vmem:[%s1] sm:$0x1]
  %v24 = vld [vmem:[%s2] sm:$0x1]
  %vm25 = vcmask 261120
  %v26 = vsel %vm25, %v21, 0.0
  %27 = vadd.xlane.f32.xlu0 %v26
  %v28 = vpop.xlane.xlu0 %27
  %v29 = vsel %vm25, %v22, 0.0
  %30 = vadd.xlane.f32.xlu0 %v29
  %v31 = vpop.xlane.xlu0 %30
  %v32 = vrcp.pop 32.0
  %v33 = vmul.f32 %v28, %v32
  %v34 = vmul.f32 %v31, %v32
  %v35 = vsub.f32 %v21, %v33
  %v36 = vsub.f32 %v22, %v34
  %v37 = vmul.f32 %v35, %v35
  %v38 = vmul.f32 %v36, %v36
  %v39 = vsel %vm25, %v37, 0.0
  %40 = vadd.xlane.f32.xlu0 %v39
  %v41 = vpop.xlane.xlu0 %40
  %v42 = vsel %vm25, %v38, 0.0
  %43 = vadd.xlane.f32.xlu0 %v42
  %v44 = vpop.xlane.xlu0 %43
  %v45 = vmul.f32 %v41, %v32
  %v46 = vmul.f32 %v44, %v32
  %v47 = vadd.f32 %v45, 1e-05
  %v48 = vadd.f32 %v46, 1e-05
  %v49 = vrsqrt.pop %v47
  %v50 = vrsqrt.pop %v48
  %v51 = vmul.f32 %v35, %v49
  %v52 = vmul.f32 %v36, %v50
  %v54 = vlaneseq
  %v55 = vshrl.u32 %v54, 7
  %v56 = vsub.s32 0, %v55
  %v57 = vrot.slane %v23, %v56
  %v59 = vmul.f32 %v51, %v57
  %v60 = vmul.f32 %v52, %v57
  %v62 = vlaneseq
  %v63 = vshrl.u32 %v62, 7
  %v64 = vsub.s32 0, %v63
  %v65 = vrot.slane %v24, %v64
  %v67 = vadd.f32 %v59, %v65
  %v68 = vadd.f32 %v60, %v65
  %v69 = vpack.c.bf16 %v68, %v67
  %v70 = vld [vmem:[%s3] sm:$0xf]
  %v71 = vld [vmem:[%s3 + $0x4] sm:$0xf]
  %v72 = vld [vmem:[%s3 + $0x8] sm:$0xf]
  %v73 = vld [vmem:[%s3 + $0xc] sm:$0xf]
  %v74 = vld [vmem:[%s4] sm:$0x1]
  %v76 = vlaneseq
  %v77 = vshrl.u32 %v76, 7
  %v78 = vsub.s32 0, %v77
  %v79 = vrot.slane %v74, %v78
  %v85 = vunpack.c.l.b16 %v70
  %v86 = vunpack.c.l.b16 %v71
  %v87 = vunpack.c.l.b16 %v72
  %v88 = vunpack.c.l.b16 %v73
  %v89 = vpack.c.b16 %v86, %v85
  %v90 = vpack.c.b16 %v88, %v87
  %v94 = vsel %vm25, %v69, 0
  %96 = vmatprep.subr.bf16.mxu0 0
  %97 = vmatpush1.bf16.msra.mxu0 0
  %98 = vmatprep.subr.bf16.mxu0 0
  %99 = vmatpush1.bf16.msra.mxu0 0
  %100 = vmatprep.subr.bf16.mxu0 0
  %101 = vmatpush1.bf16.msra.mxu0 0
  %102 = vmatprep.subr.bf16.mxu0 0
  %103 = vmatpush1.bf16.msra.mxu0 0
  %104 = vmatprep.subr.bf16.mxu0 0
  %105 = vmatpush1.bf16.msra.mxu0 0
  %106 = vmatprep.subr.bf16.mxu0 0
  %107 = vmatpush1.bf16.msra.mxu0 0
  %108 = vmatprep.subr.bf16.mxu0 0
  %109 = vmatpush1.bf16.msra.mxu0 %v90
  %110 = vmatprep.subr.bf16.mxu0 0
  %111 = vmatpush1.bf16.msra.mxu0 %v89
  %112 = vmatprep.subr.bf16.mxu0 0
  %113 = vmatpush2.bf16.msra.mxu0 0
  %114 = vmatprep.subr.bf16.mxu0 0
  %115 = vmatpush2.bf16.msra.mxu0 0
  %116 = vmatprep.subr.bf16.mxu0 0
  %117 = vmatpush2.bf16.msra.mxu0 0
  %118 = vmatprep.subr.bf16.mxu0 0
  %119 = vmatpush2.bf16.msra.mxu0 0
  %120 = vmatprep.subr.bf16.mxu0 0
  %121 = vmatpush2.bf16.msra.mxu0 0
  %122 = vmatprep.subr.bf16.mxu0 0
  %123 = vmatpush2.bf16.msra.mxu0 0
  %124 = vmatprep.subr.bf16.mxu0 0
  %125 = vmatpush2.bf16.msra.mxu0 0
  %126 = vmatprep.subr.bf16.mxu0 0
  %127 = vmatpush2.bf16.msra.mxu0 0
  %128 = vmatprep.mubr.bf16.mxu0 0
  %129 = vmatmul.mubr.bf16.gmra.mxu0 %v94
  %v130 = vpop.f32.mrf.mxu0
  %v131 = vadd.f32 %v79, %v130
  %v132 = vpop.f32.mrf.mxu0
  %v133 = vpop.f32.mrf.mxu0
  %v134 = vadd.f32 %v79, %v133
  %v135 = vpop.f32.mrf.mxu0
  %136 = vdwg.mxu0
  %v137 = vpack.c.bf16 %v134, %v131
  %v139 = vunpack.c.l.b16 %v137
  %v140 = vunpack.c.h.b16 %v137
  %v141 = vpack.c.b16 %v139, %v139
  %v142 = vpack.c.b16 %v140, %v140
  %vm145 = vcmask 781312
  %146 = vst.msk [vmem:[%s5] sm:$0xf] %vm145, %v141
  %147 = vst.msk [vmem:[%s5 + $0x4] sm:$0xf] %vm145, %v142
  // Predicated region
  $region22: #{decoder_layer_forward.6} parent=0 // pred_check
    _
  $region23: #{decoder_layer_forward.6} parent=0 // pred_check_branch
    %149 = sbr.rel (0) target = $region25
  $region24: #{decoder_layer_forward.6} parent=0 // pred_region
    _
  $region25: #{decoder_layer_forward.6} parent=0 // pred_fallthru
    _
  // Predicated region
  $region26: #{decoder_layer_forward.6} parent=0 // pred_check
    _
  $region27: #{decoder_layer_forward.6} parent=0 // pred_check_branch
    %151 = sbr.rel (0) target = $region29
  $region28: #{decoder_layer_forward.6} parent=0 // pred_region
    _
  $region29: #{decoder_layer_forward.6} parent=0 // pred_fallthru
    _

// kernel: decoder_layer_forward.7
$region0: #{decoder_layer_forward.7}
  #allocation0 [shape = 'u32[]', space=smem, size = 0x4, offset = 0x4, fixed_abs, tag = 'smem constant byte address 0x4 - core index']
  #allocation1 [shape = 'u32[144,128]{1,0:T(1,128)}', space=vmem, size = 0x12000, scoped, tag = 'internal scratch']
  #allocation2 [shape = 'bf16[8,32]{1,0:T(8,128)(2,1)}', space=vmem, size = 0x800, scoped, tag = 'scratch operand']
  %s0 = inlined_call_operand.vmem [shape: bf16[2,8,96], index: 0, kind: input, shape index: {}]
  %s1 = inlined_call_operand.vmem [shape: bf16[32,32], index: 1, kind: input, shape index: {}]
  %s2 = inlined_call_operand.vmem [shape: f32[1,32], index: 2, kind: input, shape index: {}]
  %s3 = inlined_call_operand.vmem [shape: f32[2,8,32], index: 3, kind: input, shape index: {}]
  %s4 = inlined_call_operand.vmem [shape: f32[2,8,32], index: 4, kind: output, shape index: {}]
  %s5 = sld [smem:[#allocation0]]
  $region49: #{decoder_layer_forward.7} parent=0
    _
  %s7 = ssub.s32 1, %s5
  %s8 = scalar_select 0, %s7, %s5
  loop: start=0, step=1, limit=4
  $region2: #{decoder_layer_forward.7} parent=0 // loop_pre_header
    _
  $region3: #{decoder_layer_forward.7} parent=0 // loop_header
    %s10 = sphi 0, %s14
    %p11 = scmp.ge.s32.totalorder %s10, 4
    %s20 = sphi 0, %s22
    %s23 = sphi 0, %s20
    %s24 = sphi 0, %s23
    %s40 = sphi 0, %s24
    %s44 = sphi 0, %s44
    %s46 = sphi 0, %s44
    %s47 = sphi 0, %s46
    %s61 = sphi 0, %s47
    %s65 = sphi 0, %s65
    %s67 = sphi 0, %s65
    %s68 = sphi 0, %s67
    %s82 = sphi 0, %s68
    %s88 = sphi 0, %s90
    %s91 = sphi 0, %s88
    %s92 = sphi 0, %s91
    %s108 = sphi 0, %s92
    %s114 = sphi 0, %s116
    %s117 = sphi 0, %s114
    %s118 = sphi 0, %s117
    %s134 = sphi 0, %s118
  $region4: #{decoder_layer_forward.7} parent=0 // loop_header_branch
    %13 = sbr.rel (%p11) target = $region8
  $region5: #{decoder_layer_forward.7} parent=0 // loop_body
    %s15 = ssub.s32 %s10, 1
    %s16 = ssub.s32 %s10, 2
    %s17 = sadd.s32 %s10, 1
    %s18 = ssub.s32 %s10, %s17
    %p19 = scmp.eq.s32.totalorder %s18, 0
    %s21 = sadd.s32 %s20, 1
    %s22 = scalar_select %p19, %s20, %s21
    %p25 = pneg %p19
    %p26 = scmp.eq.s32.totalorder %s10, 1
    %p27 = por %p25, %p26
    %p28 = scmp.ne.s32.totalorder %s20, %s23
    %p29 = scmp.eq.s32.totalorder %s10, 0
    %p30 = por %p28, %p29
    %p31 = scmp.ne.s32.totalorder %s20, %s23
    %p32 = scmp.eq.s32.totalorder %s15, 1
    %p33 = por %p31, %p32
    %p34 = scmp.ne.s32.totalorder %s23, %s24
    %p35 = scmp.eq.s32.totalorder %s15, 0
    %p36 = por %p34, %p35
    %p37 = scmp.ne.s32.totalorder %s23, %s24
    %p38 = scmp.eq.s32.totalorder %s16, 1
    %p39 = por %p37, %p38
    %p41 = scmp.ne.s32.totalorder %s24, %s40
    %p42 = scmp.eq.s32.totalorder %s16, 0
    %p43 = por %p41, %p42
    %s45 = sadd.s32 %s44, 1
    %p48 = scmp.eq.s32.totalorder %s10, 1
    %p49 = scmp.ne.s32.totalorder %s44, %s46
    %p50 = scmp.eq.s32.totalorder %s10, 0
    %p51 = por %p49, %p50
    %p52 = scmp.ne.s32.totalorder %s44, %s46
    %p53 = scmp.eq.s32.totalorder %s15, 1
    %p54 = por %p52, %p53
    %p55 = scmp.ne.s32.totalorder %s46, %s47
    %p56 = scmp.eq.s32.totalorder %s15, 0
    %p57 = por %p55, %p56
    %p58 = scmp.ne.s32.totalorder %s46, %s47
    %p59 = scmp.eq.s32.totalorder %s16, 1
    %p60 = por %p58, %p59
    %p62 = scmp.ne.s32.totalorder %s47, %s61
    %p63 = scmp.eq.s32.totalorder %s16, 0
    %p64 = por %p62, %p63
    %s66 = sadd.s32 %s65, 1
    %p69 = scmp.eq.s32.totalorder %s10, 1
    %p70 = scmp.ne.s32.totalorder %s65, %s67
    %p71 = scmp.eq.s32.totalorder %s10, 0
    %p72 = por %p70, %p71
    %p73 = scmp.ne.s32.totalorder %s65, %s67
    %p74 = scmp.eq.s32.totalorder %s15, 1
    %p75 = por %p73, %p74
    %p76 = scmp.ne.s32.totalorder %s67, %s68
    %p77 = scmp.eq.s32.totalorder %s15, 0
    %p78 = por %p76, %p77
    %p79 = scmp.ne.s32.totalorder %s67, %s68
    %p80 = scmp.eq.s32.totalorder %s16, 1
    %p81 = por %p79, %p80
    %p83 = scmp.ne.s32.totalorder %s68, %s82
    %p84 = scmp.eq.s32.totalorder %s16, 0
    %p85 = por %p83, %p84
    %s86 = ssub.s32 %s10, %s17
    %p87 = scmp.eq.s32.totalorder %s86, 0
    %s89 = sadd.s32 %s88, 1
    %s90 = scalar_select %p87, %s88, %s89
    %p93 = pneg %p87
    %p94 = scmp.eq.s32.totalorder %s10, 1
    %p95 = por %p93, %p94
    %p96 = scmp.ne.s32.totalorder %s88, %s91
    %p97 = scmp.eq.s32.totalorder %s10, 0
    %p98 = por %p96, %p97
    %p99 = scmp.ne.s32.totalorder %s88, %s91
    %p100 = scmp.eq.s32.totalorder %s15, 1
    %p101 = por %p99, %p100
    %p102 = scmp.ne.s32.totalorder %s91, %s92
    %p103 = scmp.eq.s32.totalorder %s15, 0
    %p104 = por %p102, %p103
    %p105 = scmp.ne.s32.totalorder %s91, %s92
    %p106 = scmp.eq.s32.totalorder %s16, 1
    %p107 = por %p105, %p106
    %p109 = scmp.ne.s32.totalorder %s92, %s108
    %p110 = scmp.eq.s32.totalorder %s16, 0
    %p111 = por %p109, %p110
    %s112 = ssub.s32 %s10, %s17
    %p113 = scmp.eq.s32.totalorder %s112, 0
    %s115 = sadd.s32 %s114, 1
    %s116 = scalar_select %p113, %s114, %s115
    %p119 = pneg %p113
    %p120 = scmp.eq.s32.totalorder %s10, 1
    %p121 = por %p119, %p120
    %p122 = scmp.ne.s32.totalorder %s114, %s117
    %p123 = scmp.eq.s32.totalorder %s10, 0
    %p124 = por %p122, %p123
    %p125 = scmp.ne.s32.totalorder %s114, %s117
    %p126 = scmp.eq.s32.totalorder %s15, 1
    %p127 = por %p125, %p126
    %p128 = scmp.ne.s32.totalorder %s117, %s118
    %p129 = scmp.eq.s32.totalorder %s15, 0
    %p130 = por %p128, %p129
    %p131 = scmp.ne.s32.totalorder %s117, %s118
    %p132 = scmp.eq.s32.totalorder %s16, 1
    %p133 = por %p131, %p132
    %p135 = scmp.ne.s32.totalorder %s118, %s134
    %p136 = scmp.eq.s32.totalorder %s16, 0
    %p137 = por %p135, %p136
    %p138 = scmp.le.s32.totalorder 1, %s10
    %p139 = scmp.lt.s32.totalorder %s10, 3
    %p140 = pnand %p138, %p139
    %p141 = pneg %p140
    // Predicated region
    $region9: #{decoder_layer_forward.7} parent=5 // pred_check
      _
    $region10: #{decoder_layer_forward.7} parent=5 // pred_check_branch
      %143 = sbr.rel (%p140) target = $region12
    $region11: #{decoder_layer_forward.7} parent=5 // pred_region
      %s144 = ssub.s32 %s10, 1
      // Predicated region
      $region13: #{decoder_layer_forward.7} parent=11 // pred_check
        %p145 = pneg %p57
      $region14: #{decoder_layer_forward.7} parent=11 // pred_check_branch
        %147 = sbr.rel (%p145) target = $region16
      $region15: #{decoder_layer_forward.7} parent=11 // pred_region
        _
      $region16: #{decoder_layer_forward.7} parent=11 // pred_fallthru
        _
      // Predicated region
      $region17: #{decoder_layer_forward.7} parent=11 // pred_check
        %p148 = pneg %p78
      $region18: #{decoder_layer_forward.7} parent=11 // pred_check_branch
        %150 = sbr.rel (%p148) target = $region20
      $region19: #{decoder_layer_forward.7} parent=11 // pred_region
        _
      $region20: #{decoder_layer_forward.7} parent=11 // pred_fallthru
        _
    $region12: #{decoder_layer_forward.7} parent=5 // pred_fallthru
      _
    %p151 = scmp.lt.s32.totalorder %s10, 2
    // Predicated region
    $region21: #{decoder_layer_forward.7} parent=5 // pred_check
      %p152 = pneg %p151
    $region22: #{decoder_layer_forward.7} parent=5 // pred_check_branch
      %154 = sbr.rel (%p152) target = $region24
    $region23: #{decoder_layer_forward.7} parent=5 // pred_region
      // Predicated region
      $region25: #{decoder_layer_forward.7} parent=23 // pred_check
        %p155 = pneg %p30
      $region26: #{decoder_layer_forward.7} parent=23 // pred_check_branch
        %157 = sbr.rel (%p155) target = $region28
      $region27: #{decoder_layer_forward.7} parent=23 // pred_region
        %p158 = scmp.lt.s32.totalorder %s10, 1
        %s159 = scalar_select %p158, %s10, 1
        %s160 = smul.addr %s159, 4
        %s161 = scalar_lea.vmem %s0, %s160
      $region28: #{decoder_layer_forward.7} parent=23 // pred_fallthru
        _
      // Predicated region
      $region29: #{decoder_layer_forward.7} parent=23 // pred_check
        %p162 = pneg %p98
      $region30: #{decoder_layer_forward.7} parent=23 // pred_check_branch
        %164 = sbr.rel (%p162) target = $region32
      $region31: #{decoder_layer_forward.7} parent=23 // pred_region
        %p165 = scmp.lt.s32.totalorder %s10, 1
        %s166 = scalar_select %p165, %s10, 1
        %s167 = smul.addr %s166, 8
        %s168 = scalar_lea.vmem %s3, %s167
      $region32: #{decoder_layer_forward.7} parent=23 // pred_fallthru
        _
    $region24: #{decoder_layer_forward.7} parent=5 // pred_fallthru
      _
    %p169 = scmp.le.s32.totalorder 1, %s10
    %p170 = scmp.lt.s32.totalorder %s10, 3
    %p171 = pnand %p169, %p170
    %p172 = pneg %p171
    // Predicated region
    $region33: #{decoder_layer_forward.7} parent=5 // pred_check
      _
    $region34: #{decoder_layer_forward.7} parent=5 // pred_check_branch
      %174 = sbr.rel (%p171) target = $region36
    $region35: #{decoder_layer_forward.7} parent=5 // pred_region
      %s175 = ssub.s32 %s10, 1
      %p176 = scmp.lt.s32.totalorder %s15, 1
      %s177 = scalar_select %p176, %s15, 1
      %s178 = smul.addr %s177, 4
      %s179 = scalar_lea.vmem %s0, %s178
      %p180 = pneg %p36
      %p181 = pneg %p33
      %p182 = pneg %p57
      %p183 = pneg %p54
      %p184 = pneg %p78
      %p185 = pneg %p75
      %p186 = scmp.lt.s32.totalorder %s15, 1
      %s187 = scalar_select %p186, %s15, 1
      %s188 = smul.addr %s187, 8
      %s189 = scalar_lea.vmem %s3, %s188
      %p190 = pneg %p104
      %p191 = pneg %p101
      %p192 = pneg %p130
      %p193 = pneg %p127
      %p194 = scmp.lt.s32.totalorder %s15, 1
      %s195 = scalar_select %p194, %s15, 1
      %s196 = smul.addr %s195, 8
      %s197 = scalar_lea.vmem %s4, %s196
      %p198 = scmp.lt.s32.totalorder %s15, 1
      %s199 = scalar_select %p198, %s15, 1
      %s200 = smul.addr %s199, 4
      %s201 = scalar_lea.vmem %s0, %s200
      %p202 = scmp.lt.s32.totalorder %s15, 1
      %s203 = scalar_select %p202, %s15, 1
      %s204 = smul.addr %s203, 8
      %s205 = scalar_lea.vmem %s3, %s204
      %p206 = scmp.lt.s32.totalorder %s15, 1
      %s207 = scalar_select %p206, %s15, 1
      %s208 = smul.addr %s207, 8
      %s209 = scalar_lea.vmem %s4, %s208
      %v211 = vlaneseq
      %v212 = vshrl.u32 %v211, 7
      %v213 = vlaneseq
      %v214 = vand.u32 %v213, 127
      %vm215 = vcmp.gt.s32.totalorder %v214, %v212
      %v216 = vsel %vm215, -1e+09, 0.0
      %v217 = vld [vmem:[%s201] sm:$0xf]
      %v219 = vunpack.c.l.b16 %v217
      %v220 = vpack.c.b16 %v219, %v219
      %221 = vrot.lane.b32.xlu0 %v220, 96
      %v222 = vpop.permute.xlu0 %221
      %vm223 = vcmask 64512
      %v225 = vsel %vm223, %v217, 0
      %v228 = vsel %vm223, %v222, 0
      %230 = vmatprep.subr.bf16.mxu0 0
      %231 = vmatpush1.bf16.xpose.msra.mxu0 0
      %232 = vmatprep.subr.bf16.mxu0 0
      %233 = vmatpush1.bf16.xpose.msra.mxu0 0
      %234 = vmatprep.subr.bf16.mxu0 0
      %235 = vmatpush1.bf16.xpose.msra.mxu0 0
      %236 = vmatprep.subr.bf16.mxu0 0
      %237 = vmatpush1.bf16.xpose.msra.mxu0 0
      %238 = vmatprep.subr.bf16.mxu0 0
      %239 = vmatpush1.bf16.xpose.msra.mxu0 0
      %240 = vmatprep.subr.bf16.mxu0 0
      %241 = vmatpush1.bf16.xpose.msra.mxu0 0
      %242 = vmatprep.subr.bf16.mxu0 0
      %243 = vmatpush1.bf16.xpose.msra.mxu0 0
      %244 = vmatprep.subr.bf16.mxu0 0
      %245 = vmatpush1.bf16.xpose.msra.mxu0 %v228
      %246 = vmatprep.subr.bf16.mxu0 0
      %247 = vmatpush2.bf16.xpose.msra.mxu0 0
      %248 = vmatprep.subr.bf16.mxu0 0
      %249 = vmatpush2.bf16.xpose.msra.mxu0 0
      %250 = vmatprep.subr.bf16.mxu0 0
      %251 = vmatpush2.bf16.xpose.msra.mxu0 0
      %252 = vmatprep.subr.bf16.mxu0 0
      %253 = vmatpush2.bf16.xpose.msra.mxu0 0
      %254 = vmatprep.subr.bf16.mxu0 0
      %255 = vmatpush2.bf16.xpose.msra.mxu0 0
      %256 = vmatprep.subr.bf16.mxu0 0
      %257 = vmatpush2.bf16.xpose.msra.mxu0 0
      %258 = vmatprep.subr.bf16.mxu0 0
      %259 = vmatpush2.bf16.xpose.msra.mxu0 0
      %260 = vmatprep.subr.bf16.mxu0 0
      %261 = vmatpush2.bf16.xpose.msra.mxu0 0
      %262 = vmatprep.mubr.bf16.mxu0 0
      %263 = vmatmul.mubr.bf16.gmra.mxu0 %v225
      %v264 = vpop.f32.mrf.mxu0
      %v265 = vadd.f32 0.0, %v264
      %v266 = vpop.f32.mrf.mxu0
      %v267 = vpop.f32.mrf.mxu0
      %v268 = vpop.f32.mrf.mxu0
      %269 = vdwg.mxu0
      %v270 = vmul.f32 %v265, 0.35355338
      %v271 = vadd.f32 %v270, %v216
      %v272 = vsel %vm223, %v271, -inf
      %273 = vmax.xlane.f32.xlu0 %v272
      %v274 = vpop.xlane.xlu0 %273
      %v275 = vsub.f32 %v271, %v274
      %v276 = vmul.f32 %v275, 1.442695
      %v277 = vpow.pop %v276
      %v278 = vsel %vm223, %v277, 0.0
      %279 = vadd.xlane.f32.xlu0 %v278
      %v280 = vpop.xlane.xlu0 %279
      %v281 = vrcp.pop %v280
      %v282 = vmul.f32 %v277, %v281
      %v283 = vpack.c.bf16 %v282, %v282
      %284 = vrot.lane.b32.xlu0 %v220, 64
      %v285 = vpop.permute.xlu0 %284
      %v287 = vsel %vm223, %v283, 0
      %vm289 = vcmask 1043456
      %v291 = vsel %vm289, %v285, 0
      %293 = vmatprep.subr.bf16.mxu0 0
      %294 = vmatpush1.bf16.msra.mxu0 0
      %295 = vmatprep.subr.bf16.mxu0 0
      %296 = vmatpush1.bf16.msra.mxu0 0
      %297 = vmatprep.subr.bf16.mxu0 0
      %298 = vmatpush1.bf16.msra.mxu0 0
      %299 = vmatprep.subr.bf16.mxu0 0
      %300 = vmatpush1.bf16.msra.mxu0 0
      %301 = vmatprep.subr.bf16.mxu0 0
      %302 = vmatpush1.bf16.msra.mxu0 0
      %303 = vmatprep.subr.bf16.mxu0 0
      %304 = vmatpush1.bf16.msra.mxu0 0
      %305 = vmatprep.subr.bf16.mxu0 0
      %306 = vmatpush1.bf16.msra.mxu0 0
      %307 = vmatprep.subr.bf16.mxu0 0
      %308 = vmatpush1.bf16.msra.mxu0 %v291
      %309 = vmatprep.subr.bf16.mxu0 0
      %310 = vmatpush2.bf16.msra.mxu0 0
      %311 = vmatprep.subr.bf16.mxu0 0
      %312 = vmatpush2.bf16.msra.mxu0 0
      %313 = vmatprep.subr.bf16.mxu0 0
      %314 = vmatpush2.bf16.msra.mxu0 0
      %315 = vmatprep.subr.bf16.mxu0 0
      %316 = vmatpush2.bf16.msra.mxu0 0
      %317 = vmatprep.subr.bf16.mxu0 0
      %318 = vmatpush2.bf16.msra.mxu0 0
      %319 = vmatprep.subr.bf16.mxu0 0
      %320 = vmatpush2.bf16.msra.mxu0 0
      %321 = vmatprep.subr.bf16.mxu0 0
      %322 = vmatpush2.bf16.msra.mxu0 0
      %323 = vmatprep.subr.bf16.mxu0 0
      %324 = vmatpush2.bf16.msra.mxu0 0
      %325 = vmatprep.mubr.bf16.mxu0 0
      %326 = vmatmul.mubr.bf16.gmra.mxu0 %v287
      %v327 = vpop.f32.mrf.mxu0
      %v328 = vadd.f32 0.0, %v327
      %v329 = vpop.f32.mrf.mxu0
      %v330 = vpop.f32.mrf.mxu0
      %v331 = vpop.f32.mrf.mxu0
      %332 = vdwg.mxu0
      %v333 = vpack.c.bf16 %v328, %v328
      %vm334 = vcmask 60416
      %335 = vst.msk [vmem:[#allocation2] sm:$0xf] %vm334, %v333
      %v336 = vld [vmem:[%s201] sm:$0xf]
      %v338 = vunpack.c.l.b16 %v336
      %v339 = vpack.c.b16 %v338, %v338
      %340 = vrot.lane.b32.xlu0 %v339, 120
      %v341 = vpop.permute.xlu0 %340
      %342 = vrot.lane.b32.xlu0 %v339, 88
      %v343 = vpop.permute.xlu0 %342
      %v345 = vsel %vm223, %v341, 0
      %v348 = vsel %vm223, %v343, 0
      %350 = vmatprep.subr.bf16.mxu0 0
      %351 = vmatpush1.bf16.xpose.msra.mxu0 0
      %352 = vmatprep.subr.bf16.mxu0 0
      %353 = vmatpush1.bf16.xpose.msra.mxu0 0
      %354 = vmatprep.subr.bf16.mxu0 0
      %355 = vmatpush1.bf16.xpose.msra.mxu0 0
      %356 = vmatprep.subr.bf16.mxu0 0
      %357 = vmatpush1.bf16.xpose.msra.mxu0 0
      %358 = vmatprep.subr.bf16.mxu0 0
      %359 = vmatpush1.bf16.xpose.msra.mxu0 0
      %360 = vmatprep.subr.bf16.mxu0 0
      %361 = vmatpush1.bf16.xpose.msra.mxu0 0
      %362 = vmatprep.subr.bf16.mxu0 0
      %363 = vmatpush1.bf16.xpose.msra.mxu0 0
      %364 = vmatprep.subr.bf16.mxu0 0
      %365 = vmatpush1.bf16.xpose.msra.mxu0 %v348
      %366 = vmatprep.subr.bf16.mxu0 0
      %367 = vmatpush2.bf16.xpose.msra.mxu0 0
      %368 = vmatprep.subr.bf16.mxu0 0
      %369 = vmatpush2.bf16.xpose.msra.mxu0 0
      %370 = vmatprep.subr.bf16.mxu0 0
      %371 = vmatpush2.bf16.xpose.msra.mxu0 0
      %372 = vmatprep.subr.bf16.mxu0 0
      %373 = vmatpush2.bf16.xpose.msra.mxu0 0
      %374 = vmatprep.subr.bf16.mxu0 0
      %375 = vmatpush2.bf16.xpose.msra.mxu0 0
      %376 = vmatprep.subr.bf16.mxu0 0
      %377 = vmatpush2.bf16.xpose.msra.mxu0 0
      %378 = vmatprep.subr.bf16.mxu0 0
      %379 = vmatpush2.bf16.xpose.msra.mxu0 0
      %380 = vmatprep.subr.bf16.mxu0 0
      %381 = vmatpush2.bf16.xpose.msra.mxu0 0
      %382 = vmatprep.mubr.bf16.mxu0 0
      %383 = vmatmul.mubr.bf16.gmra.mxu0 %v345
      %v384 = vpop.f32.mrf.mxu0
      %v385 = vadd.f32 0.0, %v384
      %v386 = vpop.f32.mrf.mxu0
      %v387 = vpop.f32.mrf.mxu0
      %v388 = vpop.f32.mrf.mxu0
      %389 = vdwg.mxu0
      %v390 = vmul.f32 %v385, 0.35355338
      %v391 = vadd.f32 %v390, %v216
      %v392 = vsel %vm223, %v391, -inf
      %393 = vmax.xlane.f32.xlu0 %v392
      %v394 = vpop.xlane.xlu0 %393
      %v395 = vsub.f32 %v391, %v394
      %v396 = vmul.f32 %v395, 1.442695
      %v397 = vpow.pop %v396
      %v398 = vsel %vm223, %v397, 0.0
      %399 = vadd.xlane.f32.xlu0 %v398
      %v400 = vpop.xlane.xlu0 %399
      %v401 = vrcp.pop %v400
      %v402 = vmul.f32 %v397, %v401
      %v403 = vpack.c.bf16 %v402, %v402
      %404 = vrot.lane.b32.xlu0 %v339, 56
      %v405 = vpop.permute.xlu0 %404
      %v407 = vsel %vm223, %v403, 0
      %v410 = vsel %vm289, %v405, 0
      %412 = vmatprep.subr.bf16.mxu0 0
      %413 = vmatpush1.bf16.msra.mxu0 0
      %414 = vmatprep.subr.bf16.mxu0 0
      %415 = vmatpush1.bf16.msra.mxu0 0
      %416 = vmatprep.subr.bf16.mxu0 0
      %417 = vmatpush1.bf16.msra.mxu0 0
      %418 = vmatprep.subr.bf16.mxu0 0
      %419 = vmatpush1.bf16.msra.mxu0 0
      %420 = vmatprep.subr.bf16.mxu0 0
      %421 = vmatpush1.bf16.msra.mxu0 0
      %422 = vmatprep.subr.bf16.mxu0 0
      %423 = vmatpush1.bf16.msra.mxu0 0
      %424 = vmatprep.subr.bf16.mxu0 0
      %425 = vmatpush1.bf16.msra.mxu0 0
      %426 = vmatprep.subr.bf16.mxu0 0
      %427 = vmatpush1.bf16.msra.mxu0 %v410
      %428 = vmatprep.subr.bf16.mxu0 0
      %429 = vmatpush2.bf16.msra.mxu0 0
      %430 = vmatprep.subr.bf16.mxu0 0
      %431 = vmatpush2.bf16.msra.mxu0 0
      %432 = vmatprep.subr.bf16.mxu0 0
      %433 = vmatpush2.bf16.msra.mxu0 0
      %434 = vmatprep.subr.bf16.mxu0 0
      %435 = vmatpush2.bf16.msra.mxu0 0
      %436 = vmatprep.subr.bf16.mxu0 0
      %437 = vmatpush2.bf16.msra.mxu0 0
      %438 = vmatprep.subr.bf16.mxu0 0
      %439 = vmatpush2.bf16.msra.mxu0 0
      %440 = vmatprep.subr.bf16.mxu0 0
      %441 = vmatpush2.bf16.msra.mxu0 0
      %442 = vmatprep.subr.bf16.mxu0 0
      %443 = vmatpush2.bf16.msra.mxu0 0
      %444 = vmatprep.mubr.bf16.mxu0 0
      %445 = vmatmul.mubr.bf16.gmra.mxu0 %v407
      %v446 = vpop.f32.mrf.mxu0
      %v447 = vadd.f32 0.0, %v446
      %v448 = vpop.f32.mrf.mxu0
      %v449 = vpop.f32.mrf.mxu0
      %v450 = vpop.f32.mrf.mxu0
      %451 = vdwg.mxu0
      %v452 = vpack.c.bf16 %v447, %v447
      %v454 = vunpack.c.l.b16 %v452
      %v455 = vpack.c.b16 %v454, %v454
      %456 = vrot.lane.b32.xlu0 %v455, 8
      %v457 = vpop.permute.xlu0 %456
      %vm459 = vcmask 126016
      %460 = vst.msk [vmem:[#allocation2] sm:$0xf] %vm459, %v457
      %v461 = vld [vmem:[%s201] sm:$0xf]
      %v463 = vunpack.c.l.b16 %v461
      %v464 = vpack.c.b16 %v463, %v463
      %465 = vrot.lane.b32.xlu0 %v464, 112
      %v466 = vpop.permute.xlu0 %465
      %467 = vrot.lane.b32.xlu0 %v464, 80
      %v468 = vpop.permute.xlu0 %467
      %v470 = vsel %vm223, %v466, 0
      %v473 = vsel %vm223, %v468, 0
      %475 = vmatprep.subr.bf16.mxu0 0
      %476 = vmatpush1.bf16.xpose.msra.mxu0 0
      %477 = vmatprep.subr.bf16.mxu0 0
      %478 = vmatpush1.bf16.xpose.msra.mxu0 0
      %479 = vmatprep.subr.bf16.mxu0 0
      %480 = vmatpush1.bf16.xpose.msra.mxu0 0
      %481 = vmatprep.subr.bf16.mxu0 0
      %482 = vmatpush1.bf16.xpose.msra.mxu0 0
      %483 = vmatprep.subr.bf16.mxu0 0
      %484 = vmatpush1.bf16.xpose.msra.mxu0 0
      %485 = vmatprep.subr.bf16.mxu0 0
      %486 = vmatpush1.bf16.xpose.msra.mxu0 0
      %487 = vmatprep.subr.bf16.mxu0 0
      %488 = vmatpush1.bf16.xpose.msra.mxu0 0
      %489 = vmatprep.subr.bf16.mxu0 0
      %490 = vmatpush1.bf16.xpose.msra.mxu0 %v473
      %491 = vmatprep.subr.bf16.mxu0 0
      %492 = vmatpush2.bf16.xpose.msra.mxu0 0
      %493 = vmatprep.subr.bf16.mxu0 0
      %494 = vmatpush2.bf16.xpose.msra.mxu0 0
      %495 = vmatprep.subr.bf16.mxu0 0
      %496 = vmatpush2.bf16.xpose.msra.mxu0 0
      %497 = vmatprep.subr.bf16.mxu0 0
      %498 = vmatpush2.bf16.xpose.msra.mxu0 0
      %499 = vmatprep.subr.bf16.mxu0 0
      %500 = vmatpush2.bf16.xpose.msra.mxu0 0
      %501 = vmatprep.subr.bf16.mxu0 0
      %502 = vmatpush2.bf16.xpose.msra.mxu0 0
      %503 = vmatprep.subr.bf16.mxu0 0
      %504 = vmatpush2.bf16.xpose.msra.mxu0 0
      %505 = vmatprep.subr.bf16.mxu0 0
      %506 = vmatpush2.bf16.xpose.msra.mxu0 0
      %507 = vmatprep.mubr.bf16.mxu0 0
      %508 = vmatmul.mubr.bf16.gmra.mxu0 %v470
      %v509 = vpop.f32.mrf.mxu0
      %v510 = vadd.f32 0.0, %v509
      %v511 = vpop.f32.mrf.mxu0
      %v512 = vpop.f32.mrf.mxu0
      %v513 = vpop.f32.mrf.mxu0
      %514 = vdwg.mxu0
      %v515 = vmul.f32 %v510, 0.35355338
      %v516 = vadd.f32 %v515, %v216
      %v517 = vsel %vm223, %v516, -inf
      %518 = vmax.xlane.f32.xlu0 %v517
      %v519 = vpop.xlane.xlu0 %518
      %v520 = vsub.f32 %v516, %v519
      %v521 = vmul.f32 %v520, 1.442695
      %v522 = vpow.pop %v521
      %v523 = vsel %vm223, %v522, 0.0
      %524 = vadd.xlane.f32.xlu0 %v523
      %v525 = vpop.xlane.xlu0 %524
      %v526 = vrcp.pop %v525
      %v527 = vmul.f32 %v522, %v526
      %v528 = vpack.c.bf16 %v527, %v527
      %529 = vrot.lane.b32.xlu0 %v464, 48
      %v530 = vpop.permute.xlu0 %529
      %v532 = vsel %vm223, %v528, 0
      %v535 = vsel %vm289, %v530, 0
      %537 = vmatprep.subr.bf16.mxu0 0
      %538 = vmatpush1.bf16.msra.mxu0 0
      %539 = vmatprep.subr.bf16.mxu0 0
      %540 = vmatpush1.bf16.msra.mxu0 0
      %541 = vmatprep.subr.bf16.mxu0 0
      %542 = vmatpush1.bf16.msra.mxu0 0
      %543 = vmatprep.subr.bf16.mxu0 0
      %544 = vmatpush1.bf16.msra.mxu0 0
      %545 = vmatprep.subr.bf16.mxu0 0
      %546 = vmatpush1.bf16.msra.mxu0 0
      %547 = vmatprep.subr.bf16.mxu0 0
      %548 = vmatpush1.bf16.msra.mxu0 0
      %549 = vmatprep.subr.bf16.mxu0 0
      %550 = vmatpush1.bf16.msra.mxu0 0
      %551 = vmatprep.subr.bf16.mxu0 0
      %552 = vmatpush1.bf16.msra.mxu0 %v535
      %553 = vmatprep.subr.bf16.mxu0 0
      %554 = vmatpush2.bf16.msra.mxu0 0
      %555 = vmatprep.subr.bf16.mxu0 0
      %556 = vmatpush2.bf16.msra.mxu0 0
      %557 = vmatprep.subr.bf16.mxu0 0
      %558 = vmatpush2.bf16.msra.mxu0 0
      %559 = vmatprep.subr.bf16.mxu0 0
      %560 = vmatpush2.bf16.msra.mxu0 0
      %561 = vmatprep.subr.bf16.mxu0 0
      %562 = vmatpush2.bf16.msra.mxu0 0
      %563 = vmatprep.subr.bf16.mxu0 0
      %564 = vmatpush2.bf16.msra.mxu0 0
      %565 = vmatprep.subr.bf16.mxu0 0
      %566 = vmatpush2.bf16.msra.mxu0 0
      %567 = vmatprep.subr.bf16.mxu0 0
      %568 = vmatpush2.bf16.msra.mxu0 0
      %569 = vmatprep.mubr.bf16.mxu0 0
      %570 = vmatmul.mubr.bf16.gmra.mxu0 %v532
      %v571 = vpop.f32.mrf.mxu0
      %v572 = vadd.f32 0.0, %v571
      %v573 = vpop.f32.mrf.mxu0
      %v574 = vpop.f32.mrf.mxu0
      %v575 = vpop.f32.mrf.mxu0
      %576 = vdwg.mxu0
      %v577 = vpack.c.bf16 %v572, %v572
      %v579 = vunpack.c.l.b16 %v577
      %v580 = vpack.c.b16 %v579, %v579
      %581 = vrot.lane.b32.xlu0 %v580, 16
      %v582 = vpop.permute.xlu0 %581
      %vm584 = vcmask 191616
      %585 = vst.msk [vmem:[#allocation2] sm:$0xf] %vm584, %v582
      %v586 = vld [vmem:[%s201] sm:$0xf]
      %v588 = vunpack.c.l.b16 %v586
      %v589 = vpack.c.b16 %v588, %v588
      %590 = vrot.lane.b32.xlu0 %v589, 104
      %v591 = vpop.permute.xlu0 %590
      %592 = vrot.lane.b32.xlu0 %v589, 72
      %v593 = vpop.permute.xlu0 %592
      %v595 = vsel %vm223, %v591, 0
      %v598 = vsel %vm223, %v593, 0
      %600 = vmatprep.subr.bf16.mxu0 0
      %601 = vmatpush1.bf16.xpose.msra.mxu0 0
      %602 = vmatprep.subr.bf16.mxu0 0
      %603 = vmatpush1.bf16.xpose.msra.mxu0 0
      %604 = vmatprep.subr.bf16.mxu0 0
      %605 = vmatpush1.bf16.xpose.msra.mxu0 0
      %606 = vmatprep.subr.bf16.mxu0 0
      %607 = vmatpush1.bf16.xpose.msra.mxu0 0
      %608 = vmatprep.subr.bf16.mxu0 0
      %609 = vmatpush1.bf16.xpose.msra.mxu0 0
      %610 = vmatprep.subr.bf16.mxu0 0
      %611 = vmatpush1.bf16.xpose.msra.mxu0 0
      %612 = vmatprep.subr.bf16.mxu0 0
      %613 = vmatpush1.bf16.xpose.msra.mxu0 0
      %614 = vmatprep.subr.bf16.mxu0 0
      %615 = vmatpush1.bf16.xpose.msra.mxu0 %v598
      %616 = vmatprep.subr.bf16.mxu0 0
      %617 = vmatpush2.bf16.xpose.msra.mxu0 0
      %618 = vmatprep.subr.bf16.mxu0 0
      %619 = vmatpush2.bf16.xpose.msra.mxu0 0
      %620 = vmatprep.subr.bf16.mxu0 0
      %621 = vmatpush2.bf16.xpose.msra.mxu0 0
      %622 = vmatprep.subr.bf16.mxu0 0
      %623 = vmatpush2.bf16.xpose.msra.mxu0 0
      %624 = vmatprep.subr.bf16.mxu0 0
      %625 = vmatpush2.bf16.xpose.msra.mxu0 0
      %626 = vmatprep.subr.bf16.mxu0 0
      %627 = vmatpush2.bf16.xpose.msra.mxu0 0
      %628 = vmatprep.subr.bf16.mxu0 0
      %629 = vmatpush2.bf16.xpose.msra.mxu0 0
      %630 = vmatprep.subr.bf16.mxu0 0
      %631 = vmatpush2.bf16.xpose.msra.mxu0 0
      %632 = vmatprep.mubr.bf16.mxu0 0
      %633 = vmatmul.mubr.bf16.gmra.mxu0 %v595
      %v634 = vpop.f32.mrf.mxu0
      %v635 = vadd.f32 0.0, %v634
      %v636 = vpop.f32.mrf.mxu0
      %v637 = vpop.f32.mrf.mxu0
      %v638 = vpop.f32.mrf.mxu0
      %639 = vdwg.mxu0
      %v640 = vmul.f32 %v635, 0.35355338
      %v641 = vadd.f32 %v640, %v216
      %v642 = vsel %vm223, %v641, -inf
      %643 = vmax.xlane.f32.xlu0 %v642
      %v644 = vpop.xlane.xlu0 %643
      %v645 = vsub.f32 %v641, %v644
      %v646 = vmul.f32 %v645, 1.442695
      %v647 = vpow.pop %v646
      %v648 = vsel %vm223, %v647, 0.0
      %649 = vadd.xlane.f32.xlu0 %v648
      %v650 = vpop.xlane.xlu0 %649
      %v651 = vrcp.pop %v650
      %v652 = vmul.f32 %v647, %v651
      %v653 = vpack.c.bf16 %v652, %v652
      %654 = vrot.lane.b32.xlu0 %v589, 40
      %v655 = vpop.permute.xlu0 %654
      %v657 = vsel %vm223, %v653, 0
      %v660 = vsel %vm289, %v655, 0
      %662 = vmatprep.subr.bf16.mxu0 0
      %663 = vmatpush1.bf16.msra.mxu0 0
      %664 = vmatprep.subr.bf16.mxu0 0
      %665 = vmatpush1.bf16.msra.mxu0 0
      %666 = vmatprep.subr.bf16.mxu0 0
      %667 = vmatpush1.bf16.msra.mxu0 0
      %668 = vmatprep.subr.bf16.mxu0 0
      %669 = vmatpush1.bf16.msra.mxu0 0
      %670 = vmatprep.subr.bf16.mxu0 0
      %671 = vmatpush1.bf16.msra.mxu0 0
      %672 = vmatprep.subr.bf16.mxu0 0
      %673 = vmatpush1.bf16.msra.mxu0 0
      %674 = vmatprep.subr.bf16.mxu0 0
      %675 = vmatpush1.bf16.msra.mxu0 0
      %676 = vmatprep.subr.bf16.mxu0 0
      %677 = vmatpush1.bf16.msra.mxu0 %v660
      %678 = vmatprep.subr.bf16.mxu0 0
      %679 = vmatpush2.bf16.msra.mxu0 0
      %680 = vmatprep.subr.bf16.mxu0 0
      %681 = vmatpush2.bf16.msra.mxu0 0
      %682 = vmatprep.subr.bf16.mxu0 0
      %683 = vmatpush2.bf16.msra.mxu0 0
      %684 = vmatprep.subr.bf16.mxu0 0
      %685 = vmatpush2.bf16.msra.mxu0 0
      %686 = vmatprep.subr.bf16.mxu0 0
      %687 = vmatpush2.bf16.msra.mxu0 0
      %688 = vmatprep.subr.bf16.mxu0 0
      %689 = vmatpush2.bf16.msra.mxu0 0
      %690 = vmatprep.subr.bf16.mxu0 0
      %691 = vmatpush2.bf16.msra.mxu0 0
      %692 = vmatprep.subr.bf16.mxu0 0
      %693 = vmatpush2.bf16.msra.mxu0 0
      %694 = vmatprep.mubr.bf16.mxu0 0
      %695 = vmatmul.mubr.bf16.gmra.mxu0 %v657
      %v696 = vpop.f32.mrf.mxu0
      %v697 = vadd.f32 0.0, %v696
      %v698 = vpop.f32.mrf.mxu0
      %v699 = vpop.f32.mrf.mxu0
      %v700 = vpop.f32.mrf.mxu0
      %701 = vdwg.mxu0
      %v702 = vpack.c.bf16 %v697, %v697
      %v704 = vunpack.c.l.b16 %v702
      %v705 = vpack.c.b16 %v704, %v704
      %706 = vrot.lane.b32.xlu0 %v705, 24
      %v707 = vpop.permute.xlu0 %706
      %vm709 = vcmask 257216
      %710 = vst.msk [vmem:[#allocation2] sm:$0xf] %vm709, %v707
      %v711 = vld [vmem:[#allocation2] sm:$0xf]
      %v712 = vld [vmem:[%s1] sm:$0xf]
      %v713 = vld [vmem:[%s1 + $0x4] sm:$0xf]
      %v714 = vld [vmem:[%s1 + $0x8] sm:$0xf]
      %v715 = vld [vmem:[%s1 + $0xc] sm:$0xf]
      %v716 = vld [vmem:[%s2] sm:$0x1]
      %v718 = vlaneseq
      %v719 = vshrl.u32 %v718, 7
      %v720 = vsub.s32 0, %v719
      %v721 = vrot.slane %v716, %v720
      %v727 = vunpack.c.l.b16 %v712
      %v728 = vunpack.c.l.b16 %v713
      %v729 = vunpack.c.l.b16 %v714
      %v730 = vunpack.c.l.b16 %v715
      %v731 = vpack.c.b16 %v728, %v727
      %v732 = vpack.c.b16 %v730, %v729
      %vm735 = vcmask 261120
      %v737 = vsel %vm735, %v711, 0
      %739 = vmatprep.subr.bf16.mxu0 0
      %740 = vmatpush1.bf16.msra.mxu0 0
      %741 = vmatprep.subr.bf16.mxu0 0
      %742 = vmatpush1.bf16.msra.mxu0 0
      %743 = vmatprep.subr.bf16.mxu0 0
      %744 = vmatpush1.bf16.msra.mxu0 0
      %745 = vmatprep.subr.bf16.mxu0 0
      %746 = vmatpush1.bf16.msra.mxu0 0
      %747 = vmatprep.subr.bf16.mxu0 0
      %748 = vmatpush1.bf16.msra.mxu0 0
      %749 = vmatprep.subr.bf16.mxu0 0
      %750 = vmatpush1.bf16.msra.mxu0 0
      %751 = vmatprep.subr.bf16.mxu0 0
      %752 = vmatpush1.bf16.msra.mxu0 %v732
      %753 = vmatprep.subr.bf16.mxu0 0
      %754 = vmatpush1.bf16.msra.mxu0 %v731
      %755 = vmatprep.subr.bf16.mxu0 0
      %756 = vmatpush2.bf16.msra.mxu0 0
      %757 = vmatprep.subr.bf16.mxu0 0
      %758 = vmatpush2.bf16.msra.mxu0 0
      %759 = vmatprep.subr.bf16.mxu0 0
      %760 = vmatpush2.bf16.msra.mxu0 0
      %761 = vmatprep.subr.bf16.mxu0 0
      %762 = vmatpush2.bf16.msra.mxu0 0
      %763 = vmatprep.subr.bf16.mxu0 0
      %764 = vmatpush2.bf16.msra.mxu0 0
      %765 = vmatprep.subr.bf16.mxu0 0
      %766 = vmatpush2.bf16.msra.mxu0 0
      %767 = vmatprep.subr.bf16.mxu0 0
      %768 = vmatpush2.bf16.msra.mxu0 0
      %769 = vmatprep.subr.bf16.mxu0 0
      %770 = vmatpush2.bf16.msra.mxu0 0
      %771 = vmatprep.mubr.bf16.mxu0 0
      %772 = vmatmul.mubr.bf16.gmra.mxu0 %v737
      %v773 = vpop.f32.mrf.mxu0
      %v774 = vadd.f32 %v721, %v773
      %v775 = vpop.f32.mrf.mxu0
      %v776 = vpop.f32.mrf.mxu0
      %v777 = vpop.f32.mrf.mxu0
      %778 = vdwg.mxu0
      %v779 = vld [vmem:[%s205] sm:$0xff]
      %v780 = vadd.f32 %v774, %v779
      %781 = vst.msk [vmem:[%s209] sm:$0xff] %vm735, %v780
      %p782 = scmp.lt.s32.totalorder %s15, 1
      %s783 = scalar_select %p782, %s15, 1
      %s784 = smul.addr %s783, 8
      %s785 = scalar_lea.vmem %s4, %s784
      // Predicated region
      $region37: #{decoder_layer_forward.7} parent=35 // pred_check
        %p786 = pneg %p127
      $region38: #{decoder_layer_forward.7} parent=35 // pred_check_branch
        %788 = sbr.rel (%p786) target = $region40
      $region39: #{decoder_layer_forward.7} parent=35 // pred_region
        _
      $region40: #{decoder_layer_forward.7} parent=35 // pred_fallthru
        _
    $region36: #{decoder_layer_forward.7} parent=5 // pred_fallthru
      _
    %p789 = scmp.le.s32.totalorder 2, %s10
    // Predicated region
    $region41: #{decoder_layer_forward.7} parent=5 // pred_check
      %p790 = pneg %p789
    $region42: #{decoder_layer_forward.7} parent=5 // pred_check_branch
      %792 = sbr.rel (%p790) target = $region44
    $region43: #{decoder_layer_forward.7} parent=5 // pred_region
      %s793 = ssub.s32 %s10, 2
      // Predicated region
      $region45: #{decoder_layer_forward.7} parent=43 // pred_check
        %p794 = pneg %p133
      $region46: #{decoder_layer_forward.7} parent=43 // pred_check_branch
        %796 = sbr.rel (%p794) target = $region48
      $region47: #{decoder_layer_forward.7} parent=43 // pred_region
        %p797 = scmp.lt.s32.totalorder %s16, 1
        %s798 = scalar_select %p797, %s16, 1
        %s799 = smul.addr %s798, 8
        %s800 = scalar_lea.vmem %s4, %s799
      $region48: #{decoder_layer_forward.7} parent=43 // pred_fallthru
        _
    $region44: #{decoder_layer_forward.7} parent=5 // pred_fallthru
      _
  $region6: #{decoder_layer_forward.7} parent=0 // loop_footer
    %s14 = sadd.s32 1, %s10
  $region7: #{decoder_layer_forward.7} parent=0 // loop_footer_branch
    %9 = sbr.rel target = $region3
  $region8: #{decoder_layer_forward.7} parent=0 // loop_exit
    _

// kernel: decoder_layer_forward.9
$region0: #{decoder_layer_forward.9}
  #allocation0 [shape = 'u32[]', space=smem, size = 0x4, offset = 0x4, fixed_abs, tag = 'smem constant byte address 0x4 - core index']
  #allocation1 [shape = 'u32[144,128]{1,0:T(1,128)}', space=vmem, size = 0x12000, scoped, tag = 'internal scratch']
  %s0 = inlined_call_operand.vmem [shape: f32[32,32], index: 0, kind: input, shape index: {}]
  %s1 = inlined_call_operand.vmem [shape: bf16[32,64], index: 1, kind: input, shape index: {}]
  %s2 = inlined_call_operand.vmem [shape: f32[1,64], index: 2, kind: input, shape index: {}]
  %s3 = inlined_call_operand.vmem [shape: bf16[32,64], index: 3, kind: output, shape index: {}]
  %s4 = sld [smem:[#allocation0]]
  $region22: #{decoder_layer_forward.9} parent=0
    _
  %s6 = ssub.s32 1, %s4
  %s7 = scalar_select 0, %s6, %s4
  // Predicated region
  $region2: #{decoder_layer_forward.9} parent=0 // pred_check
    _
  $region3: #{decoder_layer_forward.9} parent=0 // pred_check_branch
    %9 = sbr.rel (0) target = $region5
  $region4: #{decoder_layer_forward.9} parent=0 // pred_region
    _
  $region5: #{decoder_layer_forward.9} parent=0 // pred_fallthru
    _
  // Predicated region
  $region6: #{decoder_layer_forward.9} parent=0 // pred_check
    _
  $region7: #{decoder_layer_forward.9} parent=0 // pred_check_branch
    %11 = sbr.rel (0) target = $region9
  $region8: #{decoder_layer_forward.9} parent=0 // pred_region
    _
  $region9: #{decoder_layer_forward.9} parent=0 // pred_fallthru
    _
  // Predicated region
  $region10: #{decoder_layer_forward.9} parent=0 // pred_check
    _
  $region11: #{decoder_layer_forward.9} parent=0 // pred_check_branch
    %13 = sbr.rel (0) target = $region13
  $region12: #{decoder_layer_forward.9} parent=0 // pred_region
    _
  $region13: #{decoder_layer_forward.9} parent=0 // pred_fallthru
    _
  %v15 = vld [vmem:[%s0] sm:$0xff]
  %v16 = vld [vmem:[%s0 + $0x8] sm:$0xff]
  %v17 = vld [vmem:[%s0 + $0x10] sm:$0xff]
  %v18 = vld [vmem:[%s0 + $0x18] sm:$0xff]
  %v19 = vpack.c.bf16 %v16, %v15
  %v20 = vpack.c.bf16 %v18, %v17
  %v21 = vld [vmem:[%s1] sm:$0xf]
  %v22 = vld [vmem:[%s1 + $0x4] sm:$0xf]
  %v23 = vld [vmem:[%s1 + $0x8] sm:$0xf]
  %v24 = vld [vmem:[%s1 + $0xc] sm:$0xf]
  %v25 = vld [vmem:[%s2] sm:$0x1]
  %v27 = vlaneseq
  %v28 = vshrl.u32 %v27, 7
  %v29 = vsub.s32 0, %v28
  %v30 = vrot.slane %v25, %v29
  %v36 = vunpack.c.l.b16 %v21
  %v37 = vunpack.c.l.b16 %v22
  %v38 = vunpack.c.l.b16 %v23
  %v39 = vunpack.c.l.b16 %v24
  %v40 = vpack.c.b16 %v37, %v36
  %v41 = vpack.c.b16 %v39, %v38
  %vm44 = vcmask 261120
  %v46 = vsel %vm44, %v19, 0
  %v49 = vsel %vm44, %v20, 0
  %51 = vmatprep.subr.bf16.mxu0 0
  %52 = vmatpush1.bf16.msra.mxu0 0
  %53 = vmatprep.subr.bf16.mxu0 0
  %54 = vmatpush1.bf16.msra.mxu0 0
  %55 = vmatprep.subr.bf16.mxu0 0
  %56 = vmatpush1.bf16.msra.mxu0 0
  %57 = vmatprep.subr.bf16.mxu0 0
  %58 = vmatpush1.bf16.msra.mxu0 0
  %59 = vmatprep.subr.bf16.mxu0 0
  %60 = vmatpush1.bf16.msra.mxu0 0
  %61 = vmatprep.subr.bf16.mxu0 0
  %62 = vmatpush1.bf16.msra.mxu0 0
  %63 = vmatprep.subr.bf16.mxu0 0
  %64 = vmatpush1.bf16.msra.mxu0 %v41
  %65 = vmatprep.subr.bf16.mxu0 0
  %66 = vmatpush1.bf16.msra.mxu0 %v40
  %67 = vmatprep.subr.bf16.mxu0 0
  %68 = vmatpush2.bf16.msra.mxu0 0
  %69 = vmatprep.subr.bf16.mxu0 0
  %70 = vmatpush2.bf16.msra.mxu0 0
  %71 = vmatprep.subr.bf16.mxu0 0
  %72 = vmatpush2.bf16.msra.mxu0 0
  %73 = vmatprep.subr.bf16.mxu0 0
  %74 = vmatpush2.bf16.msra.mxu0 0
  %75 = vmatprep.subr.bf16.mxu0 0
  %76 = vmatpush2.bf16.msra.mxu0 0
  %77 = vmatprep.subr.bf16.mxu0 0
  %78 = vmatpush2.bf16.msra.mxu0 0
  %79 = vmatprep.subr.bf16.mxu0 0
  %80 = vmatpush2.bf16.msra.mxu0 0
  %81 = vmatprep.subr.bf16.mxu0 0
  %82 = vmatpush2.bf16.msra.mxu0 0
  %83 = vmatprep.mubr.bf16.mxu0 0
  %84 = vmatmul.mubr.bf16.gmra.mxu0 %v46
  %v85 = vpop.f32.mrf.mxu0
  %v86 = vadd.f32 %v30, %v85
  %v87 = vpop.f32.mrf.mxu0
  %v88 = vpop.f32.mrf.mxu0
  %v89 = vadd.f32 %v30, %v88
  %v90 = vpop.f32.mrf.mxu0
  %91 = vmatprep.mubr.bf16.mxu0 0
  %92 = vmatmul.mubr.bf16.gmra.mxu0 %v49
  %v93 = vpop.f32.mrf.mxu0
  %v94 = vadd.f32 %v30, %v93
  %v95 = vpop.f32.mrf.mxu0
  %v96 = vpop.f32.mrf.mxu0
  %v97 = vadd.f32 %v30, %v96
  %v98 = vpop.f32.mrf.mxu0
  %99 = vdwg.mxu0
  %v100 = vpack.c.bf16 %v89, %v86
  %v101 = vpack.c.bf16 %v97, %v94
  %v104 = vunpack.c.l.b16 %v100
  %v105 = vunpack.c.h.b16 %v100
  %v106 = vunpack.c.l.b16 %v101
  %v107 = vunpack.c.h.b16 %v101
  %v108 = vpack.c.b16 %v104, %v104
  %v109 = vpack.c.b16 %v105, %v105
  %v110 = vpack.c.b16 %v106, %v106
  %v111 = vpack.c.b16 %v107, %v107
  %vm116 = vcmask 519168
  %117 = vst.msk [vmem:[%s3] sm:$0xf] %vm116, %v108
  %118 = vst.msk [vmem:[%s3 + $0x4] sm:$0xf] %vm116, %v109
  %119 = vst.msk [vmem:[%s3 + $0x8] sm:$0xf] %vm116, %v110
  %120 = vst.msk [vmem:[%s3 + $0xc] sm:$0xf] %vm116, %v111
  // Predicated region
  $region14: #{decoder_layer_forward.9} parent=0 // pred_check
    _
  $region15: #{decoder_layer_forward.9} parent=0 // pred_check_branch
    %122 = sbr.rel (0) target = $region17
  $region16: #{decoder_layer_forward.9} parent=0 // pred_region
    _
  $region17: #{decoder_layer_forward.9} parent=0 // pred_fallthru
    _
  // Predicated region
  $region18: #{decoder_layer_forward.9} parent=0 // pred_check
    _
  $region19: #{decoder_layer_forward.9} parent=0 // pred_check_branch
    %124 = sbr.rel (0) target = $region21
  $region20: #{decoder_layer_forward.9} parent=0 // pred_region
    _
  $region21: #{decoder_layer_forward.9} parent=0 // pred_fallthru
    _

// kernel: decoder_layer_forward.11
$region0: #{decoder_layer_forward.11}
  #allocation0 [shape = 'u32[]', space=smem, size = 0x4, offset = 0x4, fixed_abs, tag = 'smem constant byte address 0x4 - core index']
  #allocation1 [shape = 'u32[144,128]{1,0:T(1,128)}', space=vmem, size = 0x12000, scoped, tag = 'internal scratch']
  %s0 = inlined_call_operand.vmem [shape: f32[16,32], index: 0, kind: input, shape index: {}, may-alias: {0,7}]
  %s1 = inlined_call_operand.vmem [shape: f32[1,32], index: 1, kind: input, shape index: {}]
  %s2 = inlined_call_operand.vmem [shape: f32[1,32], index: 2, kind: input, shape index: {}]
  %s3 = inlined_call_operand.vmem [shape: bf16[32,64], index: 3, kind: input, shape index: {}]
  %s4 = inlined_call_operand.vmem [shape: f32[1,64], index: 4, kind: input, shape index: {}]
  %s5 = inlined_call_operand.vmem [shape: bf16[64,32], index: 5, kind: input, shape index: {}]
  %s6 = inlined_call_operand.vmem [shape: f32[1,32], index: 6, kind: input, shape index: {}]
  %s7 = inlined_call_operand.vmem [shape: f32[16,32], index: 7, kind: input, shape index: {}, may-alias: {0,7}]
  %s8 = inlined_call_operand.hbm [shape: f32[16,32], index: 8, kind: output, shape index: {}]
  %s9 = sld [smem:[#allocation0]]
  $region42: #{decoder_layer_forward.11} parent=0
    _
  %s11 = ssub.s32 1, %s9
  %s12 = scalar_select 0, %s11, %s9
  $region1: #{decoder_layer_forward.11} parent=0
    #allocation2 [shape = 'u8[8192]{0}', space=vmem, size = 0x2000, scoped, tag = 'output window, operand 0, single buffered']
    #allocation3 [shape = 's32[1]{0}', space=sflag, size = 0x4, scoped, tag = 'scoped memory for decoder_layer_forward.11']
    %13 = vsyncpa [#allocation3], 0
    // Predicated region
    $region2: #{decoder_layer_forward.11} parent=1 // pred_check
      _
    $region3: #{decoder_layer_forward.11} parent=1 // pred_check_branch
      %15 = sbr.rel (0) target = $region5
    $region4: #{decoder_layer_forward.11} parent=1 // pred_region
      _
    $region5: #{decoder_layer_forward.11} parent=1 // pred_fallthru
      _
    // Predicated region
    $region6: #{decoder_layer_forward.11} parent=1 // pred_check
      _
    $region7: #{decoder_layer_forward.11} parent=1 // pred_check_branch
      %17 = sbr.rel (0) target = $region9
    $region8: #{decoder_layer_forward.11} parent=1 // pred_region
      _
    $region9: #{decoder_layer_forward.11} parent=1 // pred_fallthru
      _
    // Predicated region
    $region10: #{decoder_layer_forward.11} parent=1 // pred_check
      _
    $region11: #{decoder_layer_forward.11} parent=1 // pred_check_branch
      %19 = sbr.rel (0) target = $region13
    $region12: #{decoder_layer_forward.11} parent=1 // pred_region
      _
    $region13: #{decoder_layer_forward.11} parent=1 // pred_fallthru
      _
    // Predicated region
    $region14: #{decoder_layer_forward.11} parent=1 // pred_check
      _
    $region15: #{decoder_layer_forward.11} parent=1 // pred_check_branch
      %21 = sbr.rel (0) target = $region17
    $region16: #{decoder_layer_forward.11} parent=1 // pred_region
      _
    $region17: #{decoder_layer_forward.11} parent=1 // pred_fallthru
      _
    // Predicated region
    $region18: #{decoder_layer_forward.11} parent=1 // pred_check
      _
    $region19: #{decoder_layer_forward.11} parent=1 // pred_check_branch
      %23 = sbr.rel (0) target = $region21
    $region20: #{decoder_layer_forward.11} parent=1 // pred_region
      _
    $region21: #{decoder_layer_forward.11} parent=1 // pred_fallthru
      _
    // Predicated region
    $region22: #{decoder_layer_forward.11} parent=1 // pred_check
      _
    $region23: #{decoder_layer_forward.11} parent=1 // pred_check_branch
      %25 = sbr.rel (0) target = $region25
    $region24: #{decoder_layer_forward.11} parent=1 // pred_region
      _
    $region25: #{decoder_layer_forward.11} parent=1 // pred_fallthru
      _
    // Predicated region
    $region26: #{decoder_layer_forward.11} parent=1 // pred_check
      _
    $region27: #{decoder_layer_forward.11} parent=1 // pred_check_branch
      %27 = sbr.rel (0) target = $region29
    $region28: #{decoder_layer_forward.11} parent=1 // pred_region
      _
    $region29: #{decoder_layer_forward.11} parent=1 // pred_fallthru
      _
    // Predicated region
    $region30: #{decoder_layer_forward.11} parent=1 // pred_check
      _
    $region31: #{decoder_layer_forward.11} parent=1 // pred_check_branch
      %29 = sbr.rel (0) target = $region33
    $region32: #{decoder_layer_forward.11} parent=1 // pred_region
      _
    $region33: #{decoder_layer_forward.11} parent=1 // pred_fallthru
      _
    %v31 = vld [vmem:[%s0] sm:$0xff]
    %v32 = vld [vmem:[%s0 + $0x8] sm:$0xff]
    %v33 = vld [vmem:[%s1] sm:$0x1]
    %v34 = vld [vmem:[%s2] sm:$0x1]
    %vm35 = vcmask 261120
    %v36 = vsel %vm35, %v31, 0.0
    %37 = vadd.xlane.f32.xlu0 %v36
    %v38 = vpop.xlane.xlu0 %37
    %v39 = vsel %vm35, %v32, 0.0
    %40 = vadd.xlane.f32.xlu0 %v39
    %v41 = vpop.xlane.xlu0 %40
    %v42 = vrcp.pop 32.0
    %v43 = vmul.f32 %v38, %v42
    %v44 = vmul.f32 %v41, %v42
    %v45 = vsub.f32 %v31, %v43
    %v46 = vsub.f32 %v32, %v44
    %v47 = vmul.f32 %v45, %v45
    %v48 = vmul.f32 %v46, %v46
    %v49 = vsel %vm35, %v47, 0.0
    %50 = vadd.xlane.f32.xlu0 %v49
    %v51 = vpop.xlane.xlu0 %50
    %v52 = vsel %vm35, %v48, 0.0
    %53 = vadd.xlane.f32.xlu0 %v52
    %v54 = vpop.xlane.xlu0 %53
    %v55 = vmul.f32 %v51, %v42
    %v56 = vmul.f32 %v54, %v42
    %v57 = vadd.f32 %v55, 1e-05
    %v58 = vadd.f32 %v56, 1e-05
    %v59 = vrsqrt.pop %v57
    %v60 = vrsqrt.pop %v58
    %v61 = vmul.f32 %v45, %v59
    %v62 = vmul.f32 %v46, %v60
    %v64 = vlaneseq
    %v65 = vshrl.u32 %v64, 7
    %v66 = vsub.s32 0, %v65
    %v67 = vrot.slane %v33, %v66
    %v69 = vmul.f32 %v61, %v67
    %v70 = vmul.f32 %v62, %v67
    %v72 = vlaneseq
    %v73 = vshrl.u32 %v72, 7
    %v74 = vsub.s32 0, %v73
    %v75 = vrot.slane %v34, %v74
    %v77 = vadd.f32 %v69, %v75
    %v78 = vadd.f32 %v70, %v75
    %v79 = vpack.c.bf16 %v78, %v77
    %v80 = vld [vmem:[%s3] sm:$0xf]
    %v81 = vld [vmem:[%s3 + $0x4] sm:$0xf]
    %v82 = vld [vmem:[%s3 + $0x8] sm:$0xf]
    %v83 = vld [vmem:[%s3 + $0xc] sm:$0xf]
    %v84 = vld [vmem:[%s4] sm:$0x1]
    %v86 = vlaneseq
    %v87 = vshrl.u32 %v86, 7
    %v88 = vsub.s32 0, %v87
    %v89 = vrot.slane %v84, %v88
    %v95 = vunpack.c.l.b16 %v80
    %v96 = vunpack.c.l.b16 %v81
    %v97 = vunpack.c.l.b16 %v82
    %v98 = vunpack.c.l.b16 %v83
    %v99 = vpack.c.b16 %v96, %v95
    %v100 = vpack.c.b16 %v98, %v97
    %v104 = vsel %vm35, %v79, 0
    %106 = vmatprep.subr.bf16.mxu0 0
    %107 = vmatpush1.bf16.msra.mxu0 0
    %108 = vmatprep.subr.bf16.mxu0 0
    %109 = vmatpush1.bf16.msra.mxu0 0
    %110 = vmatprep.subr.bf16.mxu0 0
    %111 = vmatpush1.bf16.msra.mxu0 0
    %112 = vmatprep.subr.bf16.mxu0 0
    %113 = vmatpush1.bf16.msra.mxu0 0
    %114 = vmatprep.subr.bf16.mxu0 0
    %115 = vmatpush1.bf16.msra.mxu0 0
    %116 = vmatprep.subr.bf16.mxu0 0
    %117 = vmatpush1.bf16.msra.mxu0 0
    %118 = vmatprep.subr.bf16.mxu0 0
    %119 = vmatpush1.bf16.msra.mxu0 %v100
    %120 = vmatprep.subr.bf16.mxu0 0
    %121 = vmatpush1.bf16.msra.mxu0 %v99
    %122 = vmatprep.subr.bf16.mxu0 0
    %123 = vmatpush2.bf16.msra.mxu0 0
    %124 = vmatprep.subr.bf16.mxu0 0
    %125 = vmatpush2.bf16.msra.mxu0 0
    %126 = vmatprep.subr.bf16.mxu0 0
    %127 = vmatpush2.bf16.msra.mxu0 0
    %128 = vmatprep.subr.bf16.mxu0 0
    %129 = vmatpush2.bf16.msra.mxu0 0
    %130 = vmatprep.subr.bf16.mxu0 0
    %131 = vmatpush2.bf16.msra.mxu0 0
    %132 = vmatprep.subr.bf16.mxu0 0
    %133 = vmatpush2.bf16.msra.mxu0 0
    %134 = vmatprep.subr.bf16.mxu0 0
    %135 = vmatpush2.bf16.msra.mxu0 0
    %136 = vmatprep.subr.bf16.mxu0 0
    %137 = vmatpush2.bf16.msra.mxu0 0
    %138 = vmatprep.mubr.bf16.mxu0 0
    %139 = vmatmul.mubr.bf16.gmra.mxu0 %v104
    %v140 = vpop.f32.mrf.mxu0
    %v141 = vadd.f32 %v89, %v140
    %v142 = vpop.f32.mrf.mxu0
    %v143 = vpop.f32.mrf.mxu0
    %v144 = vadd.f32 %v89, %v143
    %v145 = vpop.f32.mrf.mxu0
    %146 = vdwg.mxu0
    %v147 = vmax.f32 %v141, 0.0
    %v148 = vmax.f32 %v144, 0.0
    %v149 = vpack.c.bf16 %v148, %v147
    %v150 = vld [vmem:[%s5] sm:$0xf]
    %v151 = vld [vmem:[%s5 + $0x4] sm:$0xf]
    %v152 = vld [vmem:[%s5 + $0x8] sm:$0xf]
    %v153 = vld [vmem:[%s5 + $0xc] sm:$0xf]
    %v154 = vld [vmem:[%s5 + $0x10] sm:$0xf]
    %v155 = vld [vmem:[%s5 + $0x14] sm:$0xf]
    %v156 = vld [vmem:[%s5 + $0x18] sm:$0xf]
    %v157 = vld [vmem:[%s5 + $0x1c] sm:$0xf]
    %v158 = vld [vmem:[%s6] sm:$0x1]
    %v160 = vlaneseq
    %v161 = vshrl.u32 %v160, 7
    %v162 = vsub.s32 0, %v161
    %v163 = vrot.slane %v158, %v162
    %v173 = vunpack.c.l.b16 %v150
    %v174 = vunpack.c.l.b16 %v151
    %v175 = vunpack.c.l.b16 %v152
    %v176 = vunpack.c.l.b16 %v153
    %v177 = vunpack.c.l.b16 %v154
    %v178 = vunpack.c.l.b16 %v155
    %v179 = vunpack.c.l.b16 %v156
    %v180 = vunpack.c.l.b16 %v157
    %v181 = vpack.c.b16 %v174, %v173
    %v182 = vpack.c.b16 %v176, %v175
    %v183 = vpack.c.b16 %v178, %v177
    %v184 = vpack.c.b16 %v180, %v179
    %vm189 = vcmask 523264
    %v191 = vsel %vm189, %v149, 0
    %193 = vmatprep.subr.bf16.mxu0 0
    %194 = vmatpush1.bf16.msra.mxu0 0
    %195 = vmatprep.subr.bf16.mxu0 0
    %196 = vmatpush1.bf16.msra.mxu0 0
    %197 = vmatprep.subr.bf16.mxu0 0
    %198 = vmatpush1.bf16.msra.mxu0 0
    %199 = vmatprep.subr.bf16.mxu0 0
    %200 = vmatpush1.bf16.msra.mxu0 0
    %201 = vmatprep.subr.bf16.mxu0 0
    %202 = vmatpush1.bf16.msra.mxu0 %v184
    %203 = vmatprep.subr.bf16.mxu0 0
    %204 = vmatpush1.bf16.msra.mxu0 %v183
    %205 = vmatprep.subr.bf16.mxu0 0
    %206 = vmatpush1.bf16.msra.mxu0 %v182
    %207 = vmatprep.subr.bf16.mxu0 0
    %208 = vmatpush1.bf16.msra.mxu0 %v181
    %209 = vmatprep.subr.bf16.mxu0 0
    %210 = vmatpush2.bf16.msra.mxu0 0
    %211 = vmatprep.subr.bf16.mxu0 0
    %212 = vmatpush2.bf16.msra.mxu0 0
    %213 = vmatprep.subr.bf16.mxu0 0
    %214 = vmatpush2.bf16.msra.mxu0 0
    %215 = vmatprep.subr.bf16.mxu0 0
    %216 = vmatpush2.bf16.msra.mxu0 0
    %217 = vmatprep.subr.bf16.mxu0 0
    %218 = vmatpush2.bf16.msra.mxu0 0
    %219 = vmatprep.subr.bf16.mxu0 0
    %220 = vmatpush2.bf16.msra.mxu0 0
    %221 = vmatprep.subr.bf16.mxu0 0
    %222 = vmatpush2.bf16.msra.mxu0 0
    %223 = vmatprep.subr.bf16.mxu0 0
    %224 = vmatpush2.bf16.msra.mxu0 0
    %225 = vmatprep.mubr.bf16.mxu0 0
    %226 = vmatmul.mubr.bf16.gmra.mxu0 %v191
    %v227 = vpop.f32.mrf.mxu0
    %v228 = vadd.f32 %v163, %v227
    %v229 = vpop.f32.mrf.mxu0
    %v230 = vpop.f32.mrf.mxu0
    %v231 = vadd.f32 %v163, %v230
    %v232 = vpop.f32.mrf.mxu0
    %233 = vdwg.mxu0
    %v234 = vld [vmem:[%s7] sm:$0xff]
    %v235 = vld [vmem:[%s7 + $0x8] sm:$0xff]
    %v236 = vadd.f32 %v228, %v234
    %v237 = vadd.f32 %v231, %v235
    %v238 = vmax.f32 %v236, -3.4028235e+38
    %v239 = vmax.f32 %v237, -3.4028235e+38
    %v240 = vmin.f32 %v238, 3.4028235e+38
    %v241 = vmin.f32 %v239, 3.4028235e+38
    %242 = vst.msk [vmem:[#allocation2] sm:$0xff] %vm35, %v240
    %243 = vst.msk [vmem:[#allocation2 + $0x8] sm:$0xff] %vm35, %v241
    // Predicated region
    $region34: #{decoder_layer_forward.11} parent=1 // pred_check
      _
    $region35: #{decoder_layer_forward.11} parent=1 // pred_check_branch
      %245 = sbr.rel (0) target = $region37
    $region36: #{decoder_layer_forward.11} parent=1 // pred_region
      %s247 = ssub.s32 256, 256
      %248 = vsyncadd [#allocation3], %s247
      %s249 = sshll.u32 [#allocation2], 4
      %s250 = int_to_ptr.vmem [resolvable:$true] %s249
      %255 = dma.vmem_to_hbm [thread:$0]  %s250, 256, %s8, [#allocation3], 128, 128, 8
    $region37: #{decoder_layer_forward.11} parent=1 // pred_fallthru
      _
    // Predicated region
    $region38: #{decoder_layer_forward.11} parent=1 // pred_check
      _
    $region39: #{decoder_layer_forward.11} parent=1 // pred_check_branch
      %257 = sbr.rel (0) target = $region41
    $region40: #{decoder_layer_forward.11} parent=1 // pred_region
      %258 = dma.done [#allocation3], 256
    $region41: #{decoder_layer_forward.11} parent=1 // pred_fallthru
      _
    %259 = vsyncpa [#allocation3], 1

// kernel: decoder_layer_forward.10
$region0: #{decoder_layer_forward.10}
  #allocation0 [shape = 'u32[]', space=smem, size = 0x4, offset = 0x4, fixed_abs, tag = 'smem constant byte address 0x4 - core index']
  #allocation1 [shape = 'u32[144,128]{1,0:T(1,128)}', space=vmem, size = 0x12000, scoped, tag = 'internal scratch']
  #allocation2 [shape = 'bf16[8,32]{1,0:T(8,128)(2,1)}', space=vmem, size = 0x800, scoped, tag = 'scratch operand']
  %s0 = inlined_call_operand.vmem [shape: bf16[2,8,32], index: 0, kind: input, shape index: {}]
  %s1 = inlined_call_operand.vmem [shape: bf16[2,16,64], index: 1, kind: input, shape index: {}]
  %s2 = inlined_call_operand.vmem [shape: f32[2,1,16], index: 2, kind: input, shape index: {}]
  %s3 = inlined_call_operand.vmem [shape: bf16[32,32], index: 3, kind: input, shape index: {}]
  %s4 = inlined_call_operand.vmem [shape: f32[1,32], index: 4, kind: input, shape index: {}]
  %s5 = inlined_call_operand.vmem [shape: f32[2,8,32], index: 5, kind: input, shape index: {}]
  %s6 = inlined_call_operand.vmem [shape: f32[2,8,32], index: 6, kind: output, shape index: {0}]
  %s7 = inlined_call_operand.hbm [shape: f32[2,8,16], index: 7, kind: output, shape index: {1}]
  %8 = xla_tuple %s6, %s7
  %s9 = sld [smem:[#allocation0]]
  $region65: #{decoder_layer_forward.10} parent=0
    _
  %s11 = ssub.s32 1, %s9
  %s12 = scalar_select 0, %s11, %s9
  $region1: #{decoder_layer_forward.10} parent=0
    #allocation3 [shape = 'u8[8192]{0}', space=vmem, size = 0x2000, scoped, tag = 'output window, operand 1']
    #allocation4 [shape = 's32[2]{0}', space=sflag, size = 0x8, scoped, tag = 'scoped memory for decoder_layer_forward.10']
    %13 = vsyncpa [#allocation4], 0
    %s14 = scalar_lea.sflag [#allocation4], 1
    %15 = vsyncpa %s14, 0
    loop: start=0, step=1, limit=4
    $region2: #{decoder_layer_forward.10} parent=1 // loop_pre_header
      _
    $region3: #{decoder_layer_forward.10} parent=1 // loop_header
      %s17 = sphi 0, %s21
      %p18 = scmp.ge.s32.totalorder %s17, 4
      %s27 = sphi 0, %s29
      %s30 = sphi 0, %s27
      %s31 = sphi 0, %s30
      %s47 = sphi 0, %s31
      %s53 = sphi 0, %s55
      %s56 = sphi 0, %s53
      %s57 = sphi 0, %s56
      %s73 = sphi 0, %s57
      %s79 = sphi 0, %s81
      %s82 = sphi 0, %s79
      %s83 = sphi 0, %s82
      %s99 = sphi 0, %s83
      %s103 = sphi 0, %s103
      %s105 = sphi 0, %s103
      %s106 = sphi 0, %s105
      %s120 = sphi 0, %s106
      %s124 = sphi 0, %s124
      %s126 = sphi 0, %s124
      %s127 = sphi 0, %s126
      %s141 = sphi 0, %s127
      %s147 = sphi 0, %s149
      %s150 = sphi 0, %s147
      %s151 = sphi 0, %s150
      %s167 = sphi 0, %s151
      %s173 = sphi 0, %s175
      %s176 = sphi 0, %s173
      %s177 = sphi 0, %s176
      %s193 = sphi 0, %s177
      %s199 = sphi 0, %s201
      %s202 = sphi 0, %s199
      %s203 = sphi 0, %s202
      %s219 = sphi 0, %s203
    $region4: #{decoder_layer_forward.10} parent=1 // loop_header_branch
      %20 = sbr.rel (%p18) target = $region8
    $region5: #{decoder_layer_forward.10} parent=1 // loop_body
      %s22 = ssub.s32 %s17, 1
      %s23 = ssub.s32 %s17, 2
      %s24 = sadd.s32 %s17, 1
      %s25 = ssub.s32 %s17, %s24
      %p26 = scmp.eq.s32.totalorder %s25, 0
      %s28 = sadd.s32 %s27, 1
      %s29 = scalar_select %p26, %s27, %s28
      %p32 = pneg %p26
      %p33 = scmp.eq.s32.totalorder %s17, 1
      %p34 = por %p32, %p33
      %p35 = scmp.ne.s32.totalorder %s27, %s30
      %p36 = scmp.eq.s32.totalorder %s17, 0
      %p37 = por %p35, %p36
      %p38 = scmp.ne.s32.totalorder %s27, %s30
      %p39 = scmp.eq.s32.totalorder %s22, 1
      %p40 = por %p38, %p39
      %p41 = scmp.ne.s32.totalorder %s30, %s31
      %p42 = scmp.eq.s32.totalorder %s22, 0
      %p43 = por %p41, %p42
      %p44 = scmp.ne.s32.totalorder %s30, %s31
      %p45 = scmp.eq.s32.totalorder %s23, 1
      %p46 = por %p44, %p45
      %p48 = scmp.ne.s32.totalorder %s31, %s47
      %p49 = scmp.eq.s32.totalorder %s23, 0
      %p50 = por %p48, %p49
      %s51 = ssub.s32 %s17, %s24
      %p52 = scmp.eq.s32.totalorder %s51, 0
      %s54 = sadd.s32 %s53, 1
      %s55 = scalar_select %p52, %s53, %s54
      %p58 = pneg %p52
      %p59 = scmp.eq.s32.totalorder %s17, 1
      %p60 = por %p58, %p59
      %p61 = scmp.ne.s32.totalorder %s53, %s56
      %p62 = scmp.eq.s32.totalorder %s17, 0
      %p63 = por %p61, %p62
      %p64 = scmp.ne.s32.totalorder %s53, %s56
      %p65 = scmp.eq.s32.totalorder %s22, 1
      %p66 = por %p64, %p65
      %p67 = scmp.ne.s32.totalorder %s56, %s57
      %p68 = scmp.eq.s32.totalorder %s22, 0
      %p69 = por %p67, %p68
      %p70 = scmp.ne.s32.totalorder %s56, %s57
      %p71 = scmp.eq.s32.totalorder %s23, 1
      %p72 = por %p70, %p71
      %p74 = scmp.ne.s32.totalorder %s57, %s73
      %p75 = scmp.eq.s32.totalorder %s23, 0
      %p76 = por %p74, %p75
      %s77 = ssub.s32 %s17, %s24
      %p78 = scmp.eq.s32.totalorder %s77, 0
      %s80 = sadd.s32 %s79, 1
      %s81 = scalar_select %p78, %s79, %s80
      %p84 = pneg %p78
      %p85 = scmp.eq.s32.totalorder %s17, 1
      %p86 = por %p84, %p85
      %p87 = scmp.ne.s32.totalorder %s79, %s82
      %p88 = scmp.eq.s32.totalorder %s17, 0
      %p89 = por %p87, %p88
      %p90 = scmp.ne.s32.totalorder %s79, %s82
      %p91 = scmp.eq.s32.totalorder %s22, 1
      %p92 = por %p90, %p91
      %p93 = scmp.ne.s32.totalorder %s82, %s83
      %p94 = scmp.eq.s32.totalorder %s22, 0
      %p95 = por %p93, %p94
      %p96 = scmp.ne.s32.totalorder %s82, %s83
      %p97 = scmp.eq.s32.totalorder %s23, 1
      %p98 = por %p96, %p97
      %p100 = scmp.ne.s32.totalorder %s83, %s99
      %p101 = scmp.eq.s32.totalorder %s23, 0
      %p102 = por %p100, %p101
      %s104 = sadd.s32 %s103, 1
      %p107 = scmp.eq.s32.totalorder %s17, 1
      %p108 = scmp.ne.s32.totalorder %s103, %s105
      %p109 = scmp.eq.s32.totalorder %s17, 0
      %p110 = por %p108, %p109
      %p111 = scmp.ne.s32.totalorder %s103, %s105
      %p112 = scmp.eq.s32.totalorder %s22, 1
      %p113 = por %p111, %p112
      %p114 = scmp.ne.s32.totalorder %s105, %s106
      %p115 = scmp.eq.s32.totalorder %s22, 0
      %p116 = por %p114, %p115
      %p117 = scmp.ne.s32.totalorder %s105, %s106
      %p118 = scmp.eq.s32.totalorder %s23, 1
      %p119 = por %p117, %p118
      %p121 = scmp.ne.s32.totalorder %s106, %s120
      %p122 = scmp.eq.s32.totalorder %s23, 0
      %p123 = por %p121, %p122
      %s125 = sadd.s32 %s124, 1
      %p128 = scmp.eq.s32.totalorder %s17, 1
      %p129 = scmp.ne.s32.totalorder %s124, %s126
      %p130 = scmp.eq.s32.totalorder %s17, 0
      %p131 = por %p129, %p130
      %p132 = scmp.ne.s32.totalorder %s124, %s126
      %p133 = scmp.eq.s32.totalorder %s22, 1
      %p134 = por %p132, %p133
      %p135 = scmp.ne.s32.totalorder %s126, %s127
      %p136 = scmp.eq.s32.totalorder %s22, 0
      %p137 = por %p135, %p136
      %p138 = scmp.ne.s32.totalorder %s126, %s127
      %p139 = scmp.eq.s32.totalorder %s23, 1
      %p140 = por %p138, %p139
      %p142 = scmp.ne.s32.totalorder %s127, %s141
      %p143 = scmp.eq.s32.totalorder %s23, 0
      %p144 = por %p142, %p143
      %s145 = ssub.s32 %s17, %s24
      %p146 = scmp.eq.s32.totalorder %s145, 0
      %s148 = sadd.s32 %s147, 1
      %s149 = scalar_select %p146, %s147, %s148
      %p152 = pneg %p146
      %p153 = scmp.eq.s32.totalorder %s17, 1
      %p154 = por %p152, %p153
      %p155 = scmp.ne.s32.totalorder %s147, %s150
      %p156 = scmp.eq.s32.totalorder %s17, 0
      %p157 = por %p155, %p156
      %p158 = scmp.ne.s32.totalorder %s147, %s150
      %p159 = scmp.eq.s32.totalorder %s22, 1
      %p160 = por %p158, %p159
      %p161 = scmp.ne.s32.totalorder %s150, %s151
      %p162 = scmp.eq.s32.totalorder %s22, 0
      %p163 = por %p161, %p162
      %p164 = scmp.ne.s32.totalorder %s150, %s151
      %p165 = scmp.eq.s32.totalorder %s23, 1
      %p166 = por %p164, %p165
      %p168 = scmp.ne.s32.totalorder %s151, %s167
      %p169 = scmp.eq.s32.totalorder %s23, 0
      %p170 = por %p168, %p169
      %s171 = ssub.s32 %s17, %s24
      %p172 = scmp.eq.s32.totalorder %s171, 0
      %s174 = sadd.s32 %s173, 1
      %s175 = scalar_select %p172, %s173, %s174
      %p178 = pneg %p172
      %p179 = scmp.eq.s32.totalorder %s17, 1
      %p180 = por %p178, %p179
      %p181 = scmp.ne.s32.totalorder %s173, %s176
      %p182 = scmp.eq.s32.totalorder %s17, 0
      %p183 = por %p181, %p182
      %p184 = scmp.ne.s32.totalorder %s173, %s176
      %p185 = scmp.eq.s32.totalorder %s22, 1
      %p186 = por %p184, %p185
      %p187 = scmp.ne.s32.totalorder %s176, %s177
      %p188 = scmp.eq.s32.totalorder %s22, 0
      %p189 = por %p187, %p188
      %p190 = scmp.ne.s32.totalorder %s176, %s177
      %p191 = scmp.eq.s32.totalorder %s23, 1
      %p192 = por %p190, %p191
      %p194 = scmp.ne.s32.totalorder %s177, %s193
      %p195 = scmp.eq.s32.totalorder %s23, 0
      %p196 = por %p194, %p195
      %s197 = ssub.s32 %s17, %s24
      %p198 = scmp.eq.s32.totalorder %s197, 0
      %s200 = sadd.s32 %s199, 1
      %s201 = scalar_select %p198, %s199, %s200
      %p204 = pneg %p198
      %p205 = scmp.eq.s32.totalorder %s17, 1
      %p206 = por %p204, %p205
      %p207 = scmp.ne.s32.totalorder %s199, %s202
      %p208 = scmp.eq.s32.totalorder %s17, 0
      %p209 = por %p207, %p208
      %p210 = scmp.ne.s32.totalorder %s199, %s202
      %p211 = scmp.eq.s32.totalorder %s22, 1
      %p212 = por %p210, %p211
      %p213 = scmp.ne.s32.totalorder %s202, %s203
      %p214 = scmp.eq.s32.totalorder %s22, 0
      %p215 = por %p213, %p214
      %p216 = scmp.ne.s32.totalorder %s202, %s203
      %p217 = scmp.eq.s32.totalorder %s23, 1
      %p218 = por %p216, %p217
      %p220 = scmp.ne.s32.totalorder %s203, %s219
      %p221 = scmp.eq.s32.totalorder %s23, 0
      %p222 = por %p220, %p221
      %p223 = scmp.le.s32.totalorder 1, %s17
      %p224 = scmp.lt.s32.totalorder %s17, 3
      %p225 = pnand %p223, %p224
      %p226 = pneg %p225
      // Predicated region
      $region9: #{decoder_layer_forward.10} parent=5 // pred_check
        _
      $region10: #{decoder_layer_forward.10} parent=5 // pred_check_branch
        %228 = sbr.rel (%p225) target = $region12
      $region11: #{decoder_layer_forward.10} parent=5 // pred_region
        %s229 = ssub.s32 %s17, 1
        // Predicated region
        $region13: #{decoder_layer_forward.10} parent=11 // pred_check
          %p230 = pneg %p116
        $region14: #{decoder_layer_forward.10} parent=11 // pred_check_branch
          %232 = sbr.rel (%p230) target = $region16
        $region15: #{decoder_layer_forward.10} parent=11 // pred_region
          _
        $region16: #{decoder_layer_forward.10} parent=11 // pred_fallthru
          _
        // Predicated region
        $region17: #{decoder_layer_forward.10} parent=11 // pred_check
          %p233 = pneg %p137
        $region18: #{decoder_layer_forward.10} parent=11 // pred_check_branch
          %235 = sbr.rel (%p233) target = $region20
        $region19: #{decoder_layer_forward.10} parent=11 // pred_region
          _
        $region20: #{decoder_layer_forward.10} parent=11 // pred_fallthru
          _
      $region12: #{decoder_layer_forward.10} parent=5 // pred_fallthru
        _
      %p236 = scmp.lt.s32.totalorder %s17, 2
      // Predicated region
      $region21: #{decoder_layer_forward.10} parent=5 // pred_check
        %p237 = pneg %p236
      $region22: #{decoder_layer_forward.10} parent=5 // pred_check_branch
        %239 = sbr.rel (%p237) target = $region24
      $region23: #{decoder_layer_forward.10} parent=5 // pred_region
        // Predicated region
        $region25: #{decoder_layer_forward.10} parent=23 // pred_check
          %p240 = pneg %p37
        $region26: #{decoder_layer_forward.10} parent=23 // pred_check_branch
          %242 = sbr.rel (%p240) target = $region28
        $region27: #{decoder_layer_forward.10} parent=23 // pred_region
          %p243 = scmp.lt.s32.totalorder %s17, 1
          %s244 = scalar_select %p243, %s17, 1
          %s245 = smul.addr %s244, 4
          %s246 = scalar_lea.vmem %s0, %s245
        $region28: #{decoder_layer_forward.10} parent=23 // pred_fallthru
          _
        // Predicated region
        $region29: #{decoder_layer_forward.10} parent=23 // pred_check
          %p247 = pneg %p63
        $region30: #{decoder_layer_forward.10} parent=23 // pred_check_branch
          %249 = sbr.rel (%p247) target = $region32
        $region31: #{decoder_layer_forward.10} parent=23 // pred_region
          %p250 = scmp.lt.s32.totalorder %s17, 1
          %s251 = scalar_select %p250, %s17, 1
          %s252 = smul.addr %s251, 2
          %s253 = smul.addr %s252, 4
          %s254 = scalar_lea.vmem %s1, %s253
        $region32: #{decoder_layer_forward.10} parent=23 // pred_fallthru
          _
        // Predicated region
        $region33: #{decoder_layer_forward.10} parent=23 // pred_check
          %p255 = pneg %p89
        $region34: #{decoder_layer_forward.10} parent=23 // pred_check_branch
          %257 = sbr.rel (%p255) target = $region36
        $region35: #{decoder_layer_forward.10} parent=23 // pred_region
          %p258 = scmp.lt.s32.totalorder %s17, 1
          %s259 = scalar_select %p258, %s17, 1
          %s260 = scalar_lea.vmem %s2, %s259
        $region36: #{decoder_layer_forward.10} parent=23 // pred_fallthru
          _
        // Predicated region
        $region37: #{decoder_layer_forward.10} parent=23 // pred_check
          %p261 = pneg %p157
        $region38: #{decoder_layer_forward.10} parent=23 // pred_check_branch
          %263 = sbr.rel (%p261) target = $region40
        $region39: #{decoder_layer_forward.10} parent=23 // pred_region
          %p264 = scmp.lt.s32.totalorder %s17, 1
          %s265 = scalar_select %p264, %s17, 1
          %s266 = smul.addr %s265, 8
          %s267 = scalar_lea.vmem %s5, %s266
        $region40: #{decoder_layer_forward.10} parent=23 // pred_fallthru
          _
      $region24: #{decoder_layer_forward.10} parent=5 // pred_fallthru
        _
      %p268 = scmp.le.s32.totalorder 1, %s17
      %p269 = scmp.lt.s32.totalorder %s17, 3
      %p270 = pnand %p268, %p269
      %p271 = pneg %p270
      // Predicated region
      $region41: #{decoder_layer_forward.10} parent=5 // pred_check
        _
      $region42: #{decoder_layer_forward.10} parent=5 // pred_check_branch
        %273 = sbr.rel (%p270) target = $region44
      $region43: #{decoder_layer_forward.10} parent=5 // pred_region
        %s274 = ssub.s32 %s17, 1
        %p275 = scmp.lt.s32.totalorder %s22, 1
        %s276 = scalar_select %p275, %s22, 1
        %s277 = smul.addr %s276, 4
        %s278 = scalar_lea.vmem %s0, %s277
        %p279 = pneg %p43
        %p280 = pneg %p40
        %p281 = scmp.lt.s32.totalorder %s22, 1
        %s282 = scalar_select %p281, %s22, 1
        %s283 = smul.addr %s282, 2
        %s284 = smul.addr %s283, 4
        %s285 = scalar_lea.vmem %s1, %s284
        %p286 = pneg %p69
        %p287 = pneg %p66
        %p288 = scmp.lt.s32.totalorder %s22, 1
        %s289 = scalar_select %p288, %s22, 1
        %s290 = scalar_lea.vmem %s2, %s289
        %p291 = pneg %p95
        %p292 = pneg %p92
        %p293 = pneg %p116
        %p294 = pneg %p113
        %p295 = pneg %p137
        %p296 = pneg %p134
        %p297 = scmp.lt.s32.totalorder %s22, 1
        %s298 = scalar_select %p297, %s22, 1
        %s299 = smul.addr %s298, 8
        %s300 = scalar_lea.vmem %s5, %s299
        %p301 = pneg %p163
        %p302 = pneg %p160
        %p303 = pneg %p189
        %p304 = pneg %p186
        %p305 = scmp.lt.s32.totalorder %s22, 1
        %s306 = scalar_select %p305, %s22, 1
        %s307 = smul.addr %s306, 8
        %s308 = scalar_lea.vmem %s6, %s307
        %p309 = pneg %p215
        %p310 = pneg %p212
        %s311 = sand.u32 %s202, 1
        %s312 = scalar_lea.sflag [#allocation4], %s311
        %s313 = sand.u32 %s202, 1
        %s314 = smul.addr %s313, 8
        %s315 = scalar_lea.vmem [#allocation3], %s314
        %p316 = scmp.lt.s32.totalorder %s22, 1
        %s317 = scalar_select %p316, %s22, 1
        %s318 = smul.addr %s317, 4
        %s319 = scalar_lea.vmem %s0, %s318
        %p320 = scmp.lt.s32.totalorder %s22, 1
        %s321 = scalar_select %p320, %s22, 1
        %s322 = smul.addr %s321, 2
        %s323 = smul.addr %s322, 4
        %s324 = scalar_lea.vmem %s1, %s323
        %p325 = scmp.lt.s32.totalorder %s22, 1
        %s326 = scalar_select %p325, %s22, 1
        %s327 = scalar_lea.vmem %s2, %s326
        %p328 = scmp.lt.s32.totalorder %s22, 1
        %s329 = scalar_select %p328, %s22, 1
        %s330 = smul.addr %s329, 8
        %s331 = scalar_lea.vmem %s5, %s330
        %p332 = scmp.lt.s32.totalorder %s22, 1
        %s333 = scalar_select %p332, %s22, 1
        %s334 = smul.addr %s333, 8
        %s335 = scalar_lea.vmem %s6, %s334
        %v337 = vld [vmem:[%s327] sm:$0x1]
        %v338 = vld [vmem:[%s319] sm:$0xf]
        %v339 = vld [vmem:[%s324] sm:$0xf]
        %v340 = vld [vmem:[%s324 + $0x4] sm:$0xf]
        %v343 = vunpack.c.l.b16 %v339
        %v344 = vunpack.c.l.b16 %v340
        %v345 = vpack.c.b16 %v344, %v343
        %vm346 = vcmask 64512
        %v348 = vsel %vm346, %v338, 0
        %v351 = vsel %vm346, %v345, 0
        %353 = vmatprep.subr.bf16.mxu0 0
        %354 = vmatpush1.bf16.xpose.msra.mxu0 0
        %355 = vmatprep.subr.bf16.mxu0 0
        %356 = vmatpush1.bf16.xpose.msra.mxu0 0
        %357 = vmatprep.subr.bf16.mxu0 0
        %358 = vmatpush1.bf16.xpose.msra.mxu0 0
        %359 = vmatprep.subr.bf16.mxu0 0
        %360 = vmatpush1.bf16.xpose.msra.mxu0 0
        %361 = vmatprep.subr.bf16.mxu0 0
        %362 = vmatpush1.bf16.xpose.msra.mxu0 0
        %363 = vmatprep.subr.bf16.mxu0 0
        %364 = vmatpush1.bf16.xpose.msra.mxu0 0
        %365 = vmatprep.subr.bf16.mxu0 0
        %366 = vmatpush1.bf16.xpose.msra.mxu0 0
        %367 = vmatprep.subr.bf16.mxu0 0
        %368 = vmatpush1.bf16.xpose.msra.mxu0 %v351
        %369 = vmatprep.subr.bf16.mxu0 0
        %370 = vmatpush2.bf16.xpose.msra.mxu0 0
        %371 = vmatprep.subr.bf16.mxu0 0
        %372 = vmatpush2.bf16.xpose.msra.mxu0 0
        %373 = vmatprep.subr.bf16.mxu0 0
        %374 = vmatpush2.bf16.xpose.msra.mxu0 0
        %375 = vmatprep.subr.bf16.mxu0 0
        %376 = vmatpush2.bf16.xpose.msra.mxu0 0
        %377 = vmatprep.subr.bf16.mxu0 0
        %378 = vmatpush2.bf16.xpose.msra.mxu0 0
        %379 = vmatprep.subr.bf16.mxu0 0
        %380 = vmatpush2.bf16.xpose.msra.mxu0 0
        %381 = vmatprep.subr.bf16.mxu0 0
        %382 = vmatpush2.bf16.xpose.msra.mxu0 0
        %383 = vmatprep.subr.bf16.mxu0 0
        %384 = vmatpush2.bf16.xpose.msra.mxu0 0
        %385 = vmatprep.mubr.bf16.mxu0 0
        %386 = vmatmul.mubr.bf16.gmra.mxu0 %v348
        %v387 = vpop.f32.mrf.mxu0
        %v388 = vadd.f32 0.0, %v387
        %v389 = vpop.f32.mrf.mxu0
        %v390 = vpop.f32.mrf.mxu0
        %v391 = vpop.f32.mrf.mxu0
        %392 = vdwg.mxu0
        %v393 = vmul.f32 %v388, 0.35355338
        %v395 = vlaneseq
        %v396 = vshrl.u32 %v395, 7
        %v397 = vsub.s32 0, %v396
        %v398 = vrot.slane %v337, %v397
        %v400 = vadd.f32 %v393, %v398
        %vm401 = vcmask 130048
        %v402 = vsel %vm401, %v400, -inf
        %403 = vmax.xlane.f32.xlu0 %v402
        %v404 = vpop.xlane.xlu0 %403
        %v405 = vsub.f32 %v400, %v404
        %v406 = vmul.f32 %v405, 1.442695
        %v407 = vpow.pop %v406
        %v408 = vsel %vm401, %v407, 0.0
        %409 = vadd.xlane.f32.xlu0 %v408
        %v410 = vpop.xlane.xlu0 %409
        %v411 = vrcp.pop %v410
        %v412 = vmul.f32 %v407, %v411
        %v413 = vpack.c.bf16 %v412, %v412
        %414 = vrot.lane.b32.xlu0 %v345, 96
        %v415 = vpop.permute.xlu0 %414
        %v418 = vsel %vm401, %v413, 0
        %420 = vmatprep.subr.bf16.mxu0 0
        %421 = vmatpush1.bf16.msra.mxu0 0
        %422 = vmatprep.subr.bf16.mxu0 0
        %423 = vmatpush1.bf16.msra.mxu0 0
        %424 = vmatprep.subr.bf16.mxu0 0
        %425 = vmatpush1.bf16.msra.mxu0 0
        %426 = vmatprep.subr.bf16.mxu0 0
        %427 = vmatpush1.bf16.msra.mxu0 0
        %428 = vmatprep.subr.bf16.mxu0 0
        %429 = vmatpush1.bf16.msra.mxu0 0
        %430 = vmatprep.subr.bf16.mxu0 0
        %431 = vmatpush1.bf16.msra.mxu0 0
        %432 = vmatprep.subr.bf16.mxu0 0
        %433 = vmatpush1.bf16.msra.mxu0 0
        %434 = vmatprep.subr.bf16.mxu0 0
        %435 = vmatpush1.bf16.msra.mxu0 %v415
        %436 = vmatprep.subr.bf16.mxu0 0
        %437 = vmatpush2.bf16.msra.mxu0 0
        %438 = vmatprep.subr.bf16.mxu0 0
        %439 = vmatpush2.bf16.msra.mxu0 0
        %440 = vmatprep.subr.bf16.mxu0 0
        %441 = vmatpush2.bf16.msra.mxu0 0
        %442 = vmatprep.subr.bf16.mxu0 0
        %443 = vmatpush2.bf16.msra.mxu0 0
        %444 = vmatprep.subr.bf16.mxu0 0
        %445 = vmatpush2.bf16.msra.mxu0 0
        %446 = vmatprep.subr.bf16.mxu0 0
        %447 = vmatpush2.bf16.msra.mxu0 0
        %448 = vmatprep.subr.bf16.mxu0 0
        %449 = vmatpush2.bf16.msra.mxu0 0
        %450 = vmatprep.subr.bf16.mxu0 0
        %451 = vmatpush2.bf16.msra.mxu0 0
        %452 = vmatprep.mubr.bf16.mxu0 0
        %453 = vmatmul.mubr.bf16.gmra.mxu0 %v418
        %v454 = vpop.f32.mrf.mxu0
        %v455 = vadd.f32 0.0, %v454
        %v456 = vpop.f32.mrf.mxu0
        %v457 = vpop.f32.mrf.mxu0
        %v458 = vpop.f32.mrf.mxu0
        %459 = vdwg.mxu0
        %v460 = vpack.c.bf16 %v455, %v455
        %vm461 = vcmask 60416
        %462 = vst.msk [vmem:[#allocation2] sm:$0xf] %vm461, %v460
        %v463 = vld [vmem:[%s319] sm:$0xf]
        %v464 = vld [vmem:[%s324] sm:$0xf]
        %v465 = vld [vmem:[%s324 + $0x4] sm:$0xf]
        %v467 = vunpack.c.l.b16 %v463
        %v468 = vpack.c.b16 %v467, %v467
        %469 = vrot.lane.b32.xlu0 %v468, 120
        %v470 = vpop.permute.xlu0 %469
        %v473 = vunpack.c.l.b16 %v464
        %v474 = vunpack.c.l.b16 %v465
        %v475 = vpack.c.b16 %v474, %v473
        %476 = vrot.lane.b32.xlu0 %v475, 120
        %v477 = vpop.permute.xlu0 %476
        %v479 = vsel %vm346, %v470, 0
        %v482 = vsel %vm346, %v477, 0
        %484 = vmatprep.subr.bf16.mxu0 0
        %485 = vmatpush1.bf16.xpose.msra.mxu0 0
        %486 = vmatprep.subr.bf16.mxu0 0
        %487 = vmatpush1.bf16.xpose.msra.mxu0 0
        %488 = vmatprep.subr.bf16.mxu0 0
        %489 = vmatpush1.bf16.xpose.msra.mxu0 0
        %490 = vmatprep.subr.bf16.mxu0 0
        %491 = vmatpush1.bf16.xpose.msra.mxu0 0
        %492 = vmatprep.subr.bf16.mxu0 0
        %493 = vmatpush1.bf16.xpose.msra.mxu0 0
        %494 = vmatprep.subr.bf16.mxu0 0
        %495 = vmatpush1.bf16.xpose.msra.mxu0 0
        %496 = vmatprep.subr.bf16.mxu0 0
        %497 = vmatpush1.bf16.xpose.msra.mxu0 0
        %498 = vmatprep.subr.bf16.mxu0 0
        %499 = vmatpush1.bf16.xpose.msra.mxu0 %v482
        %500 = vmatprep.subr.bf16.mxu0 0
        %501 = vmatpush2.bf16.xpose.msra.mxu0 0
        %502 = vmatprep.subr.bf16.mxu0 0
        %503 = vmatpush2.bf16.xpose.msra.mxu0 0
        %504 = vmatprep.subr.bf16.mxu0 0
        %505 = vmatpush2.bf16.xpose.msra.mxu0 0
        %506 = vmatprep.subr.bf16.mxu0 0
        %507 = vmatpush2.bf16.xpose.msra.mxu0 0
        %508 = vmatprep.subr.bf16.mxu0 0
        %509 = vmatpush2.bf16.xpose.msra.mxu0 0
        %510 = vmatprep.subr.bf16.mxu0 0
        %511 = vmatpush2.bf16.xpose.msra.mxu0 0
        %512 = vmatprep.subr.bf16.mxu0 0
        %513 = vmatpush2.bf16.xpose.msra.mxu0 0
        %514 = vmatprep.subr.bf16.mxu0 0
        %515 = vmatpush2.bf16.xpose.msra.mxu0 0
        %516 = vmatprep.mubr.bf16.mxu0 0
        %517 = vmatmul.mubr.bf16.gmra.mxu0 %v479
        %v518 = vpop.f32.mrf.mxu0
        %v519 = vadd.f32 0.0, %v518
        %v520 = vpop.f32.mrf.mxu0
        %v521 = vpop.f32.mrf.mxu0
        %v522 = vpop.f32.mrf.mxu0
        %523 = vdwg.mxu0
        %v524 = vmul.f32 %v519, 0.35355338
        %v525 = vadd.f32 %v524, %v398
        %v526 = vsel %vm401, %v525, -inf
        %527 = vmax.xlane.f32.xlu0 %v526
        %v528 = vpop.xlane.xlu0 %527
        %v529 = vsub.f32 %v525, %v528
        %v530 = vmul.f32 %v529, 1.442695
        %v531 = vpow.pop %v530
        %v532 = vsel %vm401, %v531, 0.0
        %533 = vadd.xlane.f32.xlu0 %v532
        %v534 = vpop.xlane.xlu0 %533
        %v535 = vrcp.pop %v534
        %v536 = vmul.f32 %v531, %v535
        %v537 = vpack.c.bf16 %v536, %v536
        %538 = vrot.lane.b32.xlu0 %v475, 88
        %v539 = vpop.permute.xlu0 %538
        %v542 = vsel %vm401, %v537, 0
        %544 = vmatprep.subr.bf16.mxu0 0
        %545 = vmatpush1.bf16.msra.mxu0 0
        %546 = vmatprep.subr.bf16.mxu0 0
        %547 = vmatpush1.bf16.msra.mxu0 0
        %548 = vmatprep.subr.bf16.mxu0 0
        %549 = vmatpush1.bf16.msra.mxu0 0
        %550 = vmatprep.subr.bf16.mxu0 0
        %551 = vmatpush1.bf16.msra.mxu0 0
        %552 = vmatprep.subr.bf16.mxu0 0
        %553 = vmatpush1.bf16.msra.mxu0 0
        %554 = vmatprep.subr.bf16.mxu0 0
        %555 = vmatpush1.bf16.msra.mxu0 0
        %556 = vmatprep.subr.bf16.mxu0 0
        %557 = vmatpush1.bf16.msra.mxu0 0
        %558 = vmatprep.subr.bf16.mxu0 0
        %559 = vmatpush1.bf16.msra.mxu0 %v539
        %560 = vmatprep.subr.bf16.mxu0 0
        %561 = vmatpush2.bf16.msra.mxu0 0
        %562 = vmatprep.subr.bf16.mxu0 0
        %563 = vmatpush2.bf16.msra.mxu0 0
        %564 = vmatprep.subr.bf16.mxu0 0
        %565 = vmatpush2.bf16.msra.mxu0 0
        %566 = vmatprep.subr.bf16.mxu0 0
        %567 = vmatpush2.bf16.msra.mxu0 0
        %568 = vmatprep.subr.bf16.mxu0 0
        %569 = vmatpush2.bf16.msra.mxu0 0
        %570 = vmatprep.subr.bf16.mxu0 0
        %571 = vmatpush2.bf16.msra.mxu0 0
        %572 = vmatprep.subr.bf16.mxu0 0
        %573 = vmatpush2.bf16.msra.mxu0 0
        %574 = vmatprep.subr.bf16.mxu0 0
        %575 = vmatpush2.bf16.msra.mxu0 0
        %576 = vmatprep.mubr.bf16.mxu0 0
        %577 = vmatmul.mubr.bf16.gmra.mxu0 %v542
        %v578 = vpop.f32.mrf.mxu0
        %v579 = vadd.f32 0.0, %v578
        %v580 = vpop.f32.mrf.mxu0
        %v581 = vpop.f32.mrf.mxu0
        %v582 = vpop.f32.mrf.mxu0
        %583 = vdwg.mxu0
        %v584 = vpack.c.bf16 %v579, %v579
        %v586 = vunpack.c.l.b16 %v584
        %v587 = vpack.c.b16 %v586, %v586
        %588 = vrot.lane.b32.xlu0 %v587, 8
        %v589 = vpop.permute.xlu0 %588
        %vm591 = vcmask 126016
        %592 = vst.msk [vmem:[#allocation2] sm:$0xf] %vm591, %v589
        %v593 = vadd.f32 %v412, %v536
        %v594 = vld [vmem:[%s319] sm:$0xf]
        %v595 = vld [vmem:[%s324] sm:$0xf]
        %v596 = vld [vmem:[%s324 + $0x4] sm:$0xf]
        %v598 = vunpack.c.l.b16 %v594
        %v599 = vpack.c.b16 %v598, %v598
        %600 = vrot.lane.b32.xlu0 %v599, 112
        %v601 = vpop.permute.xlu0 %600
        %v604 = vunpack.c.l.b16 %v595
        %v605 = vunpack.c.l.b16 %v596
        %v606 = vpack.c.b16 %v605, %v604
        %607 = vrot.lane.b32.xlu0 %v606, 112
        %v608 = vpop.permute.xlu0 %607
        %v610 = vsel %vm346, %v601, 0
        %v613 = vsel %vm346, %v608, 0
        %615 = vmatprep.subr.bf16.mxu0 0
        %616 = vmatpush1.bf16.xpose.msra.mxu0 0
        %617 = vmatprep.subr.bf16.mxu0 0
        %618 = vmatpush1.bf16.xpose.msra.mxu0 0
        %619 = vmatprep.subr.bf16.mxu0 0
        %620 = vmatpush1.bf16.xpose.msra.mxu0 0
        %621 = vmatprep.subr.bf16.mxu0 0
        %622 = vmatpush1.bf16.xpose.msra.mxu0 0
        %623 = vmatprep.subr.bf16.mxu0 0
        %624 = vmatpush1.bf16.xpose.msra.mxu0 0
        %625 = vmatprep.subr.bf16.mxu0 0
        %626 = vmatpush1.bf16.xpose.msra.mxu0 0
        %627 = vmatprep.subr.bf16.mxu0 0
        %628 = vmatpush1.bf16.xpose.msra.mxu0 0
        %629 = vmatprep.subr.bf16.mxu0 0
        %630 = vmatpush1.bf16.xpose.msra.mxu0 %v613
        %631 = vmatprep.subr.bf16.mxu0 0
        %632 = vmatpush2.bf16.xpose.msra.mxu0 0
        %633 = vmatprep.subr.bf16.mxu0 0
        %634 = vmatpush2.bf16.xpose.msra.mxu0 0
        %635 = vmatprep.subr.bf16.mxu0 0
        %636 = vmatpush2.bf16.xpose.msra.mxu0 0
        %637 = vmatprep.subr.bf16.mxu0 0
        %638 = vmatpush2.bf16.xpose.msra.mxu0 0
        %639 = vmatprep.subr.bf16.mxu0 0
        %640 = vmatpush2.bf16.xpose.msra.mxu0 0
        %641 = vmatprep.subr.bf16.mxu0 0
        %642 = vmatpush2.bf16.xpose.msra.mxu0 0
        %643 = vmatprep.subr.bf16.mxu0 0
        %644 = vmatpush2.bf16.xpose.msra.mxu0 0
        %645 = vmatprep.subr.bf16.mxu0 0
        %646 = vmatpush2.bf16.xpose.msra.mxu0 0
        %647 = vmatprep.mubr.bf16.mxu0 0
        %648 = vmatmul.mubr.bf16.gmra.mxu0 %v610
        %v649 = vpop.f32.mrf.mxu0
        %v650 = vadd.f32 0.0, %v649
        %v651 = vpop.f32.mrf.mxu0
        %v652 = vpop.f32.mrf.mxu0
        %v653 = vpop.f32.mrf.mxu0
        %654 = vdwg.mxu0
        %v655 = vmul.f32 %v650, 0.35355338
        %v656 = vadd.f32 %v655, %v398
        %v657 = vsel %vm401, %v656, -inf
        %658 = vmax.xlane.f32.xlu0 %v657
        %v659 = vpop.xlane.xlu0 %658
        %v660 = vsub.f32 %v656, %v659
        %v661 = vmul.f32 %v660, 1.442695
        %v662 = vpow.pop %v661
        %v663 = vsel %vm401, %v662, 0.0
        %664 = vadd.xlane.f32.xlu0 %v663
        %v665 = vpop.xlane.xlu0 %664
        %v666 = vrcp.pop %v665
        %v667 = vmul.f32 %v662, %v666
        %v668 = vpack.c.bf16 %v667, %v667
        %669 = vrot.lane.b32.xlu0 %v606, 80
        %v670 = vpop.permute.xlu0 %669
        %v673 = vsel %vm401, %v668, 0
        %675 = vmatprep.subr.bf16.mxu0 0
        %676 = vmatpush1.bf16.msra.mxu0 0
        %677 = vmatprep.subr.bf16.mxu0 0
        %678 = vmatpush1.bf16.msra.mxu0 0
        %679 = vmatprep.subr.bf16.mxu0 0
        %680 = vmatpush1.bf16.msra.mxu0 0
        %681 = vmatprep.subr.bf16.mxu0 0
        %682 = vmatpush1.bf16.msra.mxu0 0
        %683 = vmatprep.subr.bf16.mxu0 0
        %684 = vmatpush1.bf16.msra.mxu0 0
        %685 = vmatprep.subr.bf16.mxu0 0
        %686 = vmatpush1.bf16.msra.mxu0 0
        %687 = vmatprep.subr.bf16.mxu0 0
        %688 = vmatpush1.bf16.msra.mxu0 0
        %689 = vmatprep.subr.bf16.mxu0 0
        %690 = vmatpush1.bf16.msra.mxu0 %v670
        %691 = vmatprep.subr.bf16.mxu0 0
        %692 = vmatpush2.bf16.msra.mxu0 0
        %693 = vmatprep.subr.bf16.mxu0 0
        %694 = vmatpush2.bf16.msra.mxu0 0
        %695 = vmatprep.subr.bf16.mxu0 0
        %696 = vmatpush2.bf16.msra.mxu0 0
        %697 = vmatprep.subr.bf16.mxu0 0
        %698 = vmatpush2.bf16.msra.mxu0 0
        %699 = vmatprep.subr.bf16.mxu0 0
        %700 = vmatpush2.bf16.msra.mxu0 0
        %701 = vmatprep.subr.bf16.mxu0 0
        %702 = vmatpush2.bf16.msra.mxu0 0
        %703 = vmatprep.subr.bf16.mxu0 0
        %704 = vmatpush2.bf16.msra.mxu0 0
        %705 = vmatprep.subr.bf16.mxu0 0
        %706 = vmatpush2.bf16.msra.mxu0 0
        %707 = vmatprep.mubr.bf16.mxu0 0
        %708 = vmatmul.mubr.bf16.gmra.mxu0 %v673
        %v709 = vpop.f32.mrf.mxu0
        %v710 = vadd.f32 0.0, %v709
        %v711 = vpop.f32.mrf.mxu0
        %v712 = vpop.f32.mrf.mxu0
        %v713 = vpop.f32.mrf.mxu0
        %714 = vdwg.mxu0
        %v715 = vpack.c.bf16 %v710, %v710
        %v717 = vunpack.c.l.b16 %v715
        %v718 = vpack.c.b16 %v717, %v717
        %719 = vrot.lane.b32.xlu0 %v718, 16
        %v720 = vpop.permute.xlu0 %719
        %vm722 = vcmask 191616
        %723 = vst.msk [vmem:[#allocation2] sm:$0xf] %vm722, %v720
        %v724 = vadd.f32 %v593, %v667
        %v725 = vld [vmem:[%s319] sm:$0xf]
        %v726 = vld [vmem:[%s324] sm:$0xf]
        %v727 = vld [vmem:[%s324 + $0x4] sm:$0xf]
        %v729 = vunpack.c.l.b16 %v725
        %v730 = vpack.c.b16 %v729, %v729
        %731 = vrot.lane.b32.xlu0 %v730, 104
        %v732 = vpop.permute.xlu0 %731
        %v735 = vunpack.c.l.b16 %v726
        %v736 = vunpack.c.l.b16 %v727
        %v737 = vpack.c.b16 %v736, %v735
        %738 = vrot.lane.b32.xlu0 %v737, 104
        %v739 = vpop.permute.xlu0 %738
        %v741 = vsel %vm346, %v732, 0
        %v744 = vsel %vm346, %v739, 0
        %746 = vmatprep.subr.bf16.mxu0 0
        %747 = vmatpush1.bf16.xpose.msra.mxu0 0
        %748 = vmatprep.subr.bf16.mxu0 0
        %749 = vmatpush1.bf16.xpose.msra.mxu0 0
        %750 = vmatprep.subr.bf16.mxu0 0
        %751 = vmatpush1.bf16.xpose.msra.mxu0 0
        %752 = vmatprep.subr.bf16.mxu0 0
        %753 = vmatpush1.bf16.xpose.msra.mxu0 0
        %754 = vmatprep.subr.bf16.mxu0 0
        %755 = vmatpush1.bf16.xpose.msra.mxu0 0
        %756 = vmatprep.subr.bf16.mxu0 0
        %757 = vmatpush1.bf16.xpose.msra.mxu0 0
        %758 = vmatprep.subr.bf16.mxu0 0
        %759 = vmatpush1.bf16.xpose.msra.mxu0 0
        %760 = vmatprep.subr.bf16.mxu0 0
        %761 = vmatpush1.bf16.xpose.msra.mxu0 %v744
        %762 = vmatprep.subr.bf16.mxu0 0
        %763 = vmatpush2.bf16.xpose.msra.mxu0 0
        %764 = vmatprep.subr.bf16.mxu0 0
        %765 = vmatpush2.bf16.xpose.msra.mxu0 0
        %766 = vmatprep.subr.bf16.mxu0 0
        %767 = vmatpush2.bf16.xpose.msra.mxu0 0
        %768 = vmatprep.subr.bf16.mxu0 0
        %769 = vmatpush2.bf16.xpose.msra.mxu0 0
        %770 = vmatprep.subr.bf16.mxu0 0
        %771 = vmatpush2.bf16.xpose.msra.mxu0 0
        %772 = vmatprep.subr.bf16.mxu0 0
        %773 = vmatpush2.bf16.xpose.msra.mxu0 0
        %774 = vmatprep.subr.bf16.mxu0 0
        %775 = vmatpush2.bf16.xpose.msra.mxu0 0
        %776 = vmatprep.subr.bf16.mxu0 0
        %777 = vmatpush2.bf16.xpose.msra.mxu0 0
        %778 = vmatprep.mubr.bf16.mxu0 0
        %779 = vmatmul.mubr.bf16.gmra.mxu0 %v741
        %v780 = vpop.f32.mrf.mxu0
        %v781 = vadd.f32 0.0, %v780
        %v782 = vpop.f32.mrf.mxu0
        %v783 = vpop.f32.mrf.mxu0
        %v784 = vpop.f32.mrf.mxu0
        %785 = vdwg.mxu0
        %v786 = vmul.f32 %v781, 0.35355338
        %v787 = vadd.f32 %v786, %v398
        %v788 = vsel %vm401, %v787, -inf
        %789 = vmax.xlane.f32.xlu0 %v788
        %v790 = vpop.xlane.xlu0 %789
        %v791 = vsub.f32 %v787, %v790
        %v792 = vmul.f32 %v791, 1.442695
        %v793 = vpow.pop %v792
        %v794 = vsel %vm401, %v793, 0.0
        %795 = vadd.xlane.f32.xlu0 %v794
        %v796 = vpop.xlane.xlu0 %795
        %v797 = vrcp.pop %v796
        %v798 = vmul.f32 %v793, %v797
        %v799 = vpack.c.bf16 %v798, %v798
        %800 = vrot.lane.b32.xlu0 %v737, 72
        %v801 = vpop.permute.xlu0 %800
        %v804 = vsel %vm401, %v799, 0
        %806 = vmatprep.subr.bf16.mxu0 0
        %807 = vmatpush1.bf16.msra.mxu0 0
        %808 = vmatprep.subr.bf16.mxu0 0
        %809 = vmatpush1.bf16.msra.mxu0 0
        %810 = vmatprep.subr.bf16.mxu0 0
        %811 = vmatpush1.bf16.msra.mxu0 0
        %812 = vmatprep.subr.bf16.mxu0 0
        %813 = vmatpush1.bf16.msra.mxu0 0
        %814 = vmatprep.subr.bf16.mxu0 0
        %815 = vmatpush1.bf16.msra.mxu0 0
        %816 = vmatprep.subr.bf16.mxu0 0
        %817 = vmatpush1.bf16.msra.mxu0 0
        %818 = vmatprep.subr.bf16.mxu0 0
        %819 = vmatpush1.bf16.msra.mxu0 0
        %820 = vmatprep.subr.bf16.mxu0 0
        %821 = vmatpush1.bf16.msra.mxu0 %v801
        %822 = vmatprep.subr.bf16.mxu0 0
        %823 = vmatpush2.bf16.msra.mxu0 0
        %824 = vmatprep.subr.bf16.mxu0 0
        %825 = vmatpush2.bf16.msra.mxu0 0
        %826 = vmatprep.subr.bf16.mxu0 0
        %827 = vmatpush2.bf16.msra.mxu0 0
        %828 = vmatprep.subr.bf16.mxu0 0
        %829 = vmatpush2.bf16.msra.mxu0 0
        %830 = vmatprep.subr.bf16.mxu0 0
        %831 = vmatpush2.bf16.msra.mxu0 0
        %832 = vmatprep.subr.bf16.mxu0 0
        %833 = vmatpush2.bf16.msra.mxu0 0
        %834 = vmatprep.subr.bf16.mxu0 0
        %835 = vmatpush2.bf16.msra.mxu0 0
        %836 = vmatprep.subr.bf16.mxu0 0
        %837 = vmatpush2.bf16.msra.mxu0 0
        %838 = vmatprep.mubr.bf16.mxu0 0
        %839 = vmatmul.mubr.bf16.gmra.mxu0 %v804
        %v840 = vpop.f32.mrf.mxu0
        %v841 = vadd.f32 0.0, %v840
        %v842 = vpop.f32.mrf.mxu0
        %v843 = vpop.f32.mrf.mxu0
        %v844 = vpop.f32.mrf.mxu0
        %845 = vdwg.mxu0
        %v846 = vpack.c.bf16 %v841, %v841
        %v848 = vunpack.c.l.b16 %v846
        %v849 = vpack.c.b16 %v848, %v848
        %850 = vrot.lane.b32.xlu0 %v849, 24
        %v851 = vpop.permute.xlu0 %850
        %vm853 = vcmask 257216
        %854 = vst.msk [vmem:[#allocation2] sm:$0xf] %vm853, %v851
        %v855 = vadd.f32 %v724, %v798
        %v856 = vld [vmem:[#allocation2] sm:$0xf]
        %v857 = vld [vmem:[%s3] sm:$0xf]
        %v858 = vld [vmem:[%s3 + $0x4] sm:$0xf]
        %v859 = vld [vmem:[%s3 + $0x8] sm:$0xf]
        %v860 = vld [vmem:[%s3 + $0xc] sm:$0xf]
        %v861 = vld [vmem:[%s4] sm:$0x1]
        %v863 = vlaneseq
        %v864 = vshrl.u32 %v863, 7
        %v865 = vsub.s32 0, %v864
        %v866 = vrot.slane %v861, %v865
        %v872 = vunpack.c.l.b16 %v857
        %v873 = vunpack.c.l.b16 %v858
        %v874 = vunpack.c.l.b16 %v859
        %v875 = vunpack.c.l.b16 %v860
        %v876 = vpack.c.b16 %v873, %v872
        %v877 = vpack.c.b16 %v875, %v874
        %vm880 = vcmask 261120
        %v882 = vsel %vm880, %v856, 0
        %884 = vmatprep.subr.bf16.mxu0 0
        %885 = vmatpush1.bf16.msra.mxu0 0
        %886 = vmatprep.subr.bf16.mxu0 0
        %887 = vmatpush1.bf16.msra.mxu0 0
        %888 = vmatprep.subr.bf16.mxu0 0
        %889 = vmatpush1.bf16.msra.mxu0 0
        %890 = vmatprep.subr.bf16.mxu0 0
        %891 = vmatpush1.bf16.msra.mxu0 0
        %892 = vmatprep.subr.bf16.mxu0 0
        %893 = vmatpush1.bf16.msra.mxu0 0
        %894 = vmatprep.subr.bf16.mxu0 0
        %895 = vmatpush1.bf16.msra.mxu0 0
        %896 = vmatprep.subr.bf16.mxu0 0
        %897 = vmatpush1.bf16.msra.mxu0 %v877
        %898 = vmatprep.subr.bf16.mxu0 0
        %899 = vmatpush1.bf16.msra.mxu0 %v876
        %900 = vmatprep.subr.bf16.mxu0 0
        %901 = vmatpush2.bf16.msra.mxu0 0
        %902 = vmatprep.subr.bf16.mxu0 0
        %903 = vmatpush2.bf16.msra.mxu0 0
        %904 = vmatprep.subr.bf16.mxu0 0
        %905 = vmatpush2.bf16.msra.mxu0 0
        %906 = vmatprep.subr.bf16.mxu0 0
        %907 = vmatpush2.bf16.msra.mxu0 0
        %908 = vmatprep.subr.bf16.mxu0 0
        %909 = vmatpush2.bf16.msra.mxu0 0
        %910 = vmatprep.subr.bf16.mxu0 0
        %911 = vmatpush2.bf16.msra.mxu0 0
        %912 = vmatprep.subr.bf16.mxu0 0
        %913 = vmatpush2.bf16.msra.mxu0 0
        %914 = vmatprep.subr.bf16.mxu0 0
        %915 = vmatpush2.bf16.msra.mxu0 0
        %916 = vmatprep.mubr.bf16.mxu0 0
        %917 = vmatmul.mubr.bf16.gmra.mxu0 %v882
        %v918 = vpop.f32.mrf.mxu0
        %v919 = vadd.f32 %v866, %v918
        %v920 = vpop.f32.mrf.mxu0
        %v921 = vpop.f32.mrf.mxu0
        %v922 = vpop.f32.mrf.mxu0
        %923 = vdwg.mxu0
        %v924 = vld [vmem:[%s331] sm:$0xff]
        %v925 = vadd.f32 %v919, %v924
        %926 = vst.msk [vmem:[%s335] sm:$0xff] %vm880, %v925
        %v927 = vmul.f32 %v855, 0.25
        %928 = vst.msk [vmem:[%s315] sm:$0xff] %vm401, %v927
        %p929 = scmp.lt.s32.totalorder %s22, 1
        %s930 = scalar_select %p929, %s22, 1
        %s931 = smul.addr %s930, 8
        %s932 = scalar_lea.vmem %s6, %s931
        %s933 = sand.u32 %s202, 1
        %s934 = scalar_lea.sflag [#allocation4], %s933
        %s935 = sand.u32 %s202, 1
        %s936 = smul.addr %s935, 8
        %s937 = scalar_lea.vmem [#allocation3], %s936
        // Predicated region
        $region45: #{decoder_layer_forward.10} parent=43 // pred_check
          %p938 = pneg %p186
        $region46: #{decoder_layer_forward.10} parent=43 // pred_check_branch
          %940 = sbr.rel (%p938) target = $region48
        $region47: #{decoder_layer_forward.10} parent=43 // pred_region
          _
        $region48: #{decoder_layer_forward.10} parent=43 // pred_fallthru
          _
        // Predicated region
        $region49: #{decoder_layer_forward.10} parent=43 // pred_check
          %p941 = pneg %p212
        $region50: #{decoder_layer_forward.10} parent=43 // pred_check_branch
          %943 = sbr.rel (%p941) target = $region52
        $region51: #{decoder_layer_forward.10} parent=43 // pred_region
          %s945 = ssub.s32 128, 128
          %946 = vsyncadd %s934, %s945
          %s947 = smul.addr %s22, 128
          %s948 = scalar_lea.hbm %s7, %s947
          %s950 = sshll.u32 %s937, 4
          %s951 = int_to_ptr.vmem [resolvable:$true] %s950
          %953 = dma.vmem_to_hbm [thread:$0]  %s951, 128, %s948, %s934
        $region52: #{decoder_layer_forward.10} parent=43 // pred_fallthru
          _
      $region44: #{decoder_layer_forward.10} parent=5 // pred_fallthru
        _
      %p954 = scmp.le.s32.totalorder 2, %s17
      // Predicated region
      $region53: #{decoder_layer_forward.10} parent=5 // pred_check
        %p955 = pneg %p954
      $region54: #{decoder_layer_forward.10} parent=5 // pred_check_branch
        %957 = sbr.rel (%p955) target = $region56
      $region55: #{decoder_layer_forward.10} parent=5 // pred_region
        %s958 = ssub.s32 %s17, 2
        // Predicated region
        $region57: #{decoder_layer_forward.10} parent=55 // pred_check
          %p959 = pneg %p192
        $region58: #{decoder_layer_forward.10} parent=55 // pred_check_branch
          %961 = sbr.rel (%p959) target = $region60
        $region59: #{decoder_layer_forward.10} parent=55 // pred_region
          %p962 = scmp.lt.s32.totalorder %s23, 1
          %s963 = scalar_select %p962, %s23, 1
          %s964 = smul.addr %s963, 8
          %s965 = scalar_lea.vmem %s6, %s964
        $region60: #{decoder_layer_forward.10} parent=55 // pred_fallthru
          _
        // Predicated region
        $region61: #{decoder_layer_forward.10} parent=55 // pred_check
          %p966 = pneg %p218
        $region62: #{decoder_layer_forward.10} parent=55 // pred_check_branch
          %968 = sbr.rel (%p966) target = $region64
        $region63: #{decoder_layer_forward.10} parent=55 // pred_region
          %s969 = sand.u32 %s203, 1
          %s970 = scalar_lea.sflag [#allocation4], %s969
          %s971 = sand.u32 %s203, 1
          %s972 = smul.addr %s971, 8
          %s973 = scalar_lea.vmem [#allocation3], %s972
          %974 = dma.done %s970, 128
        $region64: #{decoder_layer_forward.10} parent=55 // pred_fallthru
          _
      $region56: #{decoder_layer_forward.10} parent=5 // pred_fallthru
        _
    $region6: #{decoder_layer_forward.10} parent=1 // loop_footer
      %s21 = sadd.s32 1, %s17
    $region7: #{decoder_layer_forward.10} parent=1 // loop_footer_branch
      %16 = sbr.rel target = $region3
    $region8: #{decoder_layer_forward.10} parent=1 // loop_exit
      _
    %975 = vsyncpa [#allocation4], 1
    %s976 = scalar_lea.sflag [#allocation4], 1
    %977 = vsyncpa %s976, 1

</llo_original>
